<compile_context>
chip_gen: v7x
topology: tpu7x:2x2x1
jax: 0.10.0
libtpu: 0.0.40
codegen_flags: <defaults>
</compile_context>

<pallas_src>
import functools

import jax
import jax.numpy as jnp
import numpy as np
from jax.experimental import pallas as pl
from jax.experimental.pallas import tpu as pltpu


def basic_block_kernel(x_ref, w1_ref, s1_ref, b1_ref, w2_ref, s2_ref, b2_ref,
                       o_ref, p_ref, *, H, W, Cp):
    # x_ref : (1, H*W, Cp)  f32   one image per grid step (lane-dense, C padded)
    # w*_ref: (3, 3*Cp, Cp) bf16  per-kh im2col weights: [kh, kw*Cp + cin, cout]
    # s*/b* : (1, Cp)       f32   folded BN scale / bias
    # o_ref : (1, H*W, Cp)  f32
    # p_ref : ((H+2)*W, 3*Cp) bf16 scratch: padded, width-shifted (im2col-kw) copies
    HW = H * W

    # Zero the scratch once; the rows that are never overwritten below are the
    # conv zero-padding (top/bottom rows and masked left/right columns).
    p_ref[...] = jnp.zeros_like(p_ref)

    # Column masks, hoisted (reused by both convs): the flattened row index r
    # maps to spatial (h, w) = (r // W, r % W).
    w_idx = jax.lax.broadcasted_iota(jnp.int32, (HW, Cp), 0) % W
    not_last = w_idx != (W - 1)   # zero source column W-1 for the kw=0 shifted store
    not_first = w_idx != 0        # zero source column 0   for the kw=2 shifted store

    def fill_patches(v_f32):
        """Write v (H*W, Cp) into p_ref as three width-shifted bf16 copies.

        P[hp*W + w, kw*Cp:(kw+1)*Cp] == x_padded[hp, w + kw, :]  (1-px zero border),
        so tap kh of the conv is the contiguous slice p_ref[kh*W : kh*W + H*W, :].
        """
        vb = v_f32.astype(jnp.bfloat16)
        zb = jnp.zeros_like(vb)
        p_ref[W:W + HW, Cp:2 * Cp] = vb                                       # kw = 1
        p_ref[W + 1:W + 1 + HW, 0:Cp] = jnp.where(not_last, vb, zb)           # kw = 0
        p_ref[W - 1:W - 1 + HW, 2 * Cp:3 * Cp] = jnp.where(not_first, vb, zb)  # kw = 2

    def conv3x3(w_ref):
        # 3 MXU matmuls (one per kh), K = 3*Cp; accumulator initialized from
        # the first tap (no zero-fill + add).
        acc = jnp.dot(p_ref[0:HW, :], w_ref[0],
                      preferred_element_type=jnp.float32)
        acc = acc + jnp.dot(p_ref[W:W + HW, :], w_ref[1],
                            preferred_element_type=jnp.float32)
        acc = acc + jnp.dot(p_ref[2 * W:2 * W + HW, :], w_ref[2],
                            preferred_element_type=jnp.float32)
        return acc                                                  # (H*W, Cp) f32

    x = x_ref[0]                                                    # (H*W, Cp) f32

    # conv1 -> bn1 -> relu   (elementwise kept in f32)
    fill_patches(x)
    h1 = jnp.maximum(conv3x3(w1_ref) * s1_ref[...] + b1_ref[...], 0.0)

    # conv2 -> bn2
    fill_patches(h1)
    h2 = conv3x3(w2_ref) * s2_ref[...] + b2_ref[...]

    # residual add + relu
    o_ref[0] = jnp.maximum(h2 + x, 0.0).astype(o_ref.dtype)


def basic_block_pallas(x_nchw, w1, w2, bn1, bn2, eps=1e-5):
    """x_nchw: (N, Cin, H, W) f32.  w1:(C,Cin,3,3), w2:(C,C,3,3) (PyTorch layout).
    bn1/bn2: dicts with gamma, beta, running_mean, running_var of shape (C,)."""
    N, Cin, H, W = x_nchw.shape
    C = w1.shape[0]
    assert Cin == C, "BasicBlock with downsample=None requires inplanes == planes"
    assert W % 8 == 0, "W must be a multiple of 8 for aligned sublane tiling"

    LANE = 128
    Cp = ((C + LANE - 1) // LANE) * LANE   # pad channels to a lane multiple

    # ---- layout glue (plain JAX, outside the kernel) ----
    x = jnp.transpose(x_nchw, (0, 2, 3, 1)).astype(jnp.float32)      # NHWC
    x = jnp.pad(x, ((0, 0), (0, 0), (0, 0), (0, Cp - C)))            # C -> Cp
    x = x.reshape(N, H * W, Cp)                                       # lane-dense slab

    def prep_w(w):
        # (cout, cin, kh, kw) -> (kh, kw, cin, cout) -> pad -> (kh, kw*Cp+cin, cout)
        wt = jnp.transpose(w, (2, 3, 1, 0))
        wt = jnp.pad(wt, ((0, 0), (0, 0), (0, Cp - C), (0, Cp - C)))
        return wt.reshape(3, 3 * Cp, Cp).astype(jnp.bfloat16)

    w1_t = prep_w(w1)
    w2_t = prep_w(w2)

    def fold_bn(p):
        scale = p["gamma"] / jnp.sqrt(p["running_var"] + eps)
        bias = p["beta"] - p["running_mean"] * scale
        scale = jnp.pad(scale, (0, Cp - C)).reshape(1, Cp).astype(jnp.float32)
        bias = jnp.pad(bias, (0, Cp - C)).reshape(1, Cp).astype(jnp.float32)
        return scale, bias

    s1, b1 = fold_bn(bn1)
    s2, b2 = fold_bn(bn2)

    kernel = functools.partial(basic_block_kernel, H=H, W=W, Cp=Cp)

    out = pl.pallas_call(
        kernel,
        out_shape=jax.ShapeDtypeStruct((N, H * W, Cp), jnp.float32),
        grid_spec=pltpu.PrefetchScalarGridSpec(
            num_scalar_prefetch=0,
            grid=(N,),
            in_specs=[
                pl.BlockSpec((1, H * W, Cp), lambda n: (n, 0, 0)),
                pl.BlockSpec((3, 3 * Cp, Cp), lambda n: (0, 0, 0)),
                pl.BlockSpec((1, Cp), lambda n: (0, 0)),
                pl.BlockSpec((1, Cp), lambda n: (0, 0)),
                pl.BlockSpec((3, 3 * Cp, Cp), lambda n: (0, 0, 0)),
                pl.BlockSpec((1, Cp), lambda n: (0, 0)),
                pl.BlockSpec((1, Cp), lambda n: (0, 0)),
            ],
            out_specs=pl.BlockSpec((1, H * W, Cp), lambda n: (n, 0, 0)),
            scratch_shapes=[pltpu.VMEM(((H + 2) * W, 3 * Cp), jnp.bfloat16)],
        ),
        compiler_params=pltpu.CompilerParams(
            dimension_semantics=("parallel",)),
    )(x, w1_t, s1, b1, w2_t, s2, b2)

    out = out.reshape(N, H, W, Cp)[..., :C]                          # drop channel pad
    return jnp.transpose(out, (0, 3, 1, 2))                          # back to NCHW


def basic_block_reference(x_nchw, w1, w2, bn1, bn2, eps=1e-5):
    """Pure-JAX reference (lax conv, NCHW, f32) for correctness check."""
    def conv(x, w):
        return jax.lax.conv_general_dilated(
            x, w, window_strides=(1, 1), padding=((1, 1), (1, 1)),
            dimension_numbers=("NCHW", "OIHW", "NCHW"))

    def bn(x, p):
        scale = p["gamma"] / jnp.sqrt(p["running_var"] + eps)
        bias = p["beta"] - p["running_mean"] * scale
        return x * scale.reshape(1, -1, 1, 1) + bias.reshape(1, -1, 1, 1)

    out = jax.nn.relu(bn(conv(x_nchw, w1), bn1))
    out = bn(conv(out, w2), bn2)
    return jax.nn.relu(out + x_nchw)


if __name__ == "__main__":
    key = jax.random.PRNGKey(0)
    N, C, H, W = 2, 4, 16, 16   # inplanes == planes == 4, stride == 1

    ks = jax.random.split(key, 9)
    x = jax.random.normal(ks[0], (N, C, H, W), jnp.float32)
    w1 = jax.random.normal(ks[1], (C, C, 3, 3), jnp.float32) * 0.2
    w2 = jax.random.normal(ks[2], (C, C, 3, 3), jnp.float32) * 0.2
    bn1 = {
        "gamma": jax.random.normal(ks[3], (C,), jnp.float32) * 0.1 + 1.0,
        "beta": jax.random.normal(ks[4], (C,), jnp.float32) * 0.1,
        "running_mean": jax.random.normal(ks[5], (C,), jnp.float32) * 0.1,
        "running_var": jnp.abs(jax.random.normal(ks[6], (C,), jnp.float32)) + 0.5,
    }
    bn2 = {
        "gamma": jax.random.normal(ks[7], (C,), jnp.float32) * 0.1 + 1.0,
        "beta": jax.random.normal(ks[8], (C,), jnp.float32) * 0.1,
        "running_mean": jnp.zeros((C,), jnp.float32),
        "running_var": jnp.ones((C,), jnp.float32),
    }

    out = jax.block_until_ready(basic_block_pallas(x, w1, w2, bn1, bn2))
    ref = jax.block_until_ready(basic_block_reference(x, w1, w2, bn1, bn2))

    # bf16 matmul inputs (f32 accumulation) -> relaxed tolerance vs f32 reference.
    np.testing.assert_allclose(np.asarray(out), np.asarray(ref),
                               rtol=5e-2, atol=5e-2)
    print("KERNEL_OK")
</pallas_src>

<mosaic_0001>
module attributes {stable_mosaic.version = 11 : i64} {
  func.func @basic_block_kernel(%arg0: i32, %arg1: memref<1x256x128xf32, #tpu.memory_space<vmem>>, %arg2: memref<3x384x128xbf16, #tpu.memory_space<vmem>>, %arg3: memref<1x128xf32, #tpu.memory_space<vmem>>, %arg4: memref<1x128xf32, #tpu.memory_space<vmem>>, %arg5: memref<3x384x128xbf16, #tpu.memory_space<vmem>>, %arg6: memref<1x128xf32, #tpu.memory_space<vmem>>, %arg7: memref<1x128xf32, #tpu.memory_space<vmem>>, %arg8: memref<1x256x128xf32, #tpu.memory_space<vmem>>, %arg9: memref<288x384xbf16, #tpu.memory_space<vmem>>) attributes {dimension_semantics = [#tpu.dimension_semantics<parallel>], iteration_bounds = array<i64: 2>, scalar_prefetch = 0 : i64, scratch_operands = 1 : i64, tpu.core_type = #tpu.core_type<tc>, window_params = [{transform_indices = @transform_0, window_bounds = array<i64: 1, 256, 128>}, {pipeline_mode = #tpu.pipeline_mode<synchronous>, transform_indices = @transform_1, window_bounds = array<i64: 3, 384, 128>}, {pipeline_mode = #tpu.pipeline_mode<synchronous>, transform_indices = @transform_2, window_bounds = array<i64: 1, 128>}, {pipeline_mode = #tpu.pipeline_mode<synchronous>, transform_indices = @transform_3, window_bounds = array<i64: 1, 128>}, {pipeline_mode = #tpu.pipeline_mode<synchronous>, transform_indices = @transform_4, window_bounds = array<i64: 3, 384, 128>}, {pipeline_mode = #tpu.pipeline_mode<synchronous>, transform_indices = @transform_5, window_bounds = array<i64: 1, 128>}, {pipeline_mode = #tpu.pipeline_mode<synchronous>, transform_indices = @transform_6, window_bounds = array<i64: 1, 128>}, {transform_indices = @transform_7, window_bounds = array<i64: 1, 256, 128>}]} {
    %cst = arith.constant 0.000000e+00 : bf16
    %0 = vector.broadcast %cst : bf16 to vector<288x384xbf16>
    %c0 = arith.constant 0 : index
    %c0_0 = arith.constant 0 : index
    %1 = vector.load %arg9[%c0, %c0_0] : memref<288x384xbf16, #tpu.memory_space<vmem>>, vector<288x384xbf16>
    tpu.vector_store %arg9[%c0, %c0_0], %0 {strides = array<i32>} : memref<288x384xbf16, #tpu.memory_space<vmem>>, vector<288x384xbf16>,
    %2 = tpu.iota {dimensions = array<i32: 0>} : vector<256x128xi32>
    %c16_i32 = arith.constant 16 : i32
    %c0_i32 = arith.constant 0 : i32
    %3 = arith.cmpi eq, %c16_i32, %c0_i32 : i32
    %c1_i32 = arith.constant 1 : i32
    %4 = arith.select %3, %c1_i32, %c16_i32 : i32
    %5 = vector.broadcast %4 : i32 to vector<256x128xi32>
    %6 = arith.remsi %2, %5 : vector<256x128xi32>
    %c0_i32_1 = arith.constant 0 : i32
    %7 = vector.broadcast %c0_i32_1 : i32 to vector<256x128xi32>
    %8 = arith.cmpi ne, %6, %7 : vector<256x128xi32>
    %c0_i32_2 = arith.constant 0 : i32
    %9 = vector.broadcast %c0_i32_2 : i32 to vector<256x128xi32>
    %10 = arith.cmpi slt, %6, %9 : vector<256x128xi32>
    %c0_i32_3 = arith.constant 0 : i32
    %11 = arith.cmpi slt, %4, %c0_i32_3 : i32
    %12 = vector.broadcast %11 : i1 to vector<256x128xi1>
    %13 = vector.broadcast %12 : vector<256x128xi1> to vector<256x128xi1>
    %14 = arith.xori %10, %13 : vector<256x128xi1>
    %15 = arith.andi %14, %8 : vector<256x128xi1>
    %16 = vector.broadcast %4 : i32 to vector<256x128xi32>
    %17 = arith.addi %6, %16 : vector<256x128xi32>
    %18 = arith.select %15, %17, %6 : vector<256x128xi1>, vector<256x128xi32>
    %c15_i32 = arith.constant 15 : i32
    %19 = vector.broadcast %c15_i32 : i32 to vector<256x128xi32>
    %20 = arith.cmpi ne, %18, %19 : vector<256x128xi32>
    %c0_i32_4 = arith.constant 0 : i32
    %21 = vector.broadcast %c0_i32_4 : i32 to vector<256x128xi32>
    %22 = arith.cmpi ne, %18, %21 : vector<256x128xi32>
    %c0_5 = arith.constant 0 : index
    %c0_6 = arith.constant 0 : index
    %c0_7 = arith.constant 0 : index
    %23 = vector.load %arg1[%c0_5, %c0_6, %c0_7] : memref<1x256x128xf32, #tpu.memory_space<vmem>>, vector<1x256x128xf32>
    %24 = vector.shape_cast %23 : vector<1x256x128xf32> to vector<256x128xf32>
    %25 = arith.truncf %24 : vector<256x128xf32> to vector<256x128xbf16>
    %cst_8 = arith.constant 0.000000e+00 : bf16
    %26 = vector.broadcast %cst_8 : bf16 to vector<256x128xbf16>
    %c16 = arith.constant 16 : index
    %c128 = arith.constant 128 : index
    %27 = vector.load %arg9[%c16, %c128] : memref<288x384xbf16, #tpu.memory_space<vmem>>, vector<256x128xbf16>
    tpu.vector_store %arg9[%c16, %c128], %25 {strides = array<i32>} : memref<288x384xbf16, #tpu.memory_space<vmem>>, vector<256x128xbf16>,
    %28 = arith.select %20, %25, %26 : vector<256x128xi1>, vector<256x128xbf16>
    %c17 = arith.constant 17 : index
    %c0_9 = arith.constant 0 : index
    %29 = vector.load %arg9[%c17, %c0_9] : memref<288x384xbf16, #tpu.memory_space<vmem>>, vector<256x128xbf16>
    tpu.vector_store %arg9[%c17, %c0_9], %28 {strides = array<i32>} : memref<288x384xbf16, #tpu.memory_space<vmem>>, vector<256x128xbf16>,
    %30 = arith.select %22, %25, %26 : vector<256x128xi1>, vector<256x128xbf16>
    %c15 = arith.constant 15 : index
    %c256 = arith.constant 256 : index
    %31 = vector.load %arg9[%c15, %c256] : memref<288x384xbf16, #tpu.memory_space<vmem>>, vector<256x128xbf16>
    tpu.vector_store %arg9[%c15, %c256], %30 {strides = array<i32>} : memref<288x384xbf16, #tpu.memory_space<vmem>>, vector<256x128xbf16>,
    %c0_10 = arith.constant 0 : index
    %c0_11 = arith.constant 0 : index
    %32 = vector.load %arg9[%c0_10, %c0_11] : memref<288x384xbf16, #tpu.memory_space<vmem>>, vector<256x384xbf16>
    %c0_12 = arith.constant 0 : index
    %c0_13 = arith.constant 0 : index
    %c0_14 = arith.constant 0 : index
    %33 = vector.load %arg2[%c0_12, %c0_13, %c0_14] : memref<3x384x128xbf16, #tpu.memory_space<vmem>>, vector<1x384x128xbf16>
    %34 = vector.shape_cast %33 : vector<1x384x128xbf16> to vector<384x128xbf16>
    %cst_15 = arith.constant dense<0.000000e+00> : vector<256x128xf32>
    %35 = tpu.matmul %32, %34, %cst_15 {dimension_numbers = #tpu.dot_dimension_numbers<[1], [0], [0], [1], [0, 0, 1, 1], [], []>} : vector<256x384xbf16>, vector<384x128xbf16>, vector<256x128xf32> -> vector<256x128xf32>
    %c16_16 = arith.constant 16 : index
    %c0_17 = arith.constant 0 : index
    %36 = vector.load %arg9[%c16_16, %c0_17] : memref<288x384xbf16, #tpu.memory_space<vmem>>, vector<256x384xbf16>
    %c1 = arith.constant 1 : index
    %c0_18 = arith.constant 0 : index
    %c0_19 = arith.constant 0 : index
    %37 = vector.load %arg2[%c1, %c0_18, %c0_19] : memref<3x384x128xbf16, #tpu.memory_space<vmem>>, vector<1x384x128xbf16>
    %38 = vector.shape_cast %37 : vector<1x384x128xbf16> to vector<384x128xbf16>
    %cst_20 = arith.constant dense<0.000000e+00> : vector<256x128xf32>
    %39 = tpu.matmul %36, %38, %cst_20 {dimension_numbers = #tpu.dot_dimension_numbers<[1], [0], [0], [1], [0, 0, 1, 1], [], []>} : vector<256x384xbf16>, vector<384x128xbf16>, vector<256x128xf32> -> vector<256x128xf32>
    %40 = arith.addf %35, %39 : vector<256x128xf32>
    %c32 = arith.constant 32 : index
    %c0_21 = arith.constant 0 : index
    %41 = vector.load %arg9[%c32, %c0_21] : memref<288x384xbf16, #tpu.memory_space<vmem>>, vector<256x384xbf16>
    %c2 = arith.constant 2 : index
    %c0_22 = arith.constant 0 : index
    %c0_23 = arith.constant 0 : index
    %42 = vector.load %arg2[%c2, %c0_22, %c0_23] : memref<3x384x128xbf16, #tpu.memory_space<vmem>>, vector<1x384x128xbf16>
    %43 = vector.shape_cast %42 : vector<1x384x128xbf16> to vector<384x128xbf16>
    %cst_24 = arith.constant dense<0.000000e+00> : vector<256x128xf32>
    %44 = tpu.matmul %41, %43, %cst_24 {dimension_numbers = #tpu.dot_dimension_numbers<[1], [0], [0], [1], [0, 0, 1, 1], [], []>} : vector<256x384xbf16>, vector<384x128xbf16>, vector<256x128xf32> -> vector<256x128xf32>
    %45 = arith.addf %40, %44 : vector<256x128xf32>
    %c0_25 = arith.constant 0 : index
    %c0_26 = arith.constant 0 : index
    %46 = vector.load %arg3[%c0_25, %c0_26] : memref<1x128xf32, #tpu.memory_space<vmem>>, vector<1x128xf32>
    %47 = vector.broadcast %46 : vector<1x128xf32> to vector<256x128xf32>
    %48 = arith.mulf %45, %47 : vector<256x128xf32>
    %c0_27 = arith.constant 0 : index
    %c0_28 = arith.constant 0 : index
    %49 = vector.load %arg4[%c0_27, %c0_28] : memref<1x128xf32, #tpu.memory_space<vmem>>, vector<1x128xf32>
    %50 = vector.broadcast %49 : vector<1x128xf32> to vector<256x128xf32>
    %51 = arith.addf %48, %50 : vector<256x128xf32>
    %cst_29 = arith.constant 0.000000e+00 : f32
    %52 = vector.broadcast %cst_29 : f32 to vector<256x128xf32>
    %53 = arith.maximumf %51, %52 : vector<256x128xf32>
    %54 = arith.truncf %53 : vector<256x128xf32> to vector<256x128xbf16>
    %cst_30 = arith.constant 0.000000e+00 : bf16
    %55 = vector.broadcast %cst_30 : bf16 to vector<256x128xbf16>
    %c16_31 = arith.constant 16 : index
    %c128_32 = arith.constant 128 : index
    %56 = vector.load %arg9[%c16_31, %c128_32] : memref<288x384xbf16, #tpu.memory_space<vmem>>, vector<256x128xbf16>
    tpu.vector_store %arg9[%c16_31, %c128_32], %54 {strides = array<i32>} : memref<288x384xbf16, #tpu.memory_space<vmem>>, vector<256x128xbf16>,
    %57 = arith.select %20, %54, %55 : vector<256x128xi1>, vector<256x128xbf16>
    %c17_33 = arith.constant 17 : index
    %c0_34 = arith.constant 0 : index
    %58 = vector.load %arg9[%c17_33, %c0_34] : memref<288x384xbf16, #tpu.memory_space<vmem>>, vector<256x128xbf16>
    tpu.vector_store %arg9[%c17_33, %c0_34], %57 {strides = array<i32>} : memref<288x384xbf16, #tpu.memory_space<vmem>>, vector<256x128xbf16>,
    %59 = arith.select %22, %54, %55 : vector<256x128xi1>, vector<256x128xbf16>
    %c15_35 = arith.constant 15 : index
    %c256_36 = arith.constant 256 : index
    %60 = vector.load %arg9[%c15_35, %c256_36] : memref<288x384xbf16, #tpu.memory_space<vmem>>, vector<256x128xbf16>
    tpu.vector_store %arg9[%c15_35, %c256_36], %59 {strides = array<i32>} : memref<288x384xbf16, #tpu.memory_space<vmem>>, vector<256x128xbf16>,
    %c0_37 = arith.constant 0 : index
    %c0_38 = arith.constant 0 : index
    %61 = vector.load %arg9[%c0_37, %c0_38] : memref<288x384xbf16, #tpu.memory_space<vmem>>, vector<256x384xbf16>
    %c0_39 = arith.constant 0 : index
    %c0_40 = arith.constant 0 : index
    %c0_41 = arith.constant 0 : index
    %62 = vector.load %arg5[%c0_39, %c0_40, %c0_41] : memref<3x384x128xbf16, #tpu.memory_space<vmem>>, vector<1x384x128xbf16>
    %63 = vector.shape_cast %62 : vector<1x384x128xbf16> to vector<384x128xbf16>
    %cst_42 = arith.constant dense<0.000000e+00> : vector<256x128xf32>
    %64 = tpu.matmul %61, %63, %cst_42 {dimension_numbers = #tpu.dot_dimension_numbers<[1], [0], [0], [1], [0, 0, 1, 1], [], []>} : vector<256x384xbf16>, vector<384x128xbf16>, vector<256x128xf32> -> vector<256x128xf32>
    %c16_43 = arith.constant 16 : index
    %c0_44 = arith.constant 0 : index
    %65 = vector.load %arg9[%c16_43, %c0_44] : memref<288x384xbf16, #tpu.memory_space<vmem>>, vector<256x384xbf16>
    %c1_45 = arith.constant 1 : index
    %c0_46 = arith.constant 0 : index
    %c0_47 = arith.constant 0 : index
    %66 = vector.load %arg5[%c1_45, %c0_46, %c0_47] : memref<3x384x128xbf16, #tpu.memory_space<vmem>>, vector<1x384x128xbf16>
    %67 = vector.shape_cast %66 : vector<1x384x128xbf16> to vector<384x128xbf16>
    %cst_48 = arith.constant dense<0.000000e+00> : vector<256x128xf32>
    %68 = tpu.matmul %65, %67, %cst_48 {dimension_numbers = #tpu.dot_dimension_numbers<[1], [0], [0], [1], [0, 0, 1, 1], [], []>} : vector<256x384xbf16>, vector<384x128xbf16>, vector<256x128xf32> -> vector<256x128xf32>
    %69 = arith.addf %64, %68 : vector<256x128xf32>
    %c32_49 = arith.constant 32 : index
    %c0_50 = arith.constant 0 : index
    %70 = vector.load %arg9[%c32_49, %c0_50] : memref<288x384xbf16, #tpu.memory_space<vmem>>, vector<256x384xbf16>
    %c2_51 = arith.constant 2 : index
    %c0_52 = arith.constant 0 : index
    %c0_53 = arith.constant 0 : index
    %71 = vector.load %arg5[%c2_51, %c0_52, %c0_53] : memref<3x384x128xbf16, #tpu.memory_space<vmem>>, vector<1x384x128xbf16>
    %72 = vector.shape_cast %71 : vector<1x384x128xbf16> to vector<384x128xbf16>
    %cst_54 = arith.constant dense<0.000000e+00> : vector<256x128xf32>
    %73 = tpu.matmul %70, %72, %cst_54 {dimension_numbers = #tpu.dot_dimension_numbers<[1], [0], [0], [1], [0, 0, 1, 1], [], []>} : vector<256x384xbf16>, vector<384x128xbf16>, vector<256x128xf32> -> vector<256x128xf32>
    %74 = arith.addf %69, %73 : vector<256x128xf32>
    %c0_55 = arith.constant 0 : index
    %c0_56 = arith.constant 0 : index
    %75 = vector.load %arg6[%c0_55, %c0_56] : memref<1x128xf32, #tpu.memory_space<vmem>>, vector<1x128xf32>
    %76 = vector.broadcast %75 : vector<1x128xf32> to vector<256x128xf32>
    %77 = arith.mulf %74, %76 : vector<256x128xf32>
    %c0_57 = arith.constant 0 : index
    %c0_58 = arith.constant 0 : index
    %78 = vector.load %arg7[%c0_57, %c0_58] : memref<1x128xf32, #tpu.memory_space<vmem>>, vector<1x128xf32>
    %79 = vector.broadcast %78 : vector<1x128xf32> to vector<256x128xf32>
    %80 = arith.addf %77, %79 : vector<256x128xf32>
    %81 = arith.addf %80, %24 : vector<256x128xf32>
    %cst_59 = arith.constant 0.000000e+00 : f32
    %82 = vector.broadcast %cst_59 : f32 to vector<256x128xf32>
    %83 = arith.maximumf %81, %82 : vector<256x128xf32>
    %c0_60 = arith.constant 0 : index
    %c0_61 = arith.constant 0 : index
    %c0_62 = arith.constant 0 : index
    %84 = vector.load %arg8[%c0_60, %c0_61, %c0_62] : memref<1x256x128xf32, #tpu.memory_space<vmem>>, vector<1x256x128xf32>
    %85 = vector.shape_cast %84 : vector<1x256x128xf32> to vector<256x128xf32>
    %86 = vector.shape_cast %83 : vector<256x128xf32> to vector<1x256x128xf32>
    tpu.vector_store %arg8[%c0_60, %c0_61, %c0_62], %86 {strides = array<i32>} : memref<1x256x128xf32, #tpu.memory_space<vmem>>, vector<1x256x128xf32>,
    return
  }
  func.func @transform_0(%arg0: i32) -> (i32, i32, i32) {
    %c0_i32 = arith.constant 0 : i32
    %c0_i32_0 = arith.constant 0 : i32
    %c0_i32_1 = arith.constant 0 : i32
    return %arg0, %c0_i32, %c0_i32_0 : i32, i32, i32
  }
  func.func @transform_1(%arg0: i32) -> (i32, i32, i32) {
    %c0_i32 = arith.constant 0 : i32
    %c0_i32_0 = arith.constant 0 : i32
    %c0_i32_1 = arith.constant 0 : i32
    %c0_i32_2 = arith.constant 0 : i32
    return %c0_i32, %c0_i32_0, %c0_i32_1 : i32, i32, i32
  }
  func.func @transform_2(%arg0: i32) -> (i32, i32) {
    %c0_i32 = arith.constant 0 : i32
    %c0_i32_0 = arith.constant 0 : i32
    %c0_i32_1 = arith.constant 0 : i32
    return %c0_i32, %c0_i32_0 : i32, i32
  }
  func.func @transform_3(%arg0: i32) -> (i32, i32) {
    %c0_i32 = arith.constant 0 : i32
    %c0_i32_0 = arith.constant 0 : i32
    %c0_i32_1 = arith.constant 0 : i32
    return %c0_i32, %c0_i32_0 : i32, i32
  }
  func.func @transform_4(%arg0: i32) -> (i32, i32, i32) {
    %c0_i32 = arith.constant 0 : i32
    %c0_i32_0 = arith.constant 0 : i32
    %c0_i32_1 = arith.constant 0 : i32
    %c0_i32_2 = arith.constant 0 : i32
    return %c0_i32, %c0_i32_0, %c0_i32_1 : i32, i32, i32
  }
  func.func @transform_5(%arg0: i32) -> (i32, i32) {
    %c0_i32 = arith.constant 0 : i32
    %c0_i32_0 = arith.constant 0 : i32
    %c0_i32_1 = arith.constant 0 : i32
    return %c0_i32, %c0_i32_0 : i32, i32
  }
  func.func @transform_6(%arg0: i32) -> (i32, i32) {
    %c0_i32 = arith.constant 0 : i32
    %c0_i32_0 = arith.constant 0 : i32
    %c0_i32_1 = arith.constant 0 : i32
    return %c0_i32, %c0_i32_0 : i32, i32
  }
  func.func @transform_7(%arg0: i32) -> (i32, i32, i32) {
    %c0_i32 = arith.constant 0 : i32
    %c0_i32_0 = arith.constant 0 : i32
    %c0_i32_1 = arith.constant 0 : i32
    return %arg0, %c0_i32, %c0_i32_0 : i32, i32, i32
  }
}

</mosaic_0001>

<llo_original>
// kernel: tpu_custom_call.1
$region0: #{tpu_custom_call.1}
  #allocation0 [shape = 'u32[]', space=smem, size = 0x4, offset = 0x4, fixed_abs, tag = 'smem constant byte address 0x4 - core index']
  #allocation1 [shape = 'u32[144,128]{1,0:T(1,128)}', space=vmem, size = 0x12000, scoped, tag = 'internal scratch']
  #allocation2 [shape = 'bf16[288,384]{1,0:T(16,128)(2,1)}', space=vmem, size = 0x36000, scoped, tag = 'scratch operand']
  %s0 = inlined_call_operand.hbm [shape: f32[2,256,128], index: 0, kind: input, shape index: {}]
  %s1 = inlined_call_operand.hbm [shape: bf16[3,384,128], index: 1, kind: input, shape index: {}]
  %s2 = inlined_call_operand.vmem [shape: f32[1,128], index: 2, kind: input, shape index: {}]
  %s3 = inlined_call_operand.vmem [shape: f32[1,128], index: 3, kind: input, shape index: {}]
  %s4 = inlined_call_operand.hbm [shape: bf16[3,384,128], index: 4, kind: input, shape index: {}]
  %s5 = inlined_call_operand.vmem [shape: f32[1,128], index: 5, kind: input, shape index: {}]
  %s6 = inlined_call_operand.vmem [shape: f32[1,128], index: 6, kind: input, shape index: {}]
  %s7 = inlined_call_operand.hbm [shape: f32[2,256,128], index: 7, kind: output, shape index: {}]
  %s8 = sld [smem:[#allocation0]]
  $region73: #{tpu_custom_call.1} parent=0
    _
  %s10 = ssub.s32 1, %s8
  %s11 = scalar_select 0, %s10, %s8
  $region1: #{tpu_custom_call.1} parent=0
    #allocation3 [shape = 'u8[262144]{0}', space=vmem, size = 0x40000, scoped, tag = 'input window, operand 0']
    #allocation4 [shape = 's32[2]{0}', space=sflag, size = 0x8, scoped, tag = 'scoped memory for tpu_custom_call.1']
    #allocation5 [shape = 's32[2]{0}', space=sflag, size = 0x8, scoped, tag = 'scoped memory for tpu_custom_call.1']
    #allocation6 [shape = 'u8[294912]{0}', space=vmem, size = 0x48000, scoped, tag = 'input window, operand 1, single buffered']
    #allocation7 [shape = 's32[1]{0}', space=sflag, size = 0x4, scoped, tag = 'scoped memory for tpu_custom_call.1']
    #allocation8 [shape = 'u8[294912]{0}', space=vmem, size = 0x48000, scoped, tag = 'input window, operand 4, single buffered']
    #allocation9 [shape = 'u8[262144]{0}', space=vmem, size = 0x40000, scoped, tag = 'output window, operand 0']
    %12 = vsyncpa [#allocation4], 0
    %s13 = scalar_lea.sflag [#allocation4], 1
    %14 = vsyncpa %s13, 0
    %15 = vsyncpa [#allocation7], 0
    %16 = vsyncpa [#allocation5], 0
    %s17 = scalar_lea.sflag [#allocation5], 1
    %18 = vsyncpa %s17, 0
    loop: start=0, step=1, limit=4
    $region2: #{tpu_custom_call.1} parent=1 // loop_pre_header
      _
    $region3: #{tpu_custom_call.1} parent=1 // loop_header
      %s20 = sphi 0, %s24
      %p21 = scmp.ge.s32.totalorder %s20, 4
      %s30 = sphi 0, %s32
      %s33 = sphi 0, %s30
      %s34 = sphi 0, %s33
      %s50 = sphi 0, %s34
      %s54 = sphi 0, %s54
      %s56 = sphi 0, %s54
      %s57 = sphi 0, %s56
      %s71 = sphi 0, %s57
      %s75 = sphi 0, %s75
      %s77 = sphi 0, %s75
      %s78 = sphi 0, %s77
      %s92 = sphi 0, %s78
      %s96 = sphi 0, %s96
      %s98 = sphi 0, %s96
      %s99 = sphi 0, %s98
      %s113 = sphi 0, %s99
      %s117 = sphi 0, %s117
      %s119 = sphi 0, %s117
      %s120 = sphi 0, %s119
      %s134 = sphi 0, %s120
      %s138 = sphi 0, %s138
      %s140 = sphi 0, %s138
      %s141 = sphi 0, %s140
      %s155 = sphi 0, %s141
      %s159 = sphi 0, %s159
      %s161 = sphi 0, %s159
      %s162 = sphi 0, %s161
      %s176 = sphi 0, %s162
      %s182 = sphi 0, %s184
      %s185 = sphi 0, %s182
      %s186 = sphi 0, %s185
      %s202 = sphi 0, %s186
    $region4: #{tpu_custom_call.1} parent=1 // loop_header_branch
      %23 = sbr.rel (%p21) target = $region8
    $region5: #{tpu_custom_call.1} parent=1 // loop_body
      %s25 = ssub.s32 %s20, 1
      %s26 = ssub.s32 %s20, 2
      %s27 = sadd.s32 %s20, 1
      %s28 = ssub.s32 %s20, %s27
      %p29 = scmp.eq.s32.totalorder %s28, 0
      %s31 = sadd.s32 %s30, 1
      %s32 = scalar_select %p29, %s30, %s31
      %p35 = pneg %p29
      %p36 = scmp.eq.s32.totalorder %s20, 1
      %p37 = por %p35, %p36
      %p38 = scmp.ne.s32.totalorder %s30, %s33
      %p39 = scmp.eq.s32.totalorder %s20, 0
      %p40 = por %p38, %p39
      %p41 = scmp.ne.s32.totalorder %s30, %s33
      %p42 = scmp.eq.s32.totalorder %s25, 1
      %p43 = por %p41, %p42
      %p44 = scmp.ne.s32.totalorder %s33, %s34
      %p45 = scmp.eq.s32.totalorder %s25, 0
      %p46 = por %p44, %p45
      %p47 = scmp.ne.s32.totalorder %s33, %s34
      %p48 = scmp.eq.s32.totalorder %s26, 1
      %p49 = por %p47, %p48
      %p51 = scmp.ne.s32.totalorder %s34, %s50
      %p52 = scmp.eq.s32.totalorder %s26, 0
      %p53 = por %p51, %p52
      %s55 = sadd.s32 %s54, 1
      %p58 = scmp.eq.s32.totalorder %s20, 1
      %p59 = scmp.ne.s32.totalorder %s54, %s56
      %p60 = scmp.eq.s32.totalorder %s20, 0
      %p61 = por %p59, %p60
      %p62 = scmp.ne.s32.totalorder %s54, %s56
      %p63 = scmp.eq.s32.totalorder %s25, 1
      %p64 = por %p62, %p63
      %p65 = scmp.ne.s32.totalorder %s56, %s57
      %p66 = scmp.eq.s32.totalorder %s25, 0
      %p67 = por %p65, %p66
      %p68 = scmp.ne.s32.totalorder %s56, %s57
      %p69 = scmp.eq.s32.totalorder %s26, 1
      %p70 = por %p68, %p69
      %p72 = scmp.ne.s32.totalorder %s57, %s71
      %p73 = scmp.eq.s32.totalorder %s26, 0
      %p74 = por %p72, %p73
      %s76 = sadd.s32 %s75, 1
      %p79 = scmp.eq.s32.totalorder %s20, 1
      %p80 = scmp.ne.s32.totalorder %s75, %s77
      %p81 = scmp.eq.s32.totalorder %s20, 0
      %p82 = por %p80, %p81
      %p83 = scmp.ne.s32.totalorder %s75, %s77
      %p84 = scmp.eq.s32.totalorder %s25, 1
      %p85 = por %p83, %p84
      %p86 = scmp.ne.s32.totalorder %s77, %s78
      %p87 = scmp.eq.s32.totalorder %s25, 0
      %p88 = por %p86, %p87
      %p89 = scmp.ne.s32.totalorder %s77, %s78
      %p90 = scmp.eq.s32.totalorder %s26, 1
      %p91 = por %p89, %p90
      %p93 = scmp.ne.s32.totalorder %s78, %s92
      %p94 = scmp.eq.s32.totalorder %s26, 0
      %p95 = por %p93, %p94
      %s97 = sadd.s32 %s96, 1
      %p100 = scmp.eq.s32.totalorder %s20, 1
      %p101 = scmp.ne.s32.totalorder %s96, %s98
      %p102 = scmp.eq.s32.totalorder %s20, 0
      %p103 = por %p101, %p102
      %p104 = scmp.ne.s32.totalorder %s96, %s98
      %p105 = scmp.eq.s32.totalorder %s25, 1
      %p106 = por %p104, %p105
      %p107 = scmp.ne.s32.totalorder %s98, %s99
      %p108 = scmp.eq.s32.totalorder %s25, 0
      %p109 = por %p107, %p108
      %p110 = scmp.ne.s32.totalorder %s98, %s99
      %p111 = scmp.eq.s32.totalorder %s26, 1
      %p112 = por %p110, %p111
      %p114 = scmp.ne.s32.totalorder %s99, %s113
      %p115 = scmp.eq.s32.totalorder %s26, 0
      %p116 = por %p114, %p115
      %s118 = sadd.s32 %s117, 1
      %p121 = scmp.eq.s32.totalorder %s20, 1
      %p122 = scmp.ne.s32.totalorder %s117, %s119
      %p123 = scmp.eq.s32.totalorder %s20, 0
      %p124 = por %p122, %p123
      %p125 = scmp.ne.s32.totalorder %s117, %s119
      %p126 = scmp.eq.s32.totalorder %s25, 1
      %p127 = por %p125, %p126
      %p128 = scmp.ne.s32.totalorder %s119, %s120
      %p129 = scmp.eq.s32.totalorder %s25, 0
      %p130 = por %p128, %p129
      %p131 = scmp.ne.s32.totalorder %s119, %s120
      %p132 = scmp.eq.s32.totalorder %s26, 1
      %p133 = por %p131, %p132
      %p135 = scmp.ne.s32.totalorder %s120, %s134
      %p136 = scmp.eq.s32.totalorder %s26, 0
      %p137 = por %p135, %p136
      %s139 = sadd.s32 %s138, 1
      %p142 = scmp.eq.s32.totalorder %s20, 1
      %p143 = scmp.ne.s32.totalorder %s138, %s140
      %p144 = scmp.eq.s32.totalorder %s20, 0
      %p145 = por %p143, %p144
      %p146 = scmp.ne.s32.totalorder %s138, %s140
      %p147 = scmp.eq.s32.totalorder %s25, 1
      %p148 = por %p146, %p147
      %p149 = scmp.ne.s32.totalorder %s140, %s141
      %p150 = scmp.eq.s32.totalorder %s25, 0
      %p151 = por %p149, %p150
      %p152 = scmp.ne.s32.totalorder %s140, %s141
      %p153 = scmp.eq.s32.totalorder %s26, 1
      %p154 = por %p152, %p153
      %p156 = scmp.ne.s32.totalorder %s141, %s155
      %p157 = scmp.eq.s32.totalorder %s26, 0
      %p158 = por %p156, %p157
      %s160 = sadd.s32 %s159, 1
      %p163 = scmp.eq.s32.totalorder %s20, 1
      %p164 = scmp.ne.s32.totalorder %s159, %s161
      %p165 = scmp.eq.s32.totalorder %s20, 0
      %p166 = por %p164, %p165
      %p167 = scmp.ne.s32.totalorder %s159, %s161
      %p168 = scmp.eq.s32.totalorder %s25, 1
      %p169 = por %p167, %p168
      %p170 = scmp.ne.s32.totalorder %s161, %s162
      %p171 = scmp.eq.s32.totalorder %s25, 0
      %p172 = por %p170, %p171
      %p173 = scmp.ne.s32.totalorder %s161, %s162
      %p174 = scmp.eq.s32.totalorder %s26, 1
      %p175 = por %p173, %p174
      %p177 = scmp.ne.s32.totalorder %s162, %s176
      %p178 = scmp.eq.s32.totalorder %s26, 0
      %p179 = por %p177, %p178
      %s180 = ssub.s32 %s20, %s27
      %p181 = scmp.eq.s32.totalorder %s180, 0
      %s183 = sadd.s32 %s182, 1
      %s184 = scalar_select %p181, %s182, %s183
      %p187 = pneg %p181
      %p188 = scmp.eq.s32.totalorder %s20, 1
      %p189 = por %p187, %p188
      %p190 = scmp.ne.s32.totalorder %s182, %s185
      %p191 = scmp.eq.s32.totalorder %s20, 0
      %p192 = por %p190, %p191
      %p193 = scmp.ne.s32.totalorder %s182, %s185
      %p194 = scmp.eq.s32.totalorder %s25, 1
      %p195 = por %p193, %p194
      %p196 = scmp.ne.s32.totalorder %s185, %s186
      %p197 = scmp.eq.s32.totalorder %s25, 0
      %p198 = por %p196, %p197
      %p199 = scmp.ne.s32.totalorder %s185, %s186
      %p200 = scmp.eq.s32.totalorder %s26, 1
      %p201 = por %p199, %p200
      %p203 = scmp.ne.s32.totalorder %s186, %s202
      %p204 = scmp.eq.s32.totalorder %s26, 0
      %p205 = por %p203, %p204
      %p206 = scmp.le.s32.totalorder 1, %s20
      %p207 = scmp.lt.s32.totalorder %s20, 3
      %p208 = pnand %p206, %p207
      %p209 = pneg %p208
      // Predicated region
      $region9: #{tpu_custom_call.1} parent=5 // pred_check
        _
      $region10: #{tpu_custom_call.1} parent=5 // pred_check_branch
        %211 = sbr.rel (%p208) target = $region12
      $region11: #{tpu_custom_call.1} parent=5 // pred_region
        %s212 = ssub.s32 %s20, 1
        // Predicated region
        $region13: #{tpu_custom_call.1} parent=11 // pred_check
          %p213 = pneg %p67
        $region14: #{tpu_custom_call.1} parent=11 // pred_check_branch
          %215 = sbr.rel (%p213) target = $region16
        $region15: #{tpu_custom_call.1} parent=11 // pred_region
          %s217 = ssub.s32 9216, 9216
          %218 = vsyncadd [#allocation7], %s217
          %s219 = sshll.u32 [#allocation6], 4
          %s220 = int_to_ptr.vmem [resolvable:$true] %s219
          %225 = dma.hbm_to_vmem [thread:$0]  %s1, 9216, %s220, [#allocation7], 64, 64, 4
        $region16: #{tpu_custom_call.1} parent=11 // pred_fallthru
          _
        // Predicated region
        $region17: #{tpu_custom_call.1} parent=11 // pred_check
          %p226 = pneg %p88
        $region18: #{tpu_custom_call.1} parent=11 // pred_check_branch
          %228 = sbr.rel (%p226) target = $region20
        $region19: #{tpu_custom_call.1} parent=11 // pred_region
          _
        $region20: #{tpu_custom_call.1} parent=11 // pred_fallthru
          _
        // Predicated region
        $region21: #{tpu_custom_call.1} parent=11 // pred_check
          %p229 = pneg %p109
        $region22: #{tpu_custom_call.1} parent=11 // pred_check_branch
          %231 = sbr.rel (%p229) target = $region24
        $region23: #{tpu_custom_call.1} parent=11 // pred_region
          _
        $region24: #{tpu_custom_call.1} parent=11 // pred_fallthru
          _
        // Predicated region
        $region25: #{tpu_custom_call.1} parent=11 // pred_check
          %p232 = pneg %p130
        $region26: #{tpu_custom_call.1} parent=11 // pred_check_branch
          %234 = sbr.rel (%p232) target = $region28
        $region27: #{tpu_custom_call.1} parent=11 // pred_region
          %s236 = ssub.s32 9216, 9216
          %237 = vsyncadd [#allocation7], %s236
          %s238 = sshll.u32 [#allocation8], 4
          %s239 = int_to_ptr.vmem [resolvable:$true] %s238
          %244 = dma.hbm_to_vmem [thread:$0]  %s4, 9216, %s239, [#allocation7], 64, 64, 4
        $region28: #{tpu_custom_call.1} parent=11 // pred_fallthru
          _
        // Predicated region
        $region29: #{tpu_custom_call.1} parent=11 // pred_check
          %p245 = pneg %p151
        $region30: #{tpu_custom_call.1} parent=11 // pred_check_branch
          %247 = sbr.rel (%p245) target = $region32
        $region31: #{tpu_custom_call.1} parent=11 // pred_region
          _
        $region32: #{tpu_custom_call.1} parent=11 // pred_fallthru
          _
        // Predicated region
        $region33: #{tpu_custom_call.1} parent=11 // pred_check
          %p248 = pneg %p172
        $region34: #{tpu_custom_call.1} parent=11 // pred_check_branch
          %250 = sbr.rel (%p248) target = $region36
        $region35: #{tpu_custom_call.1} parent=11 // pred_region
          _
        $region36: #{tpu_custom_call.1} parent=11 // pred_fallthru
          _
      $region12: #{tpu_custom_call.1} parent=5 // pred_fallthru
        _
      %p251 = scmp.lt.s32.totalorder %s20, 2
      // Predicated region
      $region37: #{tpu_custom_call.1} parent=5 // pred_check
        %p252 = pneg %p251
      $region38: #{tpu_custom_call.1} parent=5 // pred_check_branch
        %254 = sbr.rel (%p252) target = $region40
      $region39: #{tpu_custom_call.1} parent=5 // pred_region
        // Predicated region
        $region41: #{tpu_custom_call.1} parent=39 // pred_check
          %p255 = pneg %p40
        $region42: #{tpu_custom_call.1} parent=39 // pred_check_branch
          %257 = sbr.rel (%p255) target = $region44
        $region43: #{tpu_custom_call.1} parent=39 // pred_region
          %s258 = sand.u32 %s30, 1
          %s259 = scalar_lea.sflag [#allocation4], %s258
          %s260 = sand.u32 %s30, 1
          %s261 = smul.addr %s260, 256
          %s262 = scalar_lea.vmem [#allocation3], %s261
          %s264 = ssub.s32 4096, 4096
          %265 = vsyncadd %s259, %s264
          %s266 = smul.addr %s20, 32
          %s267 = smul.addr %s266, 128
          %s268 = scalar_lea.hbm %s0, %s267
          %s269 = sshll.u32 %s262, 4
          %s270 = int_to_ptr.vmem [resolvable:$true] %s269
          %275 = dma.hbm_to_vmem [thread:$0]  %s268, 4096, %s270, %s259, 128, 128, 8
        $region44: #{tpu_custom_call.1} parent=39 // pred_fallthru
          _
      $region40: #{tpu_custom_call.1} parent=5 // pred_fallthru
        _
      %p276 = scmp.le.s32.totalorder 1, %s20
      %p277 = scmp.lt.s32.totalorder %s20, 3
      %p278 = pnand %p276, %p277
      %p279 = pneg %p278
      // Predicated region
      $region45: #{tpu_custom_call.1} parent=5 // pred_check
        _
      $region46: #{tpu_custom_call.1} parent=5 // pred_check_branch
        %281 = sbr.rel (%p278) target = $region48
      $region47: #{tpu_custom_call.1} parent=5 // pred_region
        %s282 = ssub.s32 %s20, 1
        %s283 = sand.u32 %s33, 1
        %s284 = scalar_lea.sflag [#allocation4], %s283
        %s285 = sand.u32 %s33, 1
        %s286 = smul.addr %s285, 256
        %s287 = scalar_lea.vmem [#allocation3], %s286
        // Predicated region
        $region49: #{tpu_custom_call.1} parent=47 // pred_check
          %p288 = pneg %p46
        $region50: #{tpu_custom_call.1} parent=47 // pred_check_branch
          %290 = sbr.rel (%p288) target = $region52
        $region51: #{tpu_custom_call.1} parent=47 // pred_region
          %291 = dma.done %s284, 4096
        $region52: #{tpu_custom_call.1} parent=47 // pred_fallthru
          _
        // Predicated region
        $region53: #{tpu_custom_call.1} parent=47 // pred_check
          %p292 = pneg %p67
        $region54: #{tpu_custom_call.1} parent=47 // pred_check_branch
          %294 = sbr.rel (%p292) target = $region56
        $region55: #{tpu_custom_call.1} parent=47 // pred_region
          %295 = dma.done [#allocation7], 9216
        $region56: #{tpu_custom_call.1} parent=47 // pred_fallthru
          _
        // Predicated region
        $region57: #{tpu_custom_call.1} parent=47 // pred_check
          %p296 = pneg %p130
        $region58: #{tpu_custom_call.1} parent=47 // pred_check_branch
          %298 = sbr.rel (%p296) target = $region60
        $region59: #{tpu_custom_call.1} parent=47 // pred_region
          %299 = dma.done [#allocation7], 9216
        $region60: #{tpu_custom_call.1} parent=47 // pred_fallthru
          _
        %s300 = sand.u32 %s33, 1
        %s301 = scalar_lea.sflag [#allocation4], %s300
        %s302 = sand.u32 %s33, 1
        %s303 = smul.addr %s302, 256
        %s304 = scalar_lea.vmem [#allocation3], %s303
        %p305 = pneg %p46
        %p306 = pneg %p43
        %p307 = pneg %p67
        %p308 = pneg %p64
        %p309 = pneg %p88
        %p310 = pneg %p85
        %p311 = pneg %p109
        %p312 = pneg %p106
        %p313 = pneg %p130
        %p314 = pneg %p127
        %p315 = pneg %p151
        %p316 = pneg %p148
        %p317 = pneg %p172
        %p318 = pneg %p169
        %p319 = pneg %p198
        %p320 = pneg %p195
        %s321 = sand.u32 %s185, 1
        %s322 = scalar_lea.sflag [#allocation5], %s321
        %s323 = sand.u32 %s185, 1
        %s324 = smul.addr %s323, 256
        %s325 = scalar_lea.vmem [#allocation9], %s324
        %329 = vst [vmem:[#allocation2] sm:$0xff] 0
        %330 = vst [vmem:[#allocation2 + $0x8] sm:$0xff] 0
        %331 = vst [vmem:[#allocation2 + $0x10] sm:$0xff] 0
        %332 = vst [vmem:[#allocation2 + $0x18] sm:$0xff] 0
        %333 = vst [vmem:[#allocation2 + $0x20] sm:$0xff] 0
        %334 = vst [vmem:[#allocation2 + $0x28] sm:$0xff] 0
        %335 = vst [vmem:[#allocation2 + $0x30] sm:$0xff] 0
        %336 = vst [vmem:[#allocation2 + $0x38] sm:$0xff] 0
        %337 = vst [vmem:[#allocation2 + $0x40] sm:$0xff] 0
        %338 = vst [vmem:[#allocation2 + $0x48] sm:$0xff] 0
        %339 = vst [vmem:[#allocation2 + $0x50] sm:$0xff] 0
        %340 = vst [vmem:[#allocation2 + $0x58] sm:$0xff] 0
        %341 = vst [vmem:[#allocation2 + $0x60] sm:$0xff] 0
        %342 = vst [vmem:[#allocation2 + $0x68] sm:$0xff] 0
        %343 = vst [vmem:[#allocation2 + $0x70] sm:$0xff] 0
        %344 = vst [vmem:[#allocation2 + $0x78] sm:$0xff] 0
        %345 = vst [vmem:[#allocation2 + $0x80] sm:$0xff] 0
        %346 = vst [vmem:[#allocation2 + $0x88] sm:$0xff] 0
        %347 = vst [vmem:[#allocation2 + $0x90] sm:$0xff] 0
        %348 = vst [vmem:[#allocation2 + $0x98] sm:$0xff] 0
        %349 = vst [vmem:[#allocation2 + $0xa0] sm:$0xff] 0
        %350 = vst [vmem:[#allocation2 + $0xa8] sm:$0xff] 0
        %351 = vst [vmem:[#allocation2 + $0xb0] sm:$0xff] 0
        %352 = vst [vmem:[#allocation2 + $0xb8] sm:$0xff] 0
        %353 = vst [vmem:[#allocation2 + $0xc0] sm:$0xff] 0
        %354 = vst [vmem:[#allocation2 + $0xc8] sm:$0xff] 0
        %355 = vst [vmem:[#allocation2 + $0xd0] sm:$0xff] 0
        %356 = vst [vmem:[#allocation2 + $0xd8] sm:$0xff] 0
        %357 = vst [vmem:[#allocation2 + $0xe0] sm:$0xff] 0
        %358 = vst [vmem:[#allocation2 + $0xe8] sm:$0xff] 0
        %359 = vst [vmem:[#allocation2 + $0xf0] sm:$0xff] 0
        %360 = vst [vmem:[#allocation2 + $0xf8] sm:$0xff] 0
        %361 = vst [vmem:[#allocation2 + $0x100] sm:$0xff] 0
        %362 = vst [vmem:[#allocation2 + $0x108] sm:$0xff] 0
        %363 = vst [vmem:[#allocation2 + $0x110] sm:$0xff] 0
        %364 = vst [vmem:[#allocation2 + $0x118] sm:$0xff] 0
        %365 = vst [vmem:[#allocation2 + $0x120] sm:$0xff] 0
        %366 = vst [vmem:[#allocation2 + $0x128] sm:$0xff] 0
        %367 = vst [vmem:[#allocation2 + $0x130] sm:$0xff] 0
        %368 = vst [vmem:[#allocation2 + $0x138] sm:$0xff] 0
        %369 = vst [vmem:[#allocation2 + $0x140] sm:$0xff] 0
        %370 = vst [vmem:[#allocation2 + $0x148] sm:$0xff] 0
        %371 = vst [vmem:[#allocation2 + $0x150] sm:$0xff] 0
        %372 = vst [vmem:[#allocation2 + $0x158] sm:$0xff] 0
        %373 = vst [vmem:[#allocation2 + $0x160] sm:$0xff] 0
        %374 = vst [vmem:[#allocation2 + $0x168] sm:$0xff] 0
        %375 = vst [vmem:[#allocation2 + $0x170] sm:$0xff] 0
        %376 = vst [vmem:[#allocation2 + $0x178] sm:$0xff] 0
        %377 = vst [vmem:[#allocation2 + $0x180] sm:$0xff] 0
        %378 = vst [vmem:[#allocation2 + $0x188] sm:$0xff] 0
        %379 = vst [vmem:[#allocation2 + $0x190] sm:$0xff] 0
        %380 = vst [vmem:[#allocation2 + $0x198] sm:$0xff] 0
        %381 = vst [vmem:[#allocation2 + $0x1a0] sm:$0xff] 0
        %382 = vst [vmem:[#allocation2 + $0x1a8] sm:$0xff] 0
        %v383 = vlaneseq
        %v384 = vshrl.u32 %v383, 7
        %v385 = vadd.s32 %v384, 8
        %v386 = vadd.s32 %v384, 16
        %v387 = vadd.s32 %v384, 24
        %v388 = vadd.s32 %v384, 32
        %v389 = vadd.s32 %v384, 40
        %v390 = vadd.s32 %v384, 48
        %v391 = vadd.s32 %v384, 56
        %v392 = vadd.s32 %v384, 64
        %v393 = vadd.s32 %v384, 72
        %v394 = vadd.s32 %v384, 80
        %v395 = vadd.s32 %v384, 88
        %v396 = vadd.s32 %v384, 96
        %v397 = vadd.s32 %v384, 104
        %v398 = vadd.s32 %v384, 112
        %v399 = vadd.s32 %v384, 120
        %v400 = vadd.s32 %v384, 128
        %v401 = vadd.s32 %v384, 136
        %v402 = vadd.s32 %v384, 144
        %v403 = vadd.s32 %v384, 152
        %v404 = vadd.s32 %v384, 160
        %v405 = vadd.s32 %v384, 168
        %v406 = vadd.s32 %v384, 176
        %v407 = vadd.s32 %v384, 184
        %v408 = vadd.s32 %v384, 192
        %v409 = vadd.s32 %v384, 200
        %v410 = vadd.s32 %v384, 208
        %v411 = vadd.s32 %v384, 216
        %v412 = vadd.s32 %v384, 224
        %v413 = vadd.s32 %v384, 232
        %v414 = vadd.s32 %v384, 240
        %v415 = vadd.s32 %v384, 248
        %vm416 = vcmp.lt.s32.totalorder %v384, 0
        %v417 = vsub.s32 0, %v384
        %v418 = vsel %vm416, %v417, %v384
        %v419 = vshrl.u32 %v418, 4
        %v420 = vand.u32 %v418, 15
        %v421 = vsub.s32 0, %v420
        %v422 = vsel %vm416, %v421, %v420
        %vm423 = vcmp.lt.s32.totalorder %v385, 0
        %v424 = vsub.s32 0, %v385
        %v425 = vsel %vm423, %v424, %v385
        %v426 = vshrl.u32 %v425, 4
        %v427 = vand.u32 %v425, 15
        %v428 = vsub.s32 0, %v427
        %v429 = vsel %vm423, %v428, %v427
        %vm430 = vcmp.lt.s32.totalorder %v386, 0
        %v431 = vsub.s32 0, %v386
        %v432 = vsel %vm430, %v431, %v386
        %v433 = vshrl.u32 %v432, 4
        %v434 = vand.u32 %v432, 15
        %v435 = vsub.s32 0, %v434
        %v436 = vsel %vm430, %v435, %v434
        %vm437 = vcmp.lt.s32.totalorder %v387, 0
        %v438 = vsub.s32 0, %v387
        %v439 = vsel %vm437, %v438, %v387
        %v440 = vshrl.u32 %v439, 4
        %v441 = vand.u32 %v439, 15
        %v442 = vsub.s32 0, %v441
        %v443 = vsel %vm437, %v442, %v441
        %vm444 = vcmp.lt.s32.totalorder %v388, 0
        %v445 = vsub.s32 0, %v388
        %v446 = vsel %vm444, %v445, %v388
        %v447 = vshrl.u32 %v446, 4
        %v448 = vand.u32 %v446, 15
        %v449 = vsub.s32 0, %v448
        %v450 = vsel %vm444, %v449, %v448
        %vm451 = vcmp.lt.s32.totalorder %v389, 0
        %v452 = vsub.s32 0, %v389
        %v453 = vsel %vm451, %v452, %v389
        %v454 = vshrl.u32 %v453, 4
        %v455 = vand.u32 %v453, 15
        %v456 = vsub.s32 0, %v455
        %v457 = vsel %vm451, %v456, %v455
        %vm458 = vcmp.lt.s32.totalorder %v390, 0
        %v459 = vsub.s32 0, %v390
        %v460 = vsel %vm458, %v459, %v390
        %v461 = vshrl.u32 %v460, 4
        %v462 = vand.u32 %v460, 15
        %v463 = vsub.s32 0, %v462
        %v464 = vsel %vm458, %v463, %v462
        %vm465 = vcmp.lt.s32.totalorder %v391, 0
        %v466 = vsub.s32 0, %v391
        %v467 = vsel %vm465, %v466, %v391
        %v468 = vshrl.u32 %v467, 4
        %v469 = vand.u32 %v467, 15
        %v470 = vsub.s32 0, %v469
        %v471 = vsel %vm465, %v470, %v469
        %vm472 = vcmp.lt.s32.totalorder %v392, 0
        %v473 = vsub.s32 0, %v392
        %v474 = vsel %vm472, %v473, %v392
        %v475 = vshrl.u32 %v474, 4
        %v476 = vand.u32 %v474, 15
        %v477 = vsub.s32 0, %v476
        %v478 = vsel %vm472, %v477, %v476
        %vm479 = vcmp.lt.s32.totalorder %v393, 0
        %v480 = vsub.s32 0, %v393
        %v481 = vsel %vm479, %v480, %v393
        %v482 = vshrl.u32 %v481, 4
        %v483 = vand.u32 %v481, 15
        %v484 = vsub.s32 0, %v483
        %v485 = vsel %vm479, %v484, %v483
        %vm486 = vcmp.lt.s32.totalorder %v394, 0
        %v487 = vsub.s32 0, %v394
        %v488 = vsel %vm486, %v487, %v394
        %v489 = vshrl.u32 %v488, 4
        %v490 = vand.u32 %v488, 15
        %v491 = vsub.s32 0, %v490
        %v492 = vsel %vm486, %v491, %v490
        %vm493 = vcmp.lt.s32.totalorder %v395, 0
        %v494 = vsub.s32 0, %v395
        %v495 = vsel %vm493, %v494, %v395
        %v496 = vshrl.u32 %v495, 4
        %v497 = vand.u32 %v495, 15
        %v498 = vsub.s32 0, %v497
        %v499 = vsel %vm493, %v498, %v497
        %vm500 = vcmp.lt.s32.totalorder %v396, 0
        %v501 = vsub.s32 0, %v396
        %v502 = vsel %vm500, %v501, %v396
        %v503 = vshrl.u32 %v502, 4
        %v504 = vand.u32 %v502, 15
        %v505 = vsub.s32 0, %v504
        %v506 = vsel %vm500, %v505, %v504
        %vm507 = vcmp.lt.s32.totalorder %v397, 0
        %v508 = vsub.s32 0, %v397
        %v509 = vsel %vm507, %v508, %v397
        %v510 = vshrl.u32 %v509, 4
        %v511 = vand.u32 %v509, 15
        %v512 = vsub.s32 0, %v511
        %v513 = vsel %vm507, %v512, %v511
        %vm514 = vcmp.lt.s32.totalorder %v398, 0
        %v515 = vsub.s32 0, %v398
        %v516 = vsel %vm514, %v515, %v398
        %v517 = vshrl.u32 %v516, 4
        %v518 = vand.u32 %v516, 15
        %v519 = vsub.s32 0, %v518
        %v520 = vsel %vm514, %v519, %v518
        %vm521 = vcmp.lt.s32.totalorder %v399, 0
        %v522 = vsub.s32 0, %v399
        %v523 = vsel %vm521, %v522, %v399
        %v524 = vshrl.u32 %v523, 4
        %v525 = vand.u32 %v523, 15
        %v526 = vsub.s32 0, %v525
        %v527 = vsel %vm521, %v526, %v525
        %vm528 = vcmp.lt.s32.totalorder %v400, 0
        %v529 = vsub.s32 0, %v400
        %v530 = vsel %vm528, %v529, %v400
        %v531 = vshrl.u32 %v530, 4
        %v532 = vand.u32 %v530, 15
        %v533 = vsub.s32 0, %v532
        %v534 = vsel %vm528, %v533, %v532
        %vm535 = vcmp.lt.s32.totalorder %v401, 0
        %v536 = vsub.s32 0, %v401
        %v537 = vsel %vm535, %v536, %v401
        %v538 = vshrl.u32 %v537, 4
        %v539 = vand.u32 %v537, 15
        %v540 = vsub.s32 0, %v539
        %v541 = vsel %vm535, %v540, %v539
        %vm542 = vcmp.lt.s32.totalorder %v402, 0
        %v543 = vsub.s32 0, %v402
        %v544 = vsel %vm542, %v543, %v402
        %v545 = vshrl.u32 %v544, 4
        %v546 = vand.u32 %v544, 15
        %v547 = vsub.s32 0, %v546
        %v548 = vsel %vm542, %v547, %v546
        %vm549 = vcmp.lt.s32.totalorder %v403, 0
        %v550 = vsub.s32 0, %v403
        %v551 = vsel %vm549, %v550, %v403
        %v552 = vshrl.u32 %v551, 4
        %v553 = vand.u32 %v551, 15
        %v554 = vsub.s32 0, %v553
        %v555 = vsel %vm549, %v554, %v553
        %vm556 = vcmp.lt.s32.totalorder %v404, 0
        %v557 = vsub.s32 0, %v404
        %v558 = vsel %vm556, %v557, %v404
        %v559 = vshrl.u32 %v558, 4
        %v560 = vand.u32 %v558, 15
        %v561 = vsub.s32 0, %v560
        %v562 = vsel %vm556, %v561, %v560
        %vm563 = vcmp.lt.s32.totalorder %v405, 0
        %v564 = vsub.s32 0, %v405
        %v565 = vsel %vm563, %v564, %v405
        %v566 = vshrl.u32 %v565, 4
        %v567 = vand.u32 %v565, 15
        %v568 = vsub.s32 0, %v567
        %v569 = vsel %vm563, %v568, %v567
        %vm570 = vcmp.lt.s32.totalorder %v406, 0
        %v571 = vsub.s32 0, %v406
        %v572 = vsel %vm570, %v571, %v406
        %v573 = vshrl.u32 %v572, 4
        %v574 = vand.u32 %v572, 15
        %v575 = vsub.s32 0, %v574
        %v576 = vsel %vm570, %v575, %v574
        %vm577 = vcmp.lt.s32.totalorder %v407, 0
        %v578 = vsub.s32 0, %v407
        %v579 = vsel %vm577, %v578, %v407
        %v580 = vshrl.u32 %v579, 4
        %v581 = vand.u32 %v579, 15
        %v582 = vsub.s32 0, %v581
        %v583 = vsel %vm577, %v582, %v581
        %vm584 = vcmp.lt.s32.totalorder %v408, 0
        %v585 = vsub.s32 0, %v408
        %v586 = vsel %vm584, %v585, %v408
        %v587 = vshrl.u32 %v586, 4
        %v588 = vand.u32 %v586, 15
        %v589 = vsub.s32 0, %v588
        %v590 = vsel %vm584, %v589, %v588
        %vm591 = vcmp.lt.s32.totalorder %v409, 0
        %v592 = vsub.s32 0, %v409
        %v593 = vsel %vm591, %v592, %v409
        %v594 = vshrl.u32 %v593, 4
        %v595 = vand.u32 %v593, 15
        %v596 = vsub.s32 0, %v595
        %v597 = vsel %vm591, %v596, %v595
        %vm598 = vcmp.lt.s32.totalorder %v410, 0
        %v599 = vsub.s32 0, %v410
        %v600 = vsel %vm598, %v599, %v410
        %v601 = vshrl.u32 %v600, 4
        %v602 = vand.u32 %v600, 15
        %v603 = vsub.s32 0, %v602
        %v604 = vsel %vm598, %v603, %v602
        %vm605 = vcmp.lt.s32.totalorder %v411, 0
        %v606 = vsub.s32 0, %v411
        %v607 = vsel %vm605, %v606, %v411
        %v608 = vshrl.u32 %v607, 4
        %v609 = vand.u32 %v607, 15
        %v610 = vsub.s32 0, %v609
        %v611 = vsel %vm605, %v610, %v609
        %vm612 = vcmp.lt.s32.totalorder %v412, 0
        %v613 = vsub.s32 0, %v412
        %v614 = vsel %vm612, %v613, %v412
        %v615 = vshrl.u32 %v614, 4
        %v616 = vand.u32 %v614, 15
        %v617 = vsub.s32 0, %v616
        %v618 = vsel %vm612, %v617, %v616
        %vm619 = vcmp.lt.s32.totalorder %v413, 0
        %v620 = vsub.s32 0, %v413
        %v621 = vsel %vm619, %v620, %v413
        %v622 = vshrl.u32 %v621, 4
        %v623 = vand.u32 %v621, 15
        %v624 = vsub.s32 0, %v623
        %v625 = vsel %vm619, %v624, %v623
        %vm626 = vcmp.lt.s32.totalorder %v414, 0
        %v627 = vsub.s32 0, %v414
        %v628 = vsel %vm626, %v627, %v414
        %v629 = vshrl.u32 %v628, 4
        %v630 = vand.u32 %v628, 15
        %v631 = vsub.s32 0, %v630
        %v632 = vsel %vm626, %v631, %v630
        %vm633 = vcmp.lt.s32.totalorder %v415, 0
        %v634 = vsub.s32 0, %v415
        %v635 = vsel %vm633, %v634, %v415
        %v636 = vshrl.u32 %v635, 4
        %v637 = vand.u32 %v635, 15
        %v638 = vsub.s32 0, %v637
        %v639 = vsel %vm633, %v638, %v637
        %vm640 = vcmp.ne.s32.totalorder %v422, 0
        %vm641 = vcmp.ne.s32.totalorder %v429, 0
        %vm642 = vcmp.ne.s32.totalorder %v436, 0
        %vm643 = vcmp.ne.s32.totalorder %v443, 0
        %vm644 = vcmp.ne.s32.totalorder %v450, 0
        %vm645 = vcmp.ne.s32.totalorder %v457, 0
        %vm646 = vcmp.ne.s32.totalorder %v464, 0
        %vm647 = vcmp.ne.s32.totalorder %v471, 0
        %vm648 = vcmp.ne.s32.totalorder %v478, 0
        %vm649 = vcmp.ne.s32.totalorder %v485, 0
        %vm650 = vcmp.ne.s32.totalorder %v492, 0
        %vm651 = vcmp.ne.s32.totalorder %v499, 0
        %vm652 = vcmp.ne.s32.totalorder %v506, 0
        %vm653 = vcmp.ne.s32.totalorder %v513, 0
        %vm654 = vcmp.ne.s32.totalorder %v520, 0
        %vm655 = vcmp.ne.s32.totalorder %v527, 0
        %vm656 = vcmp.ne.s32.totalorder %v534, 0
        %vm657 = vcmp.ne.s32.totalorder %v541, 0
        %vm658 = vcmp.ne.s32.totalorder %v548, 0
        %vm659 = vcmp.ne.s32.totalorder %v555, 0
        %vm660 = vcmp.ne.s32.totalorder %v562, 0
        %vm661 = vcmp.ne.s32.totalorder %v569, 0
        %vm662 = vcmp.ne.s32.totalorder %v576, 0
        %vm663 = vcmp.ne.s32.totalorder %v583, 0
        %vm664 = vcmp.ne.s32.totalorder %v590, 0
        %vm665 = vcmp.ne.s32.totalorder %v597, 0
        %vm666 = vcmp.ne.s32.totalorder %v604, 0
        %vm667 = vcmp.ne.s32.totalorder %v611, 0
        %vm668 = vcmp.ne.s32.totalorder %v618, 0
        %vm669 = vcmp.ne.s32.totalorder %v625, 0
        %vm670 = vcmp.ne.s32.totalorder %v632, 0
        %vm671 = vcmp.ne.s32.totalorder %v639, 0
        %vm672 = vcmp.lt.s32.totalorder %v422, 0
        %vm673 = vcmp.lt.s32.totalorder %v429, 0
        %vm674 = vcmp.lt.s32.totalorder %v436, 0
        %vm675 = vcmp.lt.s32.totalorder %v443, 0
        %vm676 = vcmp.lt.s32.totalorder %v450, 0
        %vm677 = vcmp.lt.s32.totalorder %v457, 0
        %vm678 = vcmp.lt.s32.totalorder %v464, 0
        %vm679 = vcmp.lt.s32.totalorder %v471, 0
        %vm680 = vcmp.lt.s32.totalorder %v478, 0
        %vm681 = vcmp.lt.s32.totalorder %v485, 0
        %vm682 = vcmp.lt.s32.totalorder %v492, 0
        %vm683 = vcmp.lt.s32.totalorder %v499, 0
        %vm684 = vcmp.lt.s32.totalorder %v506, 0
        %vm685 = vcmp.lt.s32.totalorder %v513, 0
        %vm686 = vcmp.lt.s32.totalorder %v520, 0
        %vm687 = vcmp.lt.s32.totalorder %v527, 0
        %vm688 = vcmp.lt.s32.totalorder %v534, 0
        %vm689 = vcmp.lt.s32.totalorder %v541, 0
        %vm690 = vcmp.lt.s32.totalorder %v548, 0
        %vm691 = vcmp.lt.s32.totalorder %v555, 0
        %vm692 = vcmp.lt.s32.totalorder %v562, 0
        %vm693 = vcmp.lt.s32.totalorder %v569, 0
        %vm694 = vcmp.lt.s32.totalorder %v576, 0
        %vm695 = vcmp.lt.s32.totalorder %v583, 0
        %vm696 = vcmp.lt.s32.totalorder %v590, 0
        %vm697 = vcmp.lt.s32.totalorder %v597, 0
        %vm698 = vcmp.lt.s32.totalorder %v604, 0
        %vm699 = vcmp.lt.s32.totalorder %v611, 0
        %vm700 = vcmp.lt.s32.totalorder %v618, 0
        %vm701 = vcmp.lt.s32.totalorder %v625, 0
        %vm702 = vcmp.lt.s32.totalorder %v632, 0
        %vm703 = vcmp.lt.s32.totalorder %v639, 0
        %vm704 = vmand %vm672, %vm640
        %vm705 = vmand %vm673, %vm641
        %vm706 = vmand %vm674, %vm642
        %vm707 = vmand %vm675, %vm643
        %vm708 = vmand %vm676, %vm644
        %vm709 = vmand %vm677, %vm645
        %vm710 = vmand %vm678, %vm646
        %vm711 = vmand %vm679, %vm647
        %vm712 = vmand %vm680, %vm648
        %vm713 = vmand %vm681, %vm649
        %vm714 = vmand %vm682, %vm650
        %vm715 = vmand %vm683, %vm651
        %vm716 = vmand %vm684, %vm652
        %vm717 = vmand %vm685, %vm653
        %vm718 = vmand %vm686, %vm654
        %vm719 = vmand %vm687, %vm655
        %vm720 = vmand %vm688, %vm656
        %vm721 = vmand %vm689, %vm657
        %vm722 = vmand %vm690, %vm658
        %vm723 = vmand %vm691, %vm659
        %vm724 = vmand %vm692, %vm660
        %vm725 = vmand %vm693, %vm661
        %vm726 = vmand %vm694, %vm662
        %vm727 = vmand %vm695, %vm663
        %vm728 = vmand %vm696, %vm664
        %vm729 = vmand %vm697, %vm665
        %vm730 = vmand %vm698, %vm666
        %vm731 = vmand %vm699, %vm667
        %vm732 = vmand %vm700, %vm668
        %vm733 = vmand %vm701, %vm669
        %vm734 = vmand %vm702, %vm670
        %vm735 = vmand %vm703, %vm671
        %v736 = vadd.s32 %v422, 16
        %v737 = vadd.s32 %v429, 16
        %v738 = vadd.s32 %v436, 16
        %v739 = vadd.s32 %v443, 16
        %v740 = vadd.s32 %v450, 16
        %v741 = vadd.s32 %v457, 16
        %v742 = vadd.s32 %v464, 16
        %v743 = vadd.s32 %v471, 16
        %v744 = vadd.s32 %v478, 16
        %v745 = vadd.s32 %v485, 16
        %v746 = vadd.s32 %v492, 16
        %v747 = vadd.s32 %v499, 16
        %v748 = vadd.s32 %v506, 16
        %v749 = vadd.s32 %v513, 16
        %v750 = vadd.s32 %v520, 16
        %v751 = vadd.s32 %v527, 16
        %v752 = vadd.s32 %v534, 16
        %v753 = vadd.s32 %v541, 16
        %v754 = vadd.s32 %v548, 16
        %v755 = vadd.s32 %v555, 16
        %v756 = vadd.s32 %v562, 16
        %v757 = vadd.s32 %v569, 16
        %v758 = vadd.s32 %v576, 16
        %v759 = vadd.s32 %v583, 16
        %v760 = vadd.s32 %v590, 16
        %v761 = vadd.s32 %v597, 16
        %v762 = vadd.s32 %v604, 16
        %v763 = vadd.s32 %v611, 16
        %v764 = vadd.s32 %v618, 16
        %v765 = vadd.s32 %v625, 16
        %v766 = vadd.s32 %v632, 16
        %v767 = vadd.s32 %v639, 16
        %v768 = vsel %vm704, %v736, %v422
        %v769 = vsel %vm705, %v737, %v429
        %v770 = vsel %vm706, %v738, %v436
        %v771 = vsel %vm707, %v739, %v443
        %v772 = vsel %vm708, %v740, %v450
        %v773 = vsel %vm709, %v741, %v457
        %v774 = vsel %vm710, %v742, %v464
        %v775 = vsel %vm711, %v743, %v471
        %v776 = vsel %vm712, %v744, %v478
        %v777 = vsel %vm713, %v745, %v485
        %v778 = vsel %vm714, %v746, %v492
        %v779 = vsel %vm715, %v747, %v499
        %v780 = vsel %vm716, %v748, %v506
        %v781 = vsel %vm717, %v749, %v513
        %v782 = vsel %vm718, %v750, %v520
        %v783 = vsel %vm719, %v751, %v527
        %v784 = vsel %vm720, %v752, %v534
        %v785 = vsel %vm721, %v753, %v541
        %v786 = vsel %vm722, %v754, %v548
        %v787 = vsel %vm723, %v755, %v555
        %v788 = vsel %vm724, %v756, %v562
        %v789 = vsel %vm725, %v757, %v569
        %v790 = vsel %vm726, %v758, %v576
        %v791 = vsel %vm727, %v759, %v583
        %v792 = vsel %vm728, %v760, %v590
        %v793 = vsel %vm729, %v761, %v597
        %v794 = vsel %vm730, %v762, %v604
        %v795 = vsel %vm731, %v763, %v611
        %v796 = vsel %vm732, %v764, %v618
        %v797 = vsel %vm733, %v765, %v625
        %v798 = vsel %vm734, %v766, %v632
        %v799 = vsel %vm735, %v767, %v639
        %vm800 = vcmp.ne.s32.totalorder %v768, 15
        %vm801 = vcmp.ne.s32.totalorder %v769, 15
        %vm802 = vcmp.ne.s32.totalorder %v770, 15
        %vm803 = vcmp.ne.s32.totalorder %v771, 15
        %vm804 = vcmp.ne.s32.totalorder %v772, 15
        %vm805 = vcmp.ne.s32.totalorder %v773, 15
        %vm806 = vcmp.ne.s32.totalorder %v774, 15
        %vm807 = vcmp.ne.s32.totalorder %v775, 15
        %vm808 = vcmp.ne.s32.totalorder %v776, 15
        %vm809 = vcmp.ne.s32.totalorder %v777, 15
        %vm810 = vcmp.ne.s32.totalorder %v778, 15
        %vm811 = vcmp.ne.s32.totalorder %v779, 15
        %vm812 = vcmp.ne.s32.totalorder %v780, 15
        %vm813 = vcmp.ne.s32.totalorder %v781, 15
        %vm814 = vcmp.ne.s32.totalorder %v782, 15
        %vm815 = vcmp.ne.s32.totalorder %v783, 15
        %vm816 = vcmp.ne.s32.totalorder %v784, 15
        %vm817 = vcmp.ne.s32.totalorder %v785, 15
        %vm818 = vcmp.ne.s32.totalorder %v786, 15
        %vm819 = vcmp.ne.s32.totalorder %v787, 15
        %vm820 = vcmp.ne.s32.totalorder %v788, 15
        %vm821 = vcmp.ne.s32.totalorder %v789, 15
        %vm822 = vcmp.ne.s32.totalorder %v790, 15
        %vm823 = vcmp.ne.s32.totalorder %v791, 15
        %vm824 = vcmp.ne.s32.totalorder %v792, 15
        %vm825 = vcmp.ne.s32.totalorder %v793, 15
        %vm826 = vcmp.ne.s32.totalorder %v794, 15
        %vm827 = vcmp.ne.s32.totalorder %v795, 15
        %vm828 = vcmp.ne.s32.totalorder %v796, 15
        %vm829 = vcmp.ne.s32.totalorder %v797, 15
        %vm830 = vcmp.ne.s32.totalorder %v798, 15
        %vm831 = vcmp.ne.s32.totalorder %v799, 15
        %vm832 = vcmp.ne.s32.totalorder %v768, 0
        %vm833 = vcmp.ne.s32.totalorder %v769, 0
        %vm834 = vcmp.ne.s32.totalorder %v770, 0
        %vm835 = vcmp.ne.s32.totalorder %v771, 0
        %vm836 = vcmp.ne.s32.totalorder %v772, 0
        %vm837 = vcmp.ne.s32.totalorder %v773, 0
        %vm838 = vcmp.ne.s32.totalorder %v774, 0
        %vm839 = vcmp.ne.s32.totalorder %v775, 0
        %vm840 = vcmp.ne.s32.totalorder %v776, 0
        %vm841 = vcmp.ne.s32.totalorder %v777, 0
        %vm842 = vcmp.ne.s32.totalorder %v778, 0
        %vm843 = vcmp.ne.s32.totalorder %v779, 0
        %vm844 = vcmp.ne.s32.totalorder %v780, 0
        %vm845 = vcmp.ne.s32.totalorder %v781, 0
        %vm846 = vcmp.ne.s32.totalorder %v782, 0
        %vm847 = vcmp.ne.s32.totalorder %v783, 0
        %vm848 = vcmp.ne.s32.totalorder %v784, 0
        %vm849 = vcmp.ne.s32.totalorder %v785, 0
        %vm850 = vcmp.ne.s32.totalorder %v786, 0
        %vm851 = vcmp.ne.s32.totalorder %v787, 0
        %vm852 = vcmp.ne.s32.totalorder %v788, 0
        %vm853 = vcmp.ne.s32.totalorder %v789, 0
        %vm854 = vcmp.ne.s32.totalorder %v790, 0
        %vm855 = vcmp.ne.s32.totalorder %v791, 0
        %vm856 = vcmp.ne.s32.totalorder %v792, 0
        %vm857 = vcmp.ne.s32.totalorder %v793, 0
        %vm858 = vcmp.ne.s32.totalorder %v794, 0
        %vm859 = vcmp.ne.s32.totalorder %v795, 0
        %vm860 = vcmp.ne.s32.totalorder %v796, 0
        %vm861 = vcmp.ne.s32.totalorder %v797, 0
        %vm862 = vcmp.ne.s32.totalorder %v798, 0
        %vm863 = vcmp.ne.s32.totalorder %v799, 0
        %v864 = vld [vmem:[%s287] sm:$0xff]
        %v865 = vld [vmem:[%s287 + $0x8] sm:$0xff]
        %v866 = vld [vmem:[%s287 + $0x10] sm:$0xff]
        %v867 = vld [vmem:[%s287 + $0x18] sm:$0xff]
        %v868 = vld [vmem:[%s287 + $0x20] sm:$0xff]
        %v869 = vld [vmem:[%s287 + $0x28] sm:$0xff]
        %v870 = vld [vmem:[%s287 + $0x30] sm:$0xff]
        %v871 = vld [vmem:[%s287 + $0x38] sm:$0xff]
        %v872 = vld [vmem:[%s287 + $0x40] sm:$0xff]
        %v873 = vld [vmem:[%s287 + $0x48] sm:$0xff]
        %v874 = vld [vmem:[%s287 + $0x50] sm:$0xff]
        %v875 = vld [vmem:[%s287 + $0x58] sm:$0xff]
        %v876 = vld [vmem:[%s287 + $0x60] sm:$0xff]
        %v877 = vld [vmem:[%s287 + $0x68] sm:$0xff]
        %v878 = vld [vmem:[%s287 + $0x70] sm:$0xff]
        %v879 = vld [vmem:[%s287 + $0x78] sm:$0xff]
        %v880 = vld [vmem:[%s287 + $0x80] sm:$0xff]
        %v881 = vld [vmem:[%s287 + $0x88] sm:$0xff]
        %v882 = vld [vmem:[%s287 + $0x90] sm:$0xff]
        %v883 = vld [vmem:[%s287 + $0x98] sm:$0xff]
        %v884 = vld [vmem:[%s287 + $0xa0] sm:$0xff]
        %v885 = vld [vmem:[%s287 + $0xa8] sm:$0xff]
        %v886 = vld [vmem:[%s287 + $0xb0] sm:$0xff]
        %v887 = vld [vmem:[%s287 + $0xb8] sm:$0xff]
        %v888 = vld [vmem:[%s287 + $0xc0] sm:$0xff]
        %v889 = vld [vmem:[%s287 + $0xc8] sm:$0xff]
        %v890 = vld [vmem:[%s287 + $0xd0] sm:$0xff]
        %v891 = vld [vmem:[%s287 + $0xd8] sm:$0xff]
        %v892 = vld [vmem:[%s287 + $0xe0] sm:$0xff]
        %v893 = vld [vmem:[%s287 + $0xe8] sm:$0xff]
        %v894 = vld [vmem:[%s287 + $0xf0] sm:$0xff]
        %v895 = vld [vmem:[%s287 + $0xf8] sm:$0xff]
        %v896 = vpack.c.bf16 %v865, %v864
        %v897 = vpack.c.bf16 %v867, %v866
        %v898 = vpack.c.bf16 %v869, %v868
        %v899 = vpack.c.bf16 %v871, %v870
        %v900 = vpack.c.bf16 %v873, %v872
        %v901 = vpack.c.bf16 %v875, %v874
        %v902 = vpack.c.bf16 %v877, %v876
        %v903 = vpack.c.bf16 %v879, %v878
        %v904 = vpack.c.bf16 %v881, %v880
        %v905 = vpack.c.bf16 %v883, %v882
        %v906 = vpack.c.bf16 %v885, %v884
        %v907 = vpack.c.bf16 %v887, %v886
        %v908 = vpack.c.bf16 %v889, %v888
        %v909 = vpack.c.bf16 %v891, %v890
        %v910 = vpack.c.bf16 %v893, %v892
        %v911 = vpack.c.bf16 %v895, %v894
        %912 = vst [vmem:[#allocation2 + $0x20] sm:$0xff] %v896
        %913 = vst [vmem:[#allocation2 + $0x38] sm:$0xff] %v897
        %914 = vst [vmem:[#allocation2 + $0x50] sm:$0xff] %v898
        %915 = vst [vmem:[#allocation2 + $0x68] sm:$0xff] %v899
        %916 = vst [vmem:[#allocation2 + $0x80] sm:$0xff] %v900
        %917 = vst [vmem:[#allocation2 + $0x98] sm:$0xff] %v901
        %918 = vst [vmem:[#allocation2 + $0xb0] sm:$0xff] %v902
        %919 = vst [vmem:[#allocation2 + $0xc8] sm:$0xff] %v903
        %920 = vst [vmem:[#allocation2 + $0xe0] sm:$0xff] %v904
        %921 = vst [vmem:[#allocation2 + $0xf8] sm:$0xff] %v905
        %922 = vst [vmem:[#allocation2 + $0x110] sm:$0xff] %v906
        %923 = vst [vmem:[#allocation2 + $0x128] sm:$0xff] %v907
        %924 = vst [vmem:[#allocation2 + $0x140] sm:$0xff] %v908
        %925 = vst [vmem:[#allocation2 + $0x158] sm:$0xff] %v909
        %926 = vst [vmem:[#allocation2 + $0x170] sm:$0xff] %v910
        %927 = vst [vmem:[#allocation2 + $0x188] sm:$0xff] %v911
        %vm928 = vmpackc.low %vm800, %vm800
        %vm929 = vmpackc.low %vm801, %vm801
        %vm930 = vmpackc.low %vm802, %vm802
        %vm931 = vmpackc.low %vm803, %vm803
        %vm932 = vmpackc.low %vm804, %vm804
        %vm933 = vmpackc.low %vm805, %vm805
        %vm934 = vmpackc.low %vm806, %vm806
        %vm935 = vmpackc.low %vm807, %vm807
        %vm936 = vmpackc.low %vm808, %vm808
        %vm937 = vmpackc.low %vm809, %vm809
        %vm938 = vmpackc.low %vm810, %vm810
        %vm939 = vmpackc.low %vm811, %vm811
        %vm940 = vmpackc.low %vm812, %vm812
        %vm941 = vmpackc.low %vm813, %vm813
        %vm942 = vmpackc.low %vm814, %vm814
        %vm943 = vmpackc.low %vm815, %vm815
        %vm944 = vmpackc.low %vm816, %vm816
        %vm945 = vmpackc.low %vm817, %vm817
        %vm946 = vmpackc.low %vm818, %vm818
        %vm947 = vmpackc.low %vm819, %vm819
        %vm948 = vmpackc.low %vm820, %vm820
        %vm949 = vmpackc.low %vm821, %vm821
        %vm950 = vmpackc.low %vm822, %vm822
        %vm951 = vmpackc.low %vm823, %vm823
        %vm952 = vmpackc.low %vm824, %vm824
        %vm953 = vmpackc.low %vm825, %vm825
        %vm954 = vmpackc.low %vm826, %vm826
        %vm955 = vmpackc.low %vm827, %vm827
        %vm956 = vmpackc.low %vm828, %vm828
        %vm957 = vmpackc.low %vm829, %vm829
        %vm958 = vmpackc.low %vm830, %vm830
        %vm959 = vmpackc.low %vm831, %vm831
        %v960 = vsel %vm928, 65537, 0
        %v961 = vsel %vm929, 65537, 0
        %v962 = vsel %vm930, 65537, 0
        %v963 = vsel %vm931, 65537, 0
        %v964 = vsel %vm932, 65537, 0
        %v965 = vsel %vm933, 65537, 0
        %v966 = vsel %vm934, 65537, 0
        %v967 = vsel %vm935, 65537, 0
        %v968 = vsel %vm936, 65537, 0
        %v969 = vsel %vm937, 65537, 0
        %v970 = vsel %vm938, 65537, 0
        %v971 = vsel %vm939, 65537, 0
        %v972 = vsel %vm940, 65537, 0
        %v973 = vsel %vm941, 65537, 0
        %v974 = vsel %vm942, 65537, 0
        %v975 = vsel %vm943, 65537, 0
        %v976 = vsel %vm944, 65537, 0
        %v977 = vsel %vm945, 65537, 0
        %v978 = vsel %vm946, 65537, 0
        %v979 = vsel %vm947, 65537, 0
        %v980 = vsel %vm948, 65537, 0
        %v981 = vsel %vm949, 65537, 0
        %v982 = vsel %vm950, 65537, 0
        %v983 = vsel %vm951, 65537, 0
        %v984 = vsel %vm952, 65537, 0
        %v985 = vsel %vm953, 65537, 0
        %v986 = vsel %vm954, 65537, 0
        %v987 = vsel %vm955, 65537, 0
        %v988 = vsel %vm956, 65537, 0
        %v989 = vsel %vm957, 65537, 0
        %v990 = vsel %vm958, 65537, 0
        %v991 = vsel %vm959, 65537, 0
        %v992 = vunpack.c.l.b16 %v960
        %v993 = vunpack.c.l.b16 %v961
        %v994 = vunpack.c.l.b16 %v962
        %v995 = vunpack.c.l.b16 %v963
        %v996 = vunpack.c.l.b16 %v964
        %v997 = vunpack.c.l.b16 %v965
        %v998 = vunpack.c.l.b16 %v966
        %v999 = vunpack.c.l.b16 %v967
        %v1000 = vunpack.c.l.b16 %v968
        %v1001 = vunpack.c.l.b16 %v969
        %v1002 = vunpack.c.l.b16 %v970
        %v1003 = vunpack.c.l.b16 %v971
        %v1004 = vunpack.c.l.b16 %v972
        %v1005 = vunpack.c.l.b16 %v973
        %v1006 = vunpack.c.l.b16 %v974
        %v1007 = vunpack.c.l.b16 %v975
        %v1008 = vunpack.c.l.b16 %v976
        %v1009 = vunpack.c.l.b16 %v977
        %v1010 = vunpack.c.l.b16 %v978
        %v1011 = vunpack.c.l.b16 %v979
        %v1012 = vunpack.c.l.b16 %v980
        %v1013 = vunpack.c.l.b16 %v981
        %v1014 = vunpack.c.l.b16 %v982
        %v1015 = vunpack.c.l.b16 %v983
        %v1016 = vunpack.c.l.b16 %v984
        %v1017 = vunpack.c.l.b16 %v985
        %v1018 = vunpack.c.l.b16 %v986
        %v1019 = vunpack.c.l.b16 %v987
        %v1020 = vunpack.c.l.b16 %v988
        %v1021 = vunpack.c.l.b16 %v989
        %v1022 = vunpack.c.l.b16 %v990
        %v1023 = vunpack.c.l.b16 %v991
        %v1024 = vpack.c.b16 %v993, %v992
        %v1025 = vpack.c.b16 %v995, %v994
        %v1026 = vpack.c.b16 %v997, %v996
        %v1027 = vpack.c.b16 %v999, %v998
        %v1028 = vpack.c.b16 %v1001, %v1000
        %v1029 = vpack.c.b16 %v1003, %v1002
        %v1030 = vpack.c.b16 %v1005, %v1004
        %v1031 = vpack.c.b16 %v1007, %v1006
        %v1032 = vpack.c.b16 %v1009, %v1008
        %v1033 = vpack.c.b16 %v1011, %v1010
        %v1034 = vpack.c.b16 %v1013, %v1012
        %v1035 = vpack.c.b16 %v1015, %v1014
        %v1036 = vpack.c.b16 %v1017, %v1016
        %v1037 = vpack.c.b16 %v1019, %v1018
        %v1038 = vpack.c.b16 %v1021, %v1020
        %v1039 = vpack.c.b16 %v1023, %v1022
        %vm1040 = vcmp.ne.s16.totalorder %v1024, 0
        %vm1041 = vcmp.ne.s16.totalorder %v1025, 0
        %vm1042 = vcmp.ne.s16.totalorder %v1026, 0
        %vm1043 = vcmp.ne.s16.totalorder %v1027, 0
        %vm1044 = vcmp.ne.s16.totalorder %v1028, 0
        %vm1045 = vcmp.ne.s16.totalorder %v1029, 0
        %vm1046 = vcmp.ne.s16.totalorder %v1030, 0
        %vm1047 = vcmp.ne.s16.totalorder %v1031, 0
        %vm1048 = vcmp.ne.s16.totalorder %v1032, 0
        %vm1049 = vcmp.ne.s16.totalorder %v1033, 0
        %vm1050 = vcmp.ne.s16.totalorder %v1034, 0
        %vm1051 = vcmp.ne.s16.totalorder %v1035, 0
        %vm1052 = vcmp.ne.s16.totalorder %v1036, 0
        %vm1053 = vcmp.ne.s16.totalorder %v1037, 0
        %vm1054 = vcmp.ne.s16.totalorder %v1038, 0
        %vm1055 = vcmp.ne.s16.totalorder %v1039, 0
        %v1056 = vsel %vm1040, %v896, 0
        %v1057 = vsel %vm1041, %v897, 0
        %v1058 = vsel %vm1042, %v898, 0
        %v1059 = vsel %vm1043, %v899, 0
        %v1060 = vsel %vm1044, %v900, 0
        %v1061 = vsel %vm1045, %v901, 0
        %v1062 = vsel %vm1046, %v902, 0
        %v1063 = vsel %vm1047, %v903, 0
        %v1064 = vsel %vm1048, %v904, 0
        %v1065 = vsel %vm1049, %v905, 0
        %v1066 = vsel %vm1050, %v906, 0
        %v1067 = vsel %vm1051, %v907, 0
        %v1068 = vsel %vm1052, %v908, 0
        %v1069 = vsel %vm1053, %v909, 0
        %v1070 = vsel %vm1054, %v910, 0
        %v1071 = vsel %vm1055, %v911, 0
        %vm1072 = vsmask.f32 256
        %v1074 = vshrl.u32 %v1056, 16
        %v1076 = vrot.slane %v1074, 7
        %v1077 = vshll.u32 %v1056, 16
        %v1079 = vor.u32 %v1076, %v1077
        %v1081 = vshrl.u32 %v1057, 16
        %v1083 = vrot.slane %v1081, 7
        %v1084 = vshll.u32 %v1057, 16
        %v1086 = vor.u32 %v1083, %v1084
        %v1087 = vsel %vm1072, %v1076, %v1086
        %v1089 = vshrl.u32 %v1058, 16
        %v1091 = vrot.slane %v1089, 7
        %v1092 = vshll.u32 %v1058, 16
        %v1094 = vor.u32 %v1091, %v1092
        %v1095 = vsel %vm1072, %v1083, %v1094
        %v1097 = vshrl.u32 %v1059, 16
        %v1099 = vrot.slane %v1097, 7
        %v1100 = vshll.u32 %v1059, 16
        %v1102 = vor.u32 %v1099, %v1100
        %v1103 = vsel %vm1072, %v1091, %v1102
        %v1105 = vshrl.u32 %v1060, 16
        %v1107 = vrot.slane %v1105, 7
        %v1108 = vshll.u32 %v1060, 16
        %v1110 = vor.u32 %v1107, %v1108
        %v1111 = vsel %vm1072, %v1099, %v1110
        %v1113 = vshrl.u32 %v1061, 16
        %v1115 = vrot.slane %v1113, 7
        %v1116 = vshll.u32 %v1061, 16
        %v1118 = vor.u32 %v1115, %v1116
        %v1119 = vsel %vm1072, %v1107, %v1118
        %v1121 = vshrl.u32 %v1062, 16
        %v1123 = vrot.slane %v1121, 7
        %v1124 = vshll.u32 %v1062, 16
        %v1126 = vor.u32 %v1123, %v1124
        %v1127 = vsel %vm1072, %v1115, %v1126
        %v1129 = vshrl.u32 %v1063, 16
        %v1131 = vrot.slane %v1129, 7
        %v1132 = vshll.u32 %v1063, 16
        %v1134 = vor.u32 %v1131, %v1132
        %v1135 = vsel %vm1072, %v1123, %v1134
        %v1137 = vshrl.u32 %v1064, 16
        %v1139 = vrot.slane %v1137, 7
        %v1140 = vshll.u32 %v1064, 16
        %v1142 = vor.u32 %v1139, %v1140
        %v1143 = vsel %vm1072, %v1131, %v1142
        %v1145 = vshrl.u32 %v1065, 16
        %v1147 = vrot.slane %v1145, 7
        %v1148 = vshll.u32 %v1065, 16
        %v1150 = vor.u32 %v1147, %v1148
        %v1151 = vsel %vm1072, %v1139, %v1150
        %v1153 = vshrl.u32 %v1066, 16
        %v1155 = vrot.slane %v1153, 7
        %v1156 = vshll.u32 %v1066, 16
        %v1158 = vor.u32 %v1155, %v1156
        %v1159 = vsel %vm1072, %v1147, %v1158
        %v1161 = vshrl.u32 %v1067, 16
        %v1163 = vrot.slane %v1161, 7
        %v1164 = vshll.u32 %v1067, 16
        %v1166 = vor.u32 %v1163, %v1164
        %v1167 = vsel %vm1072, %v1155, %v1166
        %v1169 = vshrl.u32 %v1068, 16
        %v1171 = vrot.slane %v1169, 7
        %v1172 = vshll.u32 %v1068, 16
        %v1174 = vor.u32 %v1171, %v1172
        %v1175 = vsel %vm1072, %v1163, %v1174
        %v1177 = vshrl.u32 %v1069, 16
        %v1179 = vrot.slane %v1177, 7
        %v1180 = vshll.u32 %v1069, 16
        %v1182 = vor.u32 %v1179, %v1180
        %v1183 = vsel %vm1072, %v1171, %v1182
        %v1185 = vshrl.u32 %v1070, 16
        %v1187 = vrot.slane %v1185, 7
        %v1188 = vshll.u32 %v1070, 16
        %v1190 = vor.u32 %v1187, %v1188
        %v1191 = vsel %vm1072, %v1179, %v1190
        %v1193 = vshrl.u32 %v1071, 16
        %v1195 = vrot.slane %v1193, 7
        %v1196 = vshll.u32 %v1071, 16
        %v1198 = vor.u32 %v1195, %v1196
        %v1199 = vsel %vm1072, %v1187, %v1198
        %vm1217 = vcmask 1047552
        %vm1218 = vsmask.f32 7938
        %vm1219 = vmand %vm1217, %vm1218
        %v1220 = vld [vmem:[#allocation2 + $0x18] sm:$0xff]
        %v1221 = vsel %vm1219, %v1079, %v1220
        %1222 = vst [vmem:[#allocation2 + $0x18] sm:$0xff] %v1221
        %1223 = vst [vmem:[#allocation2 + $0x30] sm:$0xff] %v1087
        %1224 = vst [vmem:[#allocation2 + $0x48] sm:$0xff] %v1095
        %1225 = vst [vmem:[#allocation2 + $0x60] sm:$0xff] %v1103
        %1226 = vst [vmem:[#allocation2 + $0x78] sm:$0xff] %v1111
        %1227 = vst [vmem:[#allocation2 + $0x90] sm:$0xff] %v1119
        %1228 = vst [vmem:[#allocation2 + $0xa8] sm:$0xff] %v1127
        %1229 = vst [vmem:[#allocation2 + $0xc0] sm:$0xff] %v1135
        %1230 = vst [vmem:[#allocation2 + $0xd8] sm:$0xff] %v1143
        %1231 = vst [vmem:[#allocation2 + $0xf0] sm:$0xff] %v1151
        %1232 = vst [vmem:[#allocation2 + $0x108] sm:$0xff] %v1159
        %1233 = vst [vmem:[#allocation2 + $0x120] sm:$0xff] %v1167
        %1234 = vst [vmem:[#allocation2 + $0x138] sm:$0xff] %v1175
        %1235 = vst [vmem:[#allocation2 + $0x150] sm:$0xff] %v1183
        %1236 = vst [vmem:[#allocation2 + $0x168] sm:$0xff] %v1191
        %1237 = vst [vmem:[#allocation2 + $0x180] sm:$0xff] %v1199
        %vm1238 = vcmask 1040384
        %vm1239 = vmand %vm1238, %vm1072
        %v1240 = vld [vmem:[#allocation2 + $0x198] sm:$0x1]
        %v1241 = vsel %vm1239, %v1195, %v1240
        %1242 = vst [vmem:[#allocation2 + $0x198] sm:$0x1] %v1241
        %vm1243 = vmpackc.low %vm832, %vm832
        %vm1244 = vmpackc.low %vm833, %vm833
        %vm1245 = vmpackc.low %vm834, %vm834
        %vm1246 = vmpackc.low %vm835, %vm835
        %vm1247 = vmpackc.low %vm836, %vm836
        %vm1248 = vmpackc.low %vm837, %vm837
        %vm1249 = vmpackc.low %vm838, %vm838
        %vm1250 = vmpackc.low %vm839, %vm839
        %vm1251 = vmpackc.low %vm840, %vm840
        %vm1252 = vmpackc.low %vm841, %vm841
        %vm1253 = vmpackc.low %vm842, %vm842
        %vm1254 = vmpackc.low %vm843, %vm843
        %vm1255 = vmpackc.low %vm844, %vm844
        %vm1256 = vmpackc.low %vm845, %vm845
        %vm1257 = vmpackc.low %vm846, %vm846
        %vm1258 = vmpackc.low %vm847, %vm847
        %vm1259 = vmpackc.low %vm848, %vm848
        %vm1260 = vmpackc.low %vm849, %vm849
        %vm1261 = vmpackc.low %vm850, %vm850
        %vm1262 = vmpackc.low %vm851, %vm851
        %vm1263 = vmpackc.low %vm852, %vm852
        %vm1264 = vmpackc.low %vm853, %vm853
        %vm1265 = vmpackc.low %vm854, %vm854
        %vm1266 = vmpackc.low %vm855, %vm855
        %vm1267 = vmpackc.low %vm856, %vm856
        %vm1268 = vmpackc.low %vm857, %vm857
        %vm1269 = vmpackc.low %vm858, %vm858
        %vm1270 = vmpackc.low %vm859, %vm859
        %vm1271 = vmpackc.low %vm860, %vm860
        %vm1272 = vmpackc.low %vm861, %vm861
        %vm1273 = vmpackc.low %vm862, %vm862
        %vm1274 = vmpackc.low %vm863, %vm863
        %v1275 = vsel %vm1243, 65537, 0
        %v1276 = vsel %vm1244, 65537, 0
        %v1277 = vsel %vm1245, 65537, 0
        %v1278 = vsel %vm1246, 65537, 0
        %v1279 = vsel %vm1247, 65537, 0
        %v1280 = vsel %vm1248, 65537, 0
        %v1281 = vsel %vm1249, 65537, 0
        %v1282 = vsel %vm1250, 65537, 0
        %v1283 = vsel %vm1251, 65537, 0
        %v1284 = vsel %vm1252, 65537, 0
        %v1285 = vsel %vm1253, 65537, 0
        %v1286 = vsel %vm1254, 65537, 0
        %v1287 = vsel %vm1255, 65537, 0
        %v1288 = vsel %vm1256, 65537, 0
        %v1289 = vsel %vm1257, 65537, 0
        %v1290 = vsel %vm1258, 65537, 0
        %v1291 = vsel %vm1259, 65537, 0
        %v1292 = vsel %vm1260, 65537, 0
        %v1293 = vsel %vm1261, 65537, 0
        %v1294 = vsel %vm1262, 65537, 0
        %v1295 = vsel %vm1263, 65537, 0
        %v1296 = vsel %vm1264, 65537, 0
        %v1297 = vsel %vm1265, 65537, 0
        %v1298 = vsel %vm1266, 65537, 0
        %v1299 = vsel %vm1267, 65537, 0
        %v1300 = vsel %vm1268, 65537, 0
        %v1301 = vsel %vm1269, 65537, 0
        %v1302 = vsel %vm1270, 65537, 0
        %v1303 = vsel %vm1271, 65537, 0
        %v1304 = vsel %vm1272, 65537, 0
        %v1305 = vsel %vm1273, 65537, 0
        %v1306 = vsel %vm1274, 65537, 0
        %v1307 = vunpack.c.l.b16 %v1275
        %v1308 = vunpack.c.l.b16 %v1276
        %v1309 = vunpack.c.l.b16 %v1277
        %v1310 = vunpack.c.l.b16 %v1278
        %v1311 = vunpack.c.l.b16 %v1279
        %v1312 = vunpack.c.l.b16 %v1280
        %v1313 = vunpack.c.l.b16 %v1281
        %v1314 = vunpack.c.l.b16 %v1282
        %v1315 = vunpack.c.l.b16 %v1283
        %v1316 = vunpack.c.l.b16 %v1284
        %v1317 = vunpack.c.l.b16 %v1285
        %v1318 = vunpack.c.l.b16 %v1286
        %v1319 = vunpack.c.l.b16 %v1287
        %v1320 = vunpack.c.l.b16 %v1288
        %v1321 = vunpack.c.l.b16 %v1289
        %v1322 = vunpack.c.l.b16 %v1290
        %v1323 = vunpack.c.l.b16 %v1291
        %v1324 = vunpack.c.l.b16 %v1292
        %v1325 = vunpack.c.l.b16 %v1293
        %v1326 = vunpack.c.l.b16 %v1294
        %v1327 = vunpack.c.l.b16 %v1295
        %v1328 = vunpack.c.l.b16 %v1296
        %v1329 = vunpack.c.l.b16 %v1297
        %v1330 = vunpack.c.l.b16 %v1298
        %v1331 = vunpack.c.l.b16 %v1299
        %v1332 = vunpack.c.l.b16 %v1300
        %v1333 = vunpack.c.l.b16 %v1301
        %v1334 = vunpack.c.l.b16 %v1302
        %v1335 = vunpack.c.l.b16 %v1303
        %v1336 = vunpack.c.l.b16 %v1304
        %v1337 = vunpack.c.l.b16 %v1305
        %v1338 = vunpack.c.l.b16 %v1306
        %v1339 = vpack.c.b16 %v1308, %v1307
        %v1340 = vpack.c.b16 %v1310, %v1309
        %v1341 = vpack.c.b16 %v1312, %v1311
        %v1342 = vpack.c.b16 %v1314, %v1313
        %v1343 = vpack.c.b16 %v1316, %v1315
        %v1344 = vpack.c.b16 %v1318, %v1317
        %v1345 = vpack.c.b16 %v1320, %v1319
        %v1346 = vpack.c.b16 %v1322, %v1321
        %v1347 = vpack.c.b16 %v1324, %v1323
        %v1348 = vpack.c.b16 %v1326, %v1325
        %v1349 = vpack.c.b16 %v1328, %v1327
        %v1350 = vpack.c.b16 %v1330, %v1329
        %v1351 = vpack.c.b16 %v1332, %v1331
        %v1352 = vpack.c.b16 %v1334, %v1333
        %v1353 = vpack.c.b16 %v1336, %v1335
        %v1354 = vpack.c.b16 %v1338, %v1337
        %vm1355 = vcmp.ne.s16.totalorder %v1339, 0
        %vm1356 = vcmp.ne.s16.totalorder %v1340, 0
        %vm1357 = vcmp.ne.s16.totalorder %v1341, 0
        %vm1358 = vcmp.ne.s16.totalorder %v1342, 0
        %vm1359 = vcmp.ne.s16.totalorder %v1343, 0
        %vm1360 = vcmp.ne.s16.totalorder %v1344, 0
        %vm1361 = vcmp.ne.s16.totalorder %v1345, 0
        %vm1362 = vcmp.ne.s16.totalorder %v1346, 0
        %vm1363 = vcmp.ne.s16.totalorder %v1347, 0
        %vm1364 = vcmp.ne.s16.totalorder %v1348, 0
        %vm1365 = vcmp.ne.s16.totalorder %v1349, 0
        %vm1366 = vcmp.ne.s16.totalorder %v1350, 0
        %vm1367 = vcmp.ne.s16.totalorder %v1351, 0
        %vm1368 = vcmp.ne.s16.totalorder %v1352, 0
        %vm1369 = vcmp.ne.s16.totalorder %v1353, 0
        %vm1370 = vcmp.ne.s16.totalorder %v1354, 0
        %v1371 = vsel %vm1355, %v896, 0
        %v1372 = vsel %vm1356, %v897, 0
        %v1373 = vsel %vm1357, %v898, 0
        %v1374 = vsel %vm1358, %v899, 0
        %v1375 = vsel %vm1359, %v900, 0
        %v1376 = vsel %vm1360, %v901, 0
        %v1377 = vsel %vm1361, %v902, 0
        %v1378 = vsel %vm1362, %v903, 0
        %v1379 = vsel %vm1363, %v904, 0
        %v1380 = vsel %vm1364, %v905, 0
        %v1381 = vsel %vm1365, %v906, 0
        %v1382 = vsel %vm1366, %v907, 0
        %v1383 = vsel %vm1367, %v908, 0
        %v1384 = vsel %vm1368, %v909, 0
        %v1385 = vsel %vm1369, %v910, 0
        %v1386 = vsel %vm1370, %v911, 0
        %vm1387 = vsmask.f32 7424
        %v1389 = vshll.u32 %v1371, 16
        %v1391 = vrot.slane %v1389, 1
        %v1392 = vshrl.u32 %v1371, 16
        %v1394 = vor.u32 %v1392, %v1391
        %v1396 = vshll.u32 %v1372, 16
        %v1398 = vrot.slane %v1396, 1
        %v1399 = vsel %vm1387, %v1394, %v1398
        %v1400 = vshrl.u32 %v1372, 16
        %v1402 = vor.u32 %v1400, %v1398
        %v1404 = vshll.u32 %v1373, 16
        %v1406 = vrot.slane %v1404, 1
        %v1407 = vsel %vm1387, %v1402, %v1406
        %v1408 = vshrl.u32 %v1373, 16
        %v1410 = vor.u32 %v1408, %v1406
        %v1412 = vshll.u32 %v1374, 16
        %v1414 = vrot.slane %v1412, 1
        %v1415 = vsel %vm1387, %v1410, %v1414
        %v1416 = vshrl.u32 %v1374, 16
        %v1418 = vor.u32 %v1416, %v1414
        %v1420 = vshll.u32 %v1375, 16
        %v1422 = vrot.slane %v1420, 1
        %v1423 = vsel %vm1387, %v1418, %v1422
        %v1424 = vshrl.u32 %v1375, 16
        %v1426 = vor.u32 %v1424, %v1422
        %v1428 = vshll.u32 %v1376, 16
        %v1430 = vrot.slane %v1428, 1
        %v1431 = vsel %vm1387, %v1426, %v1430
        %v1432 = vshrl.u32 %v1376, 16
        %v1434 = vor.u32 %v1432, %v1430
        %v1436 = vshll.u32 %v1377, 16
        %v1438 = vrot.slane %v1436, 1
        %v1439 = vsel %vm1387, %v1434, %v1438
        %v1440 = vshrl.u32 %v1377, 16
        %v1442 = vor.u32 %v1440, %v1438
        %v1444 = vshll.u32 %v1378, 16
        %v1446 = vrot.slane %v1444, 1
        %v1447 = vsel %vm1387, %v1442, %v1446
        %v1448 = vshrl.u32 %v1378, 16
        %v1450 = vor.u32 %v1448, %v1446
        %v1452 = vshll.u32 %v1379, 16
        %v1454 = vrot.slane %v1452, 1
        %v1455 = vsel %vm1387, %v1450, %v1454
        %v1456 = vshrl.u32 %v1379, 16
        %v1458 = vor.u32 %v1456, %v1454
        %v1460 = vshll.u32 %v1380, 16
        %v1462 = vrot.slane %v1460, 1
        %v1463 = vsel %vm1387, %v1458, %v1462
        %v1464 = vshrl.u32 %v1380, 16
        %v1466 = vor.u32 %v1464, %v1462
        %v1468 = vshll.u32 %v1381, 16
        %v1470 = vrot.slane %v1468, 1
        %v1471 = vsel %vm1387, %v1466, %v1470
        %v1472 = vshrl.u32 %v1381, 16
        %v1474 = vor.u32 %v1472, %v1470
        %v1476 = vshll.u32 %v1382, 16
        %v1478 = vrot.slane %v1476, 1
        %v1479 = vsel %vm1387, %v1474, %v1478
        %v1480 = vshrl.u32 %v1382, 16
        %v1482 = vor.u32 %v1480, %v1478
        %v1484 = vshll.u32 %v1383, 16
        %v1486 = vrot.slane %v1484, 1
        %v1487 = vsel %vm1387, %v1482, %v1486
        %v1488 = vshrl.u32 %v1383, 16
        %v1490 = vor.u32 %v1488, %v1486
        %v1492 = vshll.u32 %v1384, 16
        %v1494 = vrot.slane %v1492, 1
        %v1495 = vsel %vm1387, %v1490, %v1494
        %v1496 = vshrl.u32 %v1384, 16
        %v1498 = vor.u32 %v1496, %v1494
        %v1500 = vshll.u32 %v1385, 16
        %v1502 = vrot.slane %v1500, 1
        %v1503 = vsel %vm1387, %v1498, %v1502
        %v1504 = vshrl.u32 %v1385, 16
        %v1506 = vor.u32 %v1504, %v1502
        %v1508 = vshll.u32 %v1386, 16
        %v1510 = vrot.slane %v1508, 1
        %v1511 = vsel %vm1387, %v1506, %v1510
        %v1512 = vshrl.u32 %v1386, 16
        %v1514 = vor.u32 %v1512, %v1510
        %vm1532 = vcmask 1047559
        %vm1533 = vsmask.f32 7966
        %vm1534 = vmand %vm1532, %vm1533
        %v1535 = vld [vmem:[#allocation2 + $0x10] sm:$0x80]
        %v1536 = vsel %vm1534, %v1391, %v1535
        %1537 = vst [vmem:[#allocation2 + $0x10] sm:$0x80] %v1536
        %1538 = vst [vmem:[#allocation2 + $0x28] sm:$0xff] %v1399
        %1539 = vst [vmem:[#allocation2 + $0x40] sm:$0xff] %v1407
        %1540 = vst [vmem:[#allocation2 + $0x58] sm:$0xff] %v1415
        %1541 = vst [vmem:[#allocation2 + $0x70] sm:$0xff] %v1423
        %1542 = vst [vmem:[#allocation2 + $0x88] sm:$0xff] %v1431
        %1543 = vst [vmem:[#allocation2 + $0xa0] sm:$0xff] %v1439
        %1544 = vst [vmem:[#allocation2 + $0xb8] sm:$0xff] %v1447
        %1545 = vst [vmem:[#allocation2 + $0xd0] sm:$0xff] %v1455
        %1546 = vst [vmem:[#allocation2 + $0xe8] sm:$0xff] %v1463
        %1547 = vst [vmem:[#allocation2 + $0x100] sm:$0xff] %v1471
        %1548 = vst [vmem:[#allocation2 + $0x118] sm:$0xff] %v1479
        %1549 = vst [vmem:[#allocation2 + $0x130] sm:$0xff] %v1487
        %1550 = vst [vmem:[#allocation2 + $0x148] sm:$0xff] %v1495
        %1551 = vst [vmem:[#allocation2 + $0x160] sm:$0xff] %v1503
        %1552 = vst [vmem:[#allocation2 + $0x178] sm:$0xff] %v1511
        %vm1553 = vmand %vm1217, %vm1387
        %v1554 = vld [vmem:[#allocation2 + $0x190] sm:$0xff]
        %v1555 = vsel %vm1553, %v1514, %v1554
        %1556 = vst [vmem:[#allocation2 + $0x190] sm:$0xff] %v1555
        %v1557 = vld [vmem:[#allocation2] sm:$0xff]
        %v1558 = vld [vmem:[#allocation2 + $0x8] sm:$0xff]
        %v1559 = vld [vmem:[#allocation2 + $0x10] sm:$0xff]
        %v1560 = vld [vmem:[#allocation2 + $0x18] sm:$0xff]
        %v1561 = vld [vmem:[#allocation2 + $0x20] sm:$0xff]
        %v1562 = vld [vmem:[#allocation2 + $0x28] sm:$0xff]
        %v1563 = vld [vmem:[#allocation2 + $0x30] sm:$0xff]
        %v1564 = vld [vmem:[#allocation2 + $0x38] sm:$0xff]
        %v1565 = vld [vmem:[#allocation2 + $0x40] sm:$0xff]
        %v1566 = vld [vmem:[#allocation2 + $0x48] sm:$0xff]
        %v1567 = vld [vmem:[#allocation2 + $0x50] sm:$0xff]
        %v1568 = vld [vmem:[#allocation2 + $0x58] sm:$0xff]
        %v1569 = vld [vmem:[#allocation2 + $0x60] sm:$0xff]
        %v1570 = vld [vmem:[#allocation2 + $0x68] sm:$0xff]
        %v1571 = vld [vmem:[#allocation2 + $0x70] sm:$0xff]
        %v1572 = vld [vmem:[#allocation2 + $0x78] sm:$0xff]
        %v1573 = vld [vmem:[#allocation2 + $0x80] sm:$0xff]
        %v1574 = vld [vmem:[#allocation2 + $0x88] sm:$0xff]
        %v1575 = vld [vmem:[#allocation2 + $0x90] sm:$0xff]
        %v1576 = vld [vmem:[#allocation2 + $0x98] sm:$0xff]
        %v1577 = vld [vmem:[#allocation2 + $0xa0] sm:$0xff]
        %v1578 = vld [vmem:[#allocation2 + $0xa8] sm:$0xff]
        %v1579 = vld [vmem:[#allocation2 + $0xb0] sm:$0xff]
        %v1580 = vld [vmem:[#allocation2 + $0xb8] sm:$0xff]
        %v1581 = vld [vmem:[#allocation2 + $0xc0] sm:$0xff]
        %v1582 = vld [vmem:[#allocation2 + $0xc8] sm:$0xff]
        %v1583 = vld [vmem:[#allocation2 + $0xd0] sm:$0xff]
        %v1584 = vld [vmem:[#allocation2 + $0xd8] sm:$0xff]
        %v1585 = vld [vmem:[#allocation2 + $0xe0] sm:$0xff]
        %v1586 = vld [vmem:[#allocation2 + $0xe8] sm:$0xff]
        %v1587 = vld [vmem:[#allocation2 + $0xf0] sm:$0xff]
        %v1588 = vld [vmem:[#allocation2 + $0xf8] sm:$0xff]
        %v1589 = vld [vmem:[#allocation2 + $0x100] sm:$0xff]
        %v1590 = vld [vmem:[#allocation2 + $0x108] sm:$0xff]
        %v1591 = vld [vmem:[#allocation2 + $0x110] sm:$0xff]
        %v1592 = vld [vmem:[#allocation2 + $0x118] sm:$0xff]
        %v1593 = vld [vmem:[#allocation2 + $0x120] sm:$0xff]
        %v1594 = vld [vmem:[#allocation2 + $0x128] sm:$0xff]
        %v1595 = vld [vmem:[#allocation2 + $0x130] sm:$0xff]
        %v1596 = vld [vmem:[#allocation2 + $0x138] sm:$0xff]
        %v1597 = vld [vmem:[#allocation2 + $0x140] sm:$0xff]
        %v1598 = vld [vmem:[#allocation2 + $0x148] sm:$0xff]
        %v1599 = vld [vmem:[#allocation2 + $0x150] sm:$0xff]
        %v1600 = vld [vmem:[#allocation2 + $0x158] sm:$0xff]
        %v1601 = vld [vmem:[#allocation2 + $0x160] sm:$0xff]
        %v1602 = vld [vmem:[#allocation2 + $0x168] sm:$0xff]
        %v1603 = vld [vmem:[#allocation2 + $0x170] sm:$0xff]
        %v1604 = vld [vmem:[#allocation2 + $0x178] sm:$0xff]
        %v1605 = vld [vmem:[#allocation6] sm:$0xf]
        %v1606 = vld [vmem:[#allocation6 + $0x4] sm:$0xf]
        %v1607 = vld [vmem:[#allocation6 + $0x8] sm:$0xf]
        %v1608 = vld [vmem:[#allocation6 + $0xc] sm:$0xf]
        %v1609 = vld [vmem:[#allocation6 + $0x10] sm:$0xf]
        %v1610 = vld [vmem:[#allocation6 + $0x14] sm:$0xf]
        %v1611 = vld [vmem:[#allocation6 + $0x18] sm:$0xf]
        %v1612 = vld [vmem:[#allocation6 + $0x1c] sm:$0xf]
        %v1613 = vld [vmem:[#allocation6 + $0x20] sm:$0xf]
        %v1614 = vld [vmem:[#allocation6 + $0x24] sm:$0xf]
        %v1615 = vld [vmem:[#allocation6 + $0x28] sm:$0xf]
        %v1616 = vld [vmem:[#allocation6 + $0x2c] sm:$0xf]
        %v1617 = vld [vmem:[#allocation6 + $0x30] sm:$0xf]
        %v1618 = vld [vmem:[#allocation6 + $0x34] sm:$0xf]
        %v1619 = vld [vmem:[#allocation6 + $0x38] sm:$0xf]
        %v1620 = vld [vmem:[#allocation6 + $0x3c] sm:$0xf]
        %v1621 = vld [vmem:[#allocation6 + $0x40] sm:$0xf]
        %v1622 = vld [vmem:[#allocation6 + $0x44] sm:$0xf]
        %v1623 = vld [vmem:[#allocation6 + $0x48] sm:$0xf]
        %v1624 = vld [vmem:[#allocation6 + $0x4c] sm:$0xf]
        %v1625 = vld [vmem:[#allocation6 + $0x50] sm:$0xf]
        %v1626 = vld [vmem:[#allocation6 + $0x54] sm:$0xf]
        %v1627 = vld [vmem:[#allocation6 + $0x58] sm:$0xf]
        %v1628 = vld [vmem:[#allocation6 + $0x5c] sm:$0xf]
        %v1629 = vld [vmem:[#allocation6 + $0x60] sm:$0xf]
        %v1630 = vld [vmem:[#allocation6 + $0x64] sm:$0xf]
        %v1631 = vld [vmem:[#allocation6 + $0x68] sm:$0xf]
        %v1632 = vld [vmem:[#allocation6 + $0x6c] sm:$0xf]
        %v1633 = vld [vmem:[#allocation6 + $0x70] sm:$0xf]
        %v1634 = vld [vmem:[#allocation6 + $0x74] sm:$0xf]
        %v1635 = vld [vmem:[#allocation6 + $0x78] sm:$0xf]
        %v1636 = vld [vmem:[#allocation6 + $0x7c] sm:$0xf]
        %v1637 = vld [vmem:[#allocation6 + $0x80] sm:$0xf]
        %v1638 = vld [vmem:[#allocation6 + $0x84] sm:$0xf]
        %v1639 = vld [vmem:[#allocation6 + $0x88] sm:$0xf]
        %v1640 = vld [vmem:[#allocation6 + $0x8c] sm:$0xf]
        %v1641 = vld [vmem:[#allocation6 + $0x90] sm:$0xf]
        %v1642 = vld [vmem:[#allocation6 + $0x94] sm:$0xf]
        %v1643 = vld [vmem:[#allocation6 + $0x98] sm:$0xf]
        %v1644 = vld [vmem:[#allocation6 + $0x9c] sm:$0xf]
        %v1645 = vld [vmem:[#allocation6 + $0xa0] sm:$0xf]
        %v1646 = vld [vmem:[#allocation6 + $0xa4] sm:$0xf]
        %v1647 = vld [vmem:[#allocation6 + $0xa8] sm:$0xf]
        %v1648 = vld [vmem:[#allocation6 + $0xac] sm:$0xf]
        %v1649 = vld [vmem:[#allocation6 + $0xb0] sm:$0xf]
        %v1650 = vld [vmem:[#allocation6 + $0xb4] sm:$0xf]
        %v1651 = vld [vmem:[#allocation6 + $0xb8] sm:$0xf]
        %v1652 = vld [vmem:[#allocation6 + $0xbc] sm:$0xf]
        %v1653 = vld [vmem:[#allocation2 + $0x180] sm:$0xff]
        %v1654 = vld [vmem:[#allocation2 + $0x188] sm:$0xff]
        %v1655 = vld [vmem:[#allocation2 + $0x190] sm:$0xff]
        %s1656 = scalar_lea.vmem [#allocation6], 192
        %v1657 = vld [vmem:[%s1656] sm:$0xf]
        %v1658 = vld [vmem:[%s1656 + $0x4] sm:$0xf]
        %v1659 = vld [vmem:[%s1656 + $0x8] sm:$0xf]
        %v1660 = vld [vmem:[%s1656 + $0xc] sm:$0xf]
        %v1661 = vld [vmem:[%s1656 + $0x10] sm:$0xf]
        %v1662 = vld [vmem:[%s1656 + $0x14] sm:$0xf]
        %v1663 = vld [vmem:[%s1656 + $0x18] sm:$0xf]
        %v1664 = vld [vmem:[%s1656 + $0x1c] sm:$0xf]
        %v1665 = vld [vmem:[%s1656 + $0x20] sm:$0xf]
        %v1666 = vld [vmem:[%s1656 + $0x24] sm:$0xf]
        %v1667 = vld [vmem:[%s1656 + $0x28] sm:$0xf]
        %v1668 = vld [vmem:[%s1656 + $0x2c] sm:$0xf]
        %v1669 = vld [vmem:[%s1656 + $0x30] sm:$0xf]
        %v1670 = vld [vmem:[%s1656 + $0x34] sm:$0xf]
        %v1671 = vld [vmem:[%s1656 + $0x38] sm:$0xf]
        %v1672 = vld [vmem:[%s1656 + $0x3c] sm:$0xf]
        %v1673 = vld [vmem:[%s1656 + $0x40] sm:$0xf]
        %v1674 = vld [vmem:[%s1656 + $0x44] sm:$0xf]
        %v1675 = vld [vmem:[%s1656 + $0x48] sm:$0xf]
        %v1676 = vld [vmem:[%s1656 + $0x4c] sm:$0xf]
        %v1677 = vld [vmem:[%s1656 + $0x50] sm:$0xf]
        %v1678 = vld [vmem:[%s1656 + $0x54] sm:$0xf]
        %v1679 = vld [vmem:[%s1656 + $0x58] sm:$0xf]
        %v1680 = vld [vmem:[%s1656 + $0x5c] sm:$0xf]
        %v1681 = vld [vmem:[%s1656 + $0x60] sm:$0xf]
        %v1682 = vld [vmem:[%s1656 + $0x64] sm:$0xf]
        %v1683 = vld [vmem:[%s1656 + $0x68] sm:$0xf]
        %v1684 = vld [vmem:[%s1656 + $0x6c] sm:$0xf]
        %v1685 = vld [vmem:[%s1656 + $0x70] sm:$0xf]
        %v1686 = vld [vmem:[%s1656 + $0x74] sm:$0xf]
        %v1687 = vld [vmem:[%s1656 + $0x78] sm:$0xf]
        %v1688 = vld [vmem:[%s1656 + $0x7c] sm:$0xf]
        %v1689 = vld [vmem:[%s1656 + $0x80] sm:$0xf]
        %v1690 = vld [vmem:[%s1656 + $0x84] sm:$0xf]
        %v1691 = vld [vmem:[%s1656 + $0x88] sm:$0xf]
        %v1692 = vld [vmem:[%s1656 + $0x8c] sm:$0xf]
        %v1693 = vld [vmem:[%s1656 + $0x90] sm:$0xf]
        %v1694 = vld [vmem:[%s1656 + $0x94] sm:$0xf]
        %v1695 = vld [vmem:[%s1656 + $0x98] sm:$0xf]
        %v1696 = vld [vmem:[%s1656 + $0x9c] sm:$0xf]
        %v1697 = vld [vmem:[%s1656 + $0xa0] sm:$0xf]
        %v1698 = vld [vmem:[%s1656 + $0xa4] sm:$0xf]
        %v1699 = vld [vmem:[%s1656 + $0xa8] sm:$0xf]
        %v1700 = vld [vmem:[%s1656 + $0xac] sm:$0xf]
        %v1701 = vld [vmem:[%s1656 + $0xb0] sm:$0xf]
        %v1702 = vld [vmem:[%s1656 + $0xb4] sm:$0xf]
        %v1703 = vld [vmem:[%s1656 + $0xb8] sm:$0xf]
        %v1704 = vld [vmem:[%s1656 + $0xbc] sm:$0xf]
        %v1753 = vunpack.c.l.b16 %v1657
        %v1754 = vunpack.c.l.b16 %v1658
        %v1755 = vunpack.c.l.b16 %v1659
        %v1756 = vunpack.c.l.b16 %v1660
        %v1757 = vunpack.c.l.b16 %v1661
        %v1758 = vunpack.c.l.b16 %v1662
        %v1759 = vunpack.c.l.b16 %v1663
        %v1760 = vunpack.c.l.b16 %v1664
        %v1761 = vunpack.c.l.b16 %v1665
        %v1762 = vunpack.c.l.b16 %v1666
        %v1763 = vunpack.c.l.b16 %v1667
        %v1764 = vunpack.c.l.b16 %v1668
        %v1765 = vunpack.c.l.b16 %v1669
        %v1766 = vunpack.c.l.b16 %v1670
        %v1767 = vunpack.c.l.b16 %v1671
        %v1768 = vunpack.c.l.b16 %v1672
        %v1769 = vunpack.c.l.b16 %v1673
        %v1770 = vunpack.c.l.b16 %v1674
        %v1771 = vunpack.c.l.b16 %v1675
        %v1772 = vunpack.c.l.b16 %v1676
        %v1773 = vunpack.c.l.b16 %v1677
        %v1774 = vunpack.c.l.b16 %v1678
        %v1775 = vunpack.c.l.b16 %v1679
        %v1776 = vunpack.c.l.b16 %v1680
        %v1777 = vunpack.c.l.b16 %v1681
        %v1778 = vunpack.c.l.b16 %v1682
        %v1779 = vunpack.c.l.b16 %v1683
        %v1780 = vunpack.c.l.b16 %v1684
        %v1781 = vunpack.c.l.b16 %v1685
        %v1782 = vunpack.c.l.b16 %v1686
        %v1783 = vunpack.c.l.b16 %v1687
        %v1784 = vunpack.c.l.b16 %v1688
        %v1785 = vunpack.c.l.b16 %v1689
        %v1786 = vunpack.c.l.b16 %v1690
        %v1787 = vunpack.c.l.b16 %v1691
        %v1788 = vunpack.c.l.b16 %v1692
        %v1789 = vunpack.c.l.b16 %v1693
        %v1790 = vunpack.c.l.b16 %v1694
        %v1791 = vunpack.c.l.b16 %v1695
        %v1792 = vunpack.c.l.b16 %v1696
        %v1793 = vunpack.c.l.b16 %v1697
        %v1794 = vunpack.c.l.b16 %v1698
        %v1795 = vunpack.c.l.b16 %v1699
        %v1796 = vunpack.c.l.b16 %v1700
        %v1797 = vunpack.c.l.b16 %v1701
        %v1798 = vunpack.c.l.b16 %v1702
        %v1799 = vunpack.c.l.b16 %v1703
        %v1800 = vunpack.c.l.b16 %v1704
        %v1801 = vpack.c.b16 %v1754, %v1753
        %v1802 = vpack.c.b16 %v1756, %v1755
        %v1803 = vpack.c.b16 %v1758, %v1757
        %v1804 = vpack.c.b16 %v1760, %v1759
        %v1805 = vpack.c.b16 %v1762, %v1761
        %v1806 = vpack.c.b16 %v1764, %v1763
        %v1807 = vpack.c.b16 %v1766, %v1765
        %v1808 = vpack.c.b16 %v1768, %v1767
        %v1809 = vpack.c.b16 %v1770, %v1769
        %v1810 = vpack.c.b16 %v1772, %v1771
        %v1811 = vpack.c.b16 %v1774, %v1773
        %v1812 = vpack.c.b16 %v1776, %v1775
        %v1813 = vpack.c.b16 %v1778, %v1777
        %v1814 = vpack.c.b16 %v1780, %v1779
        %v1815 = vpack.c.b16 %v1782, %v1781
        %v1816 = vpack.c.b16 %v1784, %v1783
        %v1817 = vpack.c.b16 %v1786, %v1785
        %v1818 = vpack.c.b16 %v1788, %v1787
        %v1819 = vpack.c.b16 %v1790, %v1789
        %v1820 = vpack.c.b16 %v1792, %v1791
        %v1821 = vpack.c.b16 %v1794, %v1793
        %v1822 = vpack.c.b16 %v1796, %v1795
        %v1823 = vpack.c.b16 %v1798, %v1797
        %v1824 = vpack.c.b16 %v1800, %v1799
        %1849 = vmatprep.subr.bf16.mxu0 0
        %1850 = vmatpush1.bf16.msra.mxu0 %v1801
        %1851 = vmatprep.subr.bf16.mxu0 0
        %1852 = vmatpush1.bf16.msra.mxu0 %v1802
        %1853 = vmatprep.subr.bf16.mxu0 0
        %1854 = vmatpush1.bf16.msra.mxu0 %v1803
        %1855 = vmatprep.subr.bf16.mxu0 0
        %1856 = vmatpush1.bf16.msra.mxu0 %v1804
        %1857 = vmatprep.subr.bf16.mxu0 0
        %1858 = vmatpush1.bf16.msra.mxu0 %v1805
        %1859 = vmatprep.subr.bf16.mxu0 0
        %1860 = vmatpush1.bf16.msra.mxu0 %v1806
        %1861 = vmatprep.subr.bf16.mxu0 0
        %1862 = vmatpush1.bf16.msra.mxu0 %v1807
        %1863 = vmatprep.subr.bf16.mxu0 0
        %1864 = vmatpush1.bf16.msra.mxu0 %v1808
        %1865 = vmatprep.subr.bf16.mxu0 0
        %1866 = vmatpush1.bf16.msra.mxu0 %v1809
        %1867 = vmatprep.subr.bf16.mxu0 0
        %1868 = vmatpush1.bf16.msra.mxu0 %v1810
        %1869 = vmatprep.subr.bf16.mxu0 0
        %1870 = vmatpush1.bf16.msra.mxu0 %v1811
        %1871 = vmatprep.subr.bf16.mxu0 0
        %1872 = vmatpush1.bf16.msra.mxu0 %v1812
        %1873 = vmatprep.subr.bf16.mxu0 0
        %1874 = vmatpush1.bf16.msra.mxu0 %v1813
        %1875 = vmatprep.subr.bf16.mxu0 0
        %1876 = vmatpush1.bf16.msra.mxu0 %v1814
        %1877 = vmatprep.subr.bf16.mxu0 0
        %1878 = vmatpush1.bf16.msra.mxu0 %v1815
        %1879 = vmatprep.subr.bf16.mxu0 0
        %1880 = vmatpush1.bf16.msra.mxu0 %v1816
        %1881 = vmatprep.mubr.bf16.mxu0 %v1561
        %1882 = vmatmul.mubr.bf16.gmra.mrb[0].mxu0 %v1560
        %v1883 = vpop.f32.mrb[0].mxu0
        %v1884 = vadd.f32 0.0, %v1883
        %v1885 = vpop.f32.mrb[0].mxu0
        %v1886 = vpop.f32.mrb[0].mxu0
        %v1887 = vadd.f32 0.0, %v1886
        %v1888 = vpop.f32.mrb[0].mxu0
        %1889 = vmatprep.mubr.bf16.mxu0 %v1564
        %1890 = vmatmul.mubr.bf16.gmra.mrb[0].mxu0 %v1563
        %v1891 = vpop.f32.mrb[0].mxu0
        %v1892 = vadd.f32 0.0, %v1891
        %v1893 = vpop.f32.mrb[0].mxu0
        %v1894 = vpop.f32.mrb[0].mxu0
        %v1895 = vadd.f32 0.0, %v1894
        %v1896 = vpop.f32.mrb[0].mxu0
        %1897 = vmatprep.mubr.bf16.mxu0 %v1567
        %1898 = vmatmul.mubr.bf16.gmra.mrb[0].mxu0 %v1566
        %v1899 = vpop.f32.mrb[0].mxu0
        %v1900 = vadd.f32 0.0, %v1899
        %v1901 = vpop.f32.mrb[0].mxu0
        %v1902 = vpop.f32.mrb[0].mxu0
        %v1903 = vadd.f32 0.0, %v1902
        %v1904 = vpop.f32.mrb[0].mxu0
        %1905 = vmatprep.mubr.bf16.mxu0 %v1570
        %1906 = vmatmul.mubr.bf16.gmra.mrb[0].mxu0 %v1569
        %v1907 = vpop.f32.mrb[0].mxu0
        %v1908 = vadd.f32 0.0, %v1907
        %v1909 = vpop.f32.mrb[0].mxu0
        %v1910 = vpop.f32.mrb[0].mxu0
        %v1911 = vadd.f32 0.0, %v1910
        %v1912 = vpop.f32.mrb[0].mxu0
        %1913 = vmatprep.mubr.bf16.mxu0 %v1573
        %1914 = vmatmul.mubr.bf16.gmra.mrb[0].mxu0 %v1572
        %v1915 = vpop.f32.mrb[0].mxu0
        %v1916 = vadd.f32 0.0, %v1915
        %v1917 = vpop.f32.mrb[0].mxu0
        %v1918 = vpop.f32.mrb[0].mxu0
        %v1919 = vadd.f32 0.0, %v1918
        %v1920 = vpop.f32.mrb[0].mxu0
        %1921 = vmatprep.mubr.bf16.mxu0 %v1576
        %1922 = vmatmul.mubr.bf16.gmra.mrb[0].mxu0 %v1575
        %v1923 = vpop.f32.mrb[0].mxu0
        %v1924 = vadd.f32 0.0, %v1923
        %v1925 = vpop.f32.mrb[0].mxu0
        %v1926 = vpop.f32.mrb[0].mxu0
        %v1927 = vadd.f32 0.0, %v1926
        %v1928 = vpop.f32.mrb[0].mxu0
        %1929 = vmatprep.mubr.bf16.mxu0 %v1579
        %1930 = vmatmul.mubr.bf16.gmra.mrb[0].mxu0 %v1578
        %v1931 = vpop.f32.mrb[0].mxu0
        %v1932 = vadd.f32 0.0, %v1931
        %v1933 = vpop.f32.mrb[0].mxu0
        %v1934 = vpop.f32.mrb[0].mxu0
        %v1935 = vadd.f32 0.0, %v1934
        %v1936 = vpop.f32.mrb[0].mxu0
        %1937 = vmatprep.mubr.bf16.mxu0 %v1582
        %1938 = vmatmul.mubr.bf16.gmra.mrb[0].mxu0 %v1581
        %v1939 = vpop.f32.mrb[0].mxu0
        %v1940 = vadd.f32 0.0, %v1939
        %v1941 = vpop.f32.mrb[0].mxu0
        %v1942 = vpop.f32.mrb[0].mxu0
        %v1943 = vadd.f32 0.0, %v1942
        %v1944 = vpop.f32.mrb[0].mxu0
        %1945 = vmatprep.mubr.bf16.mxu0 %v1585
        %1946 = vmatmul.mubr.bf16.gmra.mrb[0].mxu0 %v1584
        %v1947 = vpop.f32.mrb[0].mxu0
        %v1948 = vadd.f32 0.0, %v1947
        %v1949 = vpop.f32.mrb[0].mxu0
        %v1950 = vpop.f32.mrb[0].mxu0
        %v1951 = vadd.f32 0.0, %v1950
        %v1952 = vpop.f32.mrb[0].mxu0
        %1953 = vmatprep.mubr.bf16.mxu0 %v1588
        %1954 = vmatmul.mubr.bf16.gmra.mrb[0].mxu0 %v1587
        %v1955 = vpop.f32.mrb[0].mxu0
        %v1956 = vadd.f32 0.0, %v1955
        %v1957 = vpop.f32.mrb[0].mxu0
        %v1958 = vpop.f32.mrb[0].mxu0
        %v1959 = vadd.f32 0.0, %v1958
        %v1960 = vpop.f32.mrb[0].mxu0
        %1961 = vmatprep.mubr.bf16.mxu0 %v1591
        %1962 = vmatmul.mubr.bf16.gmra.mrb[0].mxu0 %v1590
        %v1963 = vpop.f32.mrb[0].mxu0
        %v1964 = vadd.f32 0.0, %v1963
        %v1965 = vpop.f32.mrb[0].mxu0
        %v1966 = vpop.f32.mrb[0].mxu0
        %v1967 = vadd.f32 0.0, %v1966
        %v1968 = vpop.f32.mrb[0].mxu0
        %1969 = vmatprep.mubr.bf16.mxu0 %v1594
        %1970 = vmatmul.mubr.bf16.gmra.mrb[0].mxu0 %v1593
        %v1971 = vpop.f32.mrb[0].mxu0
        %v1972 = vadd.f32 0.0, %v1971
        %v1973 = vpop.f32.mrb[0].mxu0
        %v1974 = vpop.f32.mrb[0].mxu0
        %v1975 = vadd.f32 0.0, %v1974
        %v1976 = vpop.f32.mrb[0].mxu0
        %1977 = vmatprep.mubr.bf16.mxu0 %v1597
        %1978 = vmatmul.mubr.bf16.gmra.mrb[0].mxu0 %v1596
        %v1979 = vpop.f32.mrb[0].mxu0
        %v1980 = vadd.f32 0.0, %v1979
        %v1981 = vpop.f32.mrb[0].mxu0
        %v1982 = vpop.f32.mrb[0].mxu0
        %v1983 = vadd.f32 0.0, %v1982
        %v1984 = vpop.f32.mrb[0].mxu0
        %1985 = vmatprep.mubr.bf16.mxu0 %v1600
        %1986 = vmatmul.mubr.bf16.gmra.mrb[0].mxu0 %v1599
        %v1987 = vpop.f32.mrb[0].mxu0
        %v1988 = vadd.f32 0.0, %v1987
        %v1989 = vpop.f32.mrb[0].mxu0
        %v1990 = vpop.f32.mrb[0].mxu0
        %v1991 = vadd.f32 0.0, %v1990
        %v1992 = vpop.f32.mrb[0].mxu0
        %1993 = vmatprep.mubr.bf16.mxu0 %v1603
        %1994 = vmatmul.mubr.bf16.gmra.mrb[0].mxu0 %v1602
        %v1995 = vpop.f32.mrb[0].mxu0
        %v1996 = vadd.f32 0.0, %v1995
        %v1997 = vpop.f32.mrb[0].mxu0
        %v1998 = vpop.f32.mrb[0].mxu0
        %v1999 = vadd.f32 0.0, %v1998
        %v2000 = vpop.f32.mrb[0].mxu0
        %2001 = vmatprep.mubr.bf16.mxu0 %v1654
        %2002 = vmatmul.mubr.bf16.gmra.mrb[0].mxu0 %v1653
        %v2003 = vpop.f32.mrb[0].mxu0
        %v2004 = vadd.f32 0.0, %v2003
        %v2005 = vpop.f32.mrb[0].mxu0
        %v2006 = vpop.f32.mrb[0].mxu0
        %v2007 = vadd.f32 0.0, %v2006
        %v2008 = vpop.f32.mrb[0].mxu0
        %2009 = vdwg.mxu0
        %2010 = vmatprep.subr.bf16.mxu0 0
        %2011 = vmatpush1.bf16.msra.mxu0 %v1817
        %2012 = vmatprep.subr.bf16.mxu0 0
        %2013 = vmatpush1.bf16.msra.mxu0 %v1818
        %2014 = vmatprep.subr.bf16.mxu0 0
        %2015 = vmatpush1.bf16.msra.mxu0 %v1819
        %2016 = vmatprep.subr.bf16.mxu0 0
        %2017 = vmatpush1.bf16.msra.mxu0 %v1820
        %2018 = vmatprep.subr.bf16.mxu0 0
        %2019 = vmatpush1.bf16.msra.mxu0 %v1821
        %2020 = vmatprep.subr.bf16.mxu0 0
        %2021 = vmatpush1.bf16.msra.mxu0 %v1822
        %2022 = vmatprep.subr.bf16.mxu0 0
        %2023 = vmatpush1.bf16.msra.mxu0 %v1823
        %2024 = vmatprep.subr.bf16.mxu0 0
        %2025 = vmatpush1.bf16.msra.mxu0 %v1824
        %2026 = vmatprep.subr.bf16.mxu0 0
        %2027 = vmatpush1.bf16.msra.mxu0 0
        %2028 = vmatprep.subr.bf16.mxu0 0
        %2029 = vmatpush1.bf16.msra.mxu0 0
        %2030 = vmatprep.subr.bf16.mxu0 0
        %2031 = vmatpush1.bf16.msra.mxu0 0
        %2032 = vmatprep.subr.bf16.mxu0 0
        %2033 = vmatpush1.bf16.msra.mxu0 0
        %2034 = vmatprep.subr.bf16.mxu0 0
        %2035 = vmatpush1.bf16.msra.mxu0 0
        %2036 = vmatprep.subr.bf16.mxu0 0
        %2037 = vmatpush1.bf16.msra.mxu0 0
        %2038 = vmatprep.subr.bf16.mxu0 0
        %2039 = vmatpush1.bf16.msra.mxu0 0
        %2040 = vmatprep.subr.bf16.mxu0 0
        %2041 = vmatpush1.bf16.msra.mxu0 0
        %2042 = vmatprep.mubr.bf16.mxu0 0
        %2043 = vmatmul.mubr.bf16.gmra.mrb[0].mxu0 %v1562
        %v2044 = vpop.f32.mrb[0].mxu0
        %v2045 = vadd.f32 %v1884, %v2044
        %v2046 = vpop.f32.mrb[0].mxu0
        %v2047 = vpop.f32.mrb[0].mxu0
        %v2048 = vadd.f32 %v1887, %v2047
        %v2049 = vpop.f32.mrb[0].mxu0
        %2050 = vmatprep.mubr.bf16.mxu0 0
        %2051 = vmatmul.mubr.bf16.gmra.mrb[0].mxu0 %v1565
        %v2052 = vpop.f32.mrb[0].mxu0
        %v2053 = vadd.f32 %v1892, %v2052
        %v2054 = vpop.f32.mrb[0].mxu0
        %v2055 = vpop.f32.mrb[0].mxu0
        %v2056 = vadd.f32 %v1895, %v2055
        %v2057 = vpop.f32.mrb[0].mxu0
        %2058 = vmatprep.mubr.bf16.mxu0 0
        %2059 = vmatmul.mubr.bf16.gmra.mrb[0].mxu0 %v1568
        %v2060 = vpop.f32.mrb[0].mxu0
        %v2061 = vadd.f32 %v1900, %v2060
        %v2062 = vpop.f32.mrb[0].mxu0
        %v2063 = vpop.f32.mrb[0].mxu0
        %v2064 = vadd.f32 %v1903, %v2063
        %v2065 = vpop.f32.mrb[0].mxu0
        %2066 = vmatprep.mubr.bf16.mxu0 0
        %2067 = vmatmul.mubr.bf16.gmra.mrb[0].mxu0 %v1571
        %v2068 = vpop.f32.mrb[0].mxu0
        %v2069 = vadd.f32 %v1908, %v2068
        %v2070 = vpop.f32.mrb[0].mxu0
        %v2071 = vpop.f32.mrb[0].mxu0
        %v2072 = vadd.f32 %v1911, %v2071
        %v2073 = vpop.f32.mrb[0].mxu0
        %2074 = vmatprep.mubr.bf16.mxu0 0
        %2075 = vmatmul.mubr.bf16.gmra.mrb[0].mxu0 %v1574
        %v2076 = vpop.f32.mrb[0].mxu0
        %v2077 = vadd.f32 %v1916, %v2076
        %v2078 = vpop.f32.mrb[0].mxu0
        %v2079 = vpop.f32.mrb[0].mxu0
        %v2080 = vadd.f32 %v1919, %v2079
        %v2081 = vpop.f32.mrb[0].mxu0
        %2082 = vmatprep.mubr.bf16.mxu0 0
        %2083 = vmatmul.mubr.bf16.gmra.mrb[0].mxu0 %v1577
        %v2084 = vpop.f32.mrb[0].mxu0
        %v2085 = vadd.f32 %v1924, %v2084
        %v2086 = vpop.f32.mrb[0].mxu0
        %v2087 = vpop.f32.mrb[0].mxu0
        %v2088 = vadd.f32 %v1927, %v2087
        %v2089 = vpop.f32.mrb[0].mxu0
        %2090 = vmatprep.mubr.bf16.mxu0 0
        %2091 = vmatmul.mubr.bf16.gmra.mrb[0].mxu0 %v1580
        %v2092 = vpop.f32.mrb[0].mxu0
        %v2093 = vadd.f32 %v1932, %v2092
        %v2094 = vpop.f32.mrb[0].mxu0
        %v2095 = vpop.f32.mrb[0].mxu0
        %v2096 = vadd.f32 %v1935, %v2095
        %v2097 = vpop.f32.mrb[0].mxu0
        %2098 = vmatprep.mubr.bf16.mxu0 0
        %2099 = vmatmul.mubr.bf16.gmra.mrb[0].mxu0 %v1583
        %v2100 = vpop.f32.mrb[0].mxu0
        %v2101 = vadd.f32 %v1940, %v2100
        %v2102 = vpop.f32.mrb[0].mxu0
        %v2103 = vpop.f32.mrb[0].mxu0
        %v2104 = vadd.f32 %v1943, %v2103
        %v2105 = vpop.f32.mrb[0].mxu0
        %2106 = vmatprep.mubr.bf16.mxu0 0
        %2107 = vmatmul.mubr.bf16.gmra.mrb[0].mxu0 %v1586
        %v2108 = vpop.f32.mrb[0].mxu0
        %v2109 = vadd.f32 %v1948, %v2108
        %v2110 = vpop.f32.mrb[0].mxu0
        %v2111 = vpop.f32.mrb[0].mxu0
        %v2112 = vadd.f32 %v1951, %v2111
        %v2113 = vpop.f32.mrb[0].mxu0
        %2114 = vmatprep.mubr.bf16.mxu0 0
        %2115 = vmatmul.mubr.bf16.gmra.mrb[0].mxu0 %v1589
        %v2116 = vpop.f32.mrb[0].mxu0
        %v2117 = vadd.f32 %v1956, %v2116
        %v2118 = vpop.f32.mrb[0].mxu0
        %v2119 = vpop.f32.mrb[0].mxu0
        %v2120 = vadd.f32 %v1959, %v2119
        %v2121 = vpop.f32.mrb[0].mxu0
        %2122 = vmatprep.mubr.bf16.mxu0 0
        %2123 = vmatmul.mubr.bf16.gmra.mrb[0].mxu0 %v1592
        %v2124 = vpop.f32.mrb[0].mxu0
        %v2125 = vadd.f32 %v1964, %v2124
        %v2126 = vpop.f32.mrb[0].mxu0
        %v2127 = vpop.f32.mrb[0].mxu0
        %v2128 = vadd.f32 %v1967, %v2127
        %v2129 = vpop.f32.mrb[0].mxu0
        %2130 = vmatprep.mubr.bf16.mxu0 0
        %2131 = vmatmul.mubr.bf16.gmra.mrb[0].mxu0 %v1595
        %v2132 = vpop.f32.mrb[0].mxu0
        %v2133 = vadd.f32 %v1972, %v2132
        %v2134 = vpop.f32.mrb[0].mxu0
        %v2135 = vpop.f32.mrb[0].mxu0
        %v2136 = vadd.f32 %v1975, %v2135
        %v2137 = vpop.f32.mrb[0].mxu0
        %2138 = vmatprep.mubr.bf16.mxu0 0
        %2139 = vmatmul.mubr.bf16.gmra.mrb[0].mxu0 %v1598
        %v2140 = vpop.f32.mrb[0].mxu0
        %v2141 = vadd.f32 %v1980, %v2140
        %v2142 = vpop.f32.mrb[0].mxu0
        %v2143 = vpop.f32.mrb[0].mxu0
        %v2144 = vadd.f32 %v1983, %v2143
        %v2145 = vpop.f32.mrb[0].mxu0
        %2146 = vmatprep.mubr.bf16.mxu0 0
        %2147 = vmatmul.mubr.bf16.gmra.mrb[0].mxu0 %v1601
        %v2148 = vpop.f32.mrb[0].mxu0
        %v2149 = vadd.f32 %v1988, %v2148
        %v2150 = vpop.f32.mrb[0].mxu0
        %v2151 = vpop.f32.mrb[0].mxu0
        %v2152 = vadd.f32 %v1991, %v2151
        %v2153 = vpop.f32.mrb[0].mxu0
        %2154 = vmatprep.mubr.bf16.mxu0 0
        %2155 = vmatmul.mubr.bf16.gmra.mrb[0].mxu0 %v1604
        %v2156 = vpop.f32.mrb[0].mxu0
        %v2157 = vadd.f32 %v1996, %v2156
        %v2158 = vpop.f32.mrb[0].mxu0
        %v2159 = vpop.f32.mrb[0].mxu0
        %v2160 = vadd.f32 %v1999, %v2159
        %v2161 = vpop.f32.mrb[0].mxu0
        %2162 = vmatprep.mubr.bf16.mxu0 0
        %2163 = vmatmul.mubr.bf16.gmra.mrb[0].mxu0 %v1655
        %v2164 = vpop.f32.mrb[0].mxu0
        %v2165 = vadd.f32 %v2004, %v2164
        %v2166 = vpop.f32.mrb[0].mxu0
        %v2167 = vpop.f32.mrb[0].mxu0
        %v2168 = vadd.f32 %v2007, %v2167
        %v2169 = vpop.f32.mrb[0].mxu0
        %2170 = vdwg.mxu0
        %v2219 = vunpack.c.l.b16 %v1605
        %v2220 = vunpack.c.l.b16 %v1606
        %v2221 = vunpack.c.l.b16 %v1607
        %v2222 = vunpack.c.l.b16 %v1608
        %v2223 = vunpack.c.l.b16 %v1609
        %v2224 = vunpack.c.l.b16 %v1610
        %v2225 = vunpack.c.l.b16 %v1611
        %v2226 = vunpack.c.l.b16 %v1612
        %v2227 = vunpack.c.l.b16 %v1613
        %v2228 = vunpack.c.l.b16 %v1614
        %v2229 = vunpack.c.l.b16 %v1615
        %v2230 = vunpack.c.l.b16 %v1616
        %v2231 = vunpack.c.l.b16 %v1617
        %v2232 = vunpack.c.l.b16 %v1618
        %v2233 = vunpack.c.l.b16 %v1619
        %v2234 = vunpack.c.l.b16 %v1620
        %v2235 = vunpack.c.l.b16 %v1621
        %v2236 = vunpack.c.l.b16 %v1622
        %v2237 = vunpack.c.l.b16 %v1623
        %v2238 = vunpack.c.l.b16 %v1624
        %v2239 = vunpack.c.l.b16 %v1625
        %v2240 = vunpack.c.l.b16 %v1626
        %v2241 = vunpack.c.l.b16 %v1627
        %v2242 = vunpack.c.l.b16 %v1628
        %v2243 = vunpack.c.l.b16 %v1629
        %v2244 = vunpack.c.l.b16 %v1630
        %v2245 = vunpack.c.l.b16 %v1631
        %v2246 = vunpack.c.l.b16 %v1632
        %v2247 = vunpack.c.l.b16 %v1633
        %v2248 = vunpack.c.l.b16 %v1634
        %v2249 = vunpack.c.l.b16 %v1635
        %v2250 = vunpack.c.l.b16 %v1636
        %v2251 = vunpack.c.l.b16 %v1637
        %v2252 = vunpack.c.l.b16 %v1638
        %v2253 = vunpack.c.l.b16 %v1639
        %v2254 = vunpack.c.l.b16 %v1640
        %v2255 = vunpack.c.l.b16 %v1641
        %v2256 = vunpack.c.l.b16 %v1642
        %v2257 = vunpack.c.l.b16 %v1643
        %v2258 = vunpack.c.l.b16 %v1644
        %v2259 = vunpack.c.l.b16 %v1645
        %v2260 = vunpack.c.l.b16 %v1646
        %v2261 = vunpack.c.l.b16 %v1647
        %v2262 = vunpack.c.l.b16 %v1648
        %v2263 = vunpack.c.l.b16 %v1649
        %v2264 = vunpack.c.l.b16 %v1650
        %v2265 = vunpack.c.l.b16 %v1651
        %v2266 = vunpack.c.l.b16 %v1652
        %v2267 = vpack.c.b16 %v2220, %v2219
        %v2268 = vpack.c.b16 %v2222, %v2221
        %v2269 = vpack.c.b16 %v2224, %v2223
        %v2270 = vpack.c.b16 %v2226, %v2225
        %v2271 = vpack.c.b16 %v2228, %v2227
        %v2272 = vpack.c.b16 %v2230, %v2229
        %v2273 = vpack.c.b16 %v2232, %v2231
        %v2274 = vpack.c.b16 %v2234, %v2233
        %v2275 = vpack.c.b16 %v2236, %v2235
        %v2276 = vpack.c.b16 %v2238, %v2237
        %v2277 = vpack.c.b16 %v2240, %v2239
        %v2278 = vpack.c.b16 %v2242, %v2241
        %v2279 = vpack.c.b16 %v2244, %v2243
        %v2280 = vpack.c.b16 %v2246, %v2245
        %v2281 = vpack.c.b16 %v2248, %v2247
        %v2282 = vpack.c.b16 %v2250, %v2249
        %v2283 = vpack.c.b16 %v2252, %v2251
        %v2284 = vpack.c.b16 %v2254, %v2253
        %v2285 = vpack.c.b16 %v2256, %v2255
        %v2286 = vpack.c.b16 %v2258, %v2257
        %v2287 = vpack.c.b16 %v2260, %v2259
        %v2288 = vpack.c.b16 %v2262, %v2261
        %v2289 = vpack.c.b16 %v2264, %v2263
        %v2290 = vpack.c.b16 %v2266, %v2265
        %2315 = vmatprep.subr.bf16.mxu0 0
        %2316 = vmatpush1.bf16.msra.mxu0 %v2267
        %2317 = vmatprep.subr.bf16.mxu0 0
        %2318 = vmatpush1.bf16.msra.mxu0 %v2268
        %2319 = vmatprep.subr.bf16.mxu0 0
        %2320 = vmatpush1.bf16.msra.mxu0 %v2269
        %2321 = vmatprep.subr.bf16.mxu0 0
        %2322 = vmatpush1.bf16.msra.mxu0 %v2270
        %2323 = vmatprep.subr.bf16.mxu0 0
        %2324 = vmatpush1.bf16.msra.mxu0 %v2271
        %2325 = vmatprep.subr.bf16.mxu0 0
        %2326 = vmatpush1.bf16.msra.mxu0 %v2272
        %2327 = vmatprep.subr.bf16.mxu0 0
        %2328 = vmatpush1.bf16.msra.mxu0 %v2273
        %2329 = vmatprep.subr.bf16.mxu0 0
        %2330 = vmatpush1.bf16.msra.mxu0 %v2274
        %2331 = vmatprep.subr.bf16.mxu0 0
        %2332 = vmatpush1.bf16.msra.mxu0 %v2275
        %2333 = vmatprep.subr.bf16.mxu0 0
        %2334 = vmatpush1.bf16.msra.mxu0 %v2276
        %2335 = vmatprep.subr.bf16.mxu0 0
        %2336 = vmatpush1.bf16.msra.mxu0 %v2277
        %2337 = vmatprep.subr.bf16.mxu0 0
        %2338 = vmatpush1.bf16.msra.mxu0 %v2278
        %2339 = vmatprep.subr.bf16.mxu0 0
        %2340 = vmatpush1.bf16.msra.mxu0 %v2279
        %2341 = vmatprep.subr.bf16.mxu0 0
        %2342 = vmatpush1.bf16.msra.mxu0 %v2280
        %2343 = vmatprep.subr.bf16.mxu0 0
        %2344 = vmatpush1.bf16.msra.mxu0 %v2281
        %2345 = vmatprep.subr.bf16.mxu0 0
        %2346 = vmatpush1.bf16.msra.mxu0 %v2282
        %2347 = vmatprep.mubr.bf16.mxu0 %v1558
        %2348 = vmatmul.mubr.bf16.gmra.mrb[0].mxu0 %v1557
        %v2349 = vpop.f32.mrb[0].mxu0
        %v2350 = vadd.f32 %v2045, %v2349
        %v2351 = vpop.f32.mrb[0].mxu0
        %v2352 = vpop.f32.mrb[0].mxu0
        %v2353 = vadd.f32 %v2048, %v2352
        %v2354 = vpop.f32.mrb[0].mxu0
        %2355 = vmatprep.mubr.bf16.mxu0 %v1561
        %2356 = vmatmul.mubr.bf16.gmra.mrb[0].mxu0 %v1560
        %v2357 = vpop.f32.mrb[0].mxu0
        %v2358 = vadd.f32 %v2053, %v2357
        %v2359 = vpop.f32.mrb[0].mxu0
        %v2360 = vpop.f32.mrb[0].mxu0
        %v2361 = vadd.f32 %v2056, %v2360
        %v2362 = vpop.f32.mrb[0].mxu0
        %2363 = vmatprep.mubr.bf16.mxu0 %v1564
        %2364 = vmatmul.mubr.bf16.gmra.mrb[0].mxu0 %v1563
        %v2365 = vpop.f32.mrb[0].mxu0
        %v2366 = vadd.f32 %v2061, %v2365
        %v2367 = vpop.f32.mrb[0].mxu0
        %v2368 = vpop.f32.mrb[0].mxu0
        %v2369 = vadd.f32 %v2064, %v2368
        %v2370 = vpop.f32.mrb[0].mxu0
        %2371 = vmatprep.mubr.bf16.mxu0 %v1567
        %2372 = vmatmul.mubr.bf16.gmra.mrb[0].mxu0 %v1566
        %v2373 = vpop.f32.mrb[0].mxu0
        %v2374 = vadd.f32 %v2069, %v2373
        %v2375 = vpop.f32.mrb[0].mxu0
        %v2376 = vpop.f32.mrb[0].mxu0
        %v2377 = vadd.f32 %v2072, %v2376
        %v2378 = vpop.f32.mrb[0].mxu0
        %2379 = vmatprep.mubr.bf16.mxu0 %v1570
        %2380 = vmatmul.mubr.bf16.gmra.mrb[0].mxu0 %v1569
        %v2381 = vpop.f32.mrb[0].mxu0
        %v2382 = vadd.f32 %v2077, %v2381
        %v2383 = vpop.f32.mrb[0].mxu0
        %v2384 = vpop.f32.mrb[0].mxu0
        %v2385 = vadd.f32 %v2080, %v2384
        %v2386 = vpop.f32.mrb[0].mxu0
        %2387 = vmatprep.mubr.bf16.mxu0 %v1573
        %2388 = vmatmul.mubr.bf16.gmra.mrb[0].mxu0 %v1572
        %v2389 = vpop.f32.mrb[0].mxu0
        %v2390 = vadd.f32 %v2085, %v2389
        %v2391 = vpop.f32.mrb[0].mxu0
        %v2392 = vpop.f32.mrb[0].mxu0
        %v2393 = vadd.f32 %v2088, %v2392
        %v2394 = vpop.f32.mrb[0].mxu0
        %2395 = vmatprep.mubr.bf16.mxu0 %v1576
        %2396 = vmatmul.mubr.bf16.gmra.mrb[0].mxu0 %v1575
        %v2397 = vpop.f32.mrb[0].mxu0
        %v2398 = vadd.f32 %v2093, %v2397
        %v2399 = vpop.f32.mrb[0].mxu0
        %v2400 = vpop.f32.mrb[0].mxu0
        %v2401 = vadd.f32 %v2096, %v2400
        %v2402 = vpop.f32.mrb[0].mxu0
        %2403 = vmatprep.mubr.bf16.mxu0 %v1579
        %2404 = vmatmul.mubr.bf16.gmra.mrb[0].mxu0 %v1578
        %v2405 = vpop.f32.mrb[0].mxu0
        %v2406 = vadd.f32 %v2101, %v2405
        %v2407 = vpop.f32.mrb[0].mxu0
        %v2408 = vpop.f32.mrb[0].mxu0
        %v2409 = vadd.f32 %v2104, %v2408
        %v2410 = vpop.f32.mrb[0].mxu0
        %2411 = vmatprep.mubr.bf16.mxu0 %v1582
        %2412 = vmatmul.mubr.bf16.gmra.mrb[0].mxu0 %v1581
        %v2413 = vpop.f32.mrb[0].mxu0
        %v2414 = vadd.f32 %v2109, %v2413
        %v2415 = vpop.f32.mrb[0].mxu0
        %v2416 = vpop.f32.mrb[0].mxu0
        %v2417 = vadd.f32 %v2112, %v2416
        %v2418 = vpop.f32.mrb[0].mxu0
        %2419 = vmatprep.mubr.bf16.mxu0 %v1585
        %2420 = vmatmul.mubr.bf16.gmra.mrb[0].mxu0 %v1584
        %v2421 = vpop.f32.mrb[0].mxu0
        %v2422 = vadd.f32 %v2117, %v2421
        %v2423 = vpop.f32.mrb[0].mxu0
        %v2424 = vpop.f32.mrb[0].mxu0
        %v2425 = vadd.f32 %v2120, %v2424
        %v2426 = vpop.f32.mrb[0].mxu0
        %2427 = vmatprep.mubr.bf16.mxu0 %v1588
        %2428 = vmatmul.mubr.bf16.gmra.mrb[0].mxu0 %v1587
        %v2429 = vpop.f32.mrb[0].mxu0
        %v2430 = vadd.f32 %v2125, %v2429
        %v2431 = vpop.f32.mrb[0].mxu0
        %v2432 = vpop.f32.mrb[0].mxu0
        %v2433 = vadd.f32 %v2128, %v2432
        %v2434 = vpop.f32.mrb[0].mxu0
        %2435 = vmatprep.mubr.bf16.mxu0 %v1591
        %2436 = vmatmul.mubr.bf16.gmra.mrb[0].mxu0 %v1590
        %v2437 = vpop.f32.mrb[0].mxu0
        %v2438 = vadd.f32 %v2133, %v2437
        %v2439 = vpop.f32.mrb[0].mxu0
        %v2440 = vpop.f32.mrb[0].mxu0
        %v2441 = vadd.f32 %v2136, %v2440
        %v2442 = vpop.f32.mrb[0].mxu0
        %2443 = vmatprep.mubr.bf16.mxu0 %v1594
        %2444 = vmatmul.mubr.bf16.gmra.mrb[0].mxu0 %v1593
        %v2445 = vpop.f32.mrb[0].mxu0
        %v2446 = vadd.f32 %v2141, %v2445
        %v2447 = vpop.f32.mrb[0].mxu0
        %v2448 = vpop.f32.mrb[0].mxu0
        %v2449 = vadd.f32 %v2144, %v2448
        %v2450 = vpop.f32.mrb[0].mxu0
        %2451 = vmatprep.mubr.bf16.mxu0 %v1597
        %2452 = vmatmul.mubr.bf16.gmra.mrb[0].mxu0 %v1596
        %v2453 = vpop.f32.mrb[0].mxu0
        %v2454 = vadd.f32 %v2149, %v2453
        %v2455 = vpop.f32.mrb[0].mxu0
        %v2456 = vpop.f32.mrb[0].mxu0
        %v2457 = vadd.f32 %v2152, %v2456
        %v2458 = vpop.f32.mrb[0].mxu0
        %2459 = vmatprep.mubr.bf16.mxu0 %v1600
        %2460 = vmatmul.mubr.bf16.gmra.mrb[0].mxu0 %v1599
        %v2461 = vpop.f32.mrb[0].mxu0
        %v2462 = vadd.f32 %v2157, %v2461
        %v2463 = vpop.f32.mrb[0].mxu0
        %v2464 = vpop.f32.mrb[0].mxu0
        %v2465 = vadd.f32 %v2160, %v2464
        %v2466 = vpop.f32.mrb[0].mxu0
        %2467 = vmatprep.mubr.bf16.mxu0 %v1603
        %2468 = vmatmul.mubr.bf16.gmra.mrb[0].mxu0 %v1602
        %v2469 = vpop.f32.mrb[0].mxu0
        %v2470 = vadd.f32 %v2165, %v2469
        %v2471 = vpop.f32.mrb[0].mxu0
        %v2472 = vpop.f32.mrb[0].mxu0
        %v2473 = vadd.f32 %v2168, %v2472
        %v2474 = vpop.f32.mrb[0].mxu0
        %2475 = vdwg.mxu0
        %2476 = vmatprep.subr.bf16.mxu0 0
        %2477 = vmatpush1.bf16.msra.mxu0 %v2283
        %2478 = vmatprep.subr.bf16.mxu0 0
        %2479 = vmatpush1.bf16.msra.mxu0 %v2284
        %2480 = vmatprep.subr.bf16.mxu0 0
        %2481 = vmatpush1.bf16.msra.mxu0 %v2285
        %2482 = vmatprep.subr.bf16.mxu0 0
        %2483 = vmatpush1.bf16.msra.mxu0 %v2286
        %2484 = vmatprep.subr.bf16.mxu0 0
        %2485 = vmatpush1.bf16.msra.mxu0 %v2287
        %2486 = vmatprep.subr.bf16.mxu0 0
        %2487 = vmatpush1.bf16.msra.mxu0 %v2288
        %2488 = vmatprep.subr.bf16.mxu0 0
        %2489 = vmatpush1.bf16.msra.mxu0 %v2289
        %2490 = vmatprep.subr.bf16.mxu0 0
        %2491 = vmatpush1.bf16.msra.mxu0 %v2290
        %2492 = vmatprep.subr.bf16.mxu0 0
        %2493 = vmatpush1.bf16.msra.mxu0 0
        %2494 = vmatprep.subr.bf16.mxu0 0
        %2495 = vmatpush1.bf16.msra.mxu0 0
        %2496 = vmatprep.subr.bf16.mxu0 0
        %2497 = vmatpush1.bf16.msra.mxu0 0
        %2498 = vmatprep.subr.bf16.mxu0 0
        %2499 = vmatpush1.bf16.msra.mxu0 0
        %2500 = vmatprep.subr.bf16.mxu0 0
        %2501 = vmatpush1.bf16.msra.mxu0 0
        %2502 = vmatprep.subr.bf16.mxu0 0
        %2503 = vmatpush1.bf16.msra.mxu0 0
        %2504 = vmatprep.subr.bf16.mxu0 0
        %2505 = vmatpush1.bf16.msra.mxu0 0
        %2506 = vmatprep.subr.bf16.mxu0 0
        %2507 = vmatpush1.bf16.msra.mxu0 0
        %2508 = vmatprep.mubr.bf16.mxu0 0
        %2509 = vmatmul.mubr.bf16.gmra.mrb[0].mxu0 %v1559
        %v2510 = vpop.f32.mrb[0].mxu0
        %v2511 = vadd.f32 %v2350, %v2510
        %v2512 = vpop.f32.mrb[0].mxu0
        %v2513 = vpop.f32.mrb[0].mxu0
        %v2514 = vadd.f32 %v2353, %v2513
        %v2515 = vpop.f32.mrb[0].mxu0
        %2516 = vmatprep.mubr.bf16.mxu0 0
        %2517 = vmatmul.mubr.bf16.gmra.mrb[0].mxu0 %v1562
        %v2518 = vpop.f32.mrb[0].mxu0
        %v2519 = vadd.f32 %v2358, %v2518
        %v2520 = vpop.f32.mrb[0].mxu0
        %v2521 = vpop.f32.mrb[0].mxu0
        %v2522 = vadd.f32 %v2361, %v2521
        %v2523 = vpop.f32.mrb[0].mxu0
        %2524 = vmatprep.mubr.bf16.mxu0 0
        %2525 = vmatmul.mubr.bf16.gmra.mrb[0].mxu0 %v1565
        %v2526 = vpop.f32.mrb[0].mxu0
        %v2527 = vadd.f32 %v2366, %v2526
        %v2528 = vpop.f32.mrb[0].mxu0
        %v2529 = vpop.f32.mrb[0].mxu0
        %v2530 = vadd.f32 %v2369, %v2529
        %v2531 = vpop.f32.mrb[0].mxu0
        %2532 = vmatprep.mubr.bf16.mxu0 0
        %2533 = vmatmul.mubr.bf16.gmra.mrb[0].mxu0 %v1568
        %v2534 = vpop.f32.mrb[0].mxu0
        %v2535 = vadd.f32 %v2374, %v2534
        %v2536 = vpop.f32.mrb[0].mxu0
        %v2537 = vpop.f32.mrb[0].mxu0
        %v2538 = vadd.f32 %v2377, %v2537
        %v2539 = vpop.f32.mrb[0].mxu0
        %2540 = vmatprep.mubr.bf16.mxu0 0
        %2541 = vmatmul.mubr.bf16.gmra.mrb[0].mxu0 %v1571
        %v2542 = vpop.f32.mrb[0].mxu0
        %v2543 = vadd.f32 %v2382, %v2542
        %v2544 = vpop.f32.mrb[0].mxu0
        %v2545 = vpop.f32.mrb[0].mxu0
        %v2546 = vadd.f32 %v2385, %v2545
        %v2547 = vpop.f32.mrb[0].mxu0
        %2548 = vmatprep.mubr.bf16.mxu0 0
        %2549 = vmatmul.mubr.bf16.gmra.mrb[0].mxu0 %v1574
        %v2550 = vpop.f32.mrb[0].mxu0
        %v2551 = vadd.f32 %v2390, %v2550
        %v2552 = vpop.f32.mrb[0].mxu0
        %v2553 = vpop.f32.mrb[0].mxu0
        %v2554 = vadd.f32 %v2393, %v2553
        %v2555 = vpop.f32.mrb[0].mxu0
        %2556 = vmatprep.mubr.bf16.mxu0 0
        %2557 = vmatmul.mubr.bf16.gmra.mrb[0].mxu0 %v1577
        %v2558 = vpop.f32.mrb[0].mxu0
        %v2559 = vadd.f32 %v2398, %v2558
        %v2560 = vpop.f32.mrb[0].mxu0
        %v2561 = vpop.f32.mrb[0].mxu0
        %v2562 = vadd.f32 %v2401, %v2561
        %v2563 = vpop.f32.mrb[0].mxu0
        %2564 = vmatprep.mubr.bf16.mxu0 0
        %2565 = vmatmul.mubr.bf16.gmra.mrb[0].mxu0 %v1580
        %v2566 = vpop.f32.mrb[0].mxu0
        %v2567 = vadd.f32 %v2406, %v2566
        %v2568 = vpop.f32.mrb[0].mxu0
        %v2569 = vpop.f32.mrb[0].mxu0
        %v2570 = vadd.f32 %v2409, %v2569
        %v2571 = vpop.f32.mrb[0].mxu0
        %2572 = vmatprep.mubr.bf16.mxu0 0
        %2573 = vmatmul.mubr.bf16.gmra.mrb[0].mxu0 %v1583
        %v2574 = vpop.f32.mrb[0].mxu0
        %v2575 = vadd.f32 %v2414, %v2574
        %v2576 = vpop.f32.mrb[0].mxu0
        %v2577 = vpop.f32.mrb[0].mxu0
        %v2578 = vadd.f32 %v2417, %v2577
        %v2579 = vpop.f32.mrb[0].mxu0
        %2580 = vmatprep.mubr.bf16.mxu0 0
        %2581 = vmatmul.mubr.bf16.gmra.mrb[0].mxu0 %v1586
        %v2582 = vpop.f32.mrb[0].mxu0
        %v2583 = vadd.f32 %v2422, %v2582
        %v2584 = vpop.f32.mrb[0].mxu0
        %v2585 = vpop.f32.mrb[0].mxu0
        %v2586 = vadd.f32 %v2425, %v2585
        %v2587 = vpop.f32.mrb[0].mxu0
        %2588 = vmatprep.mubr.bf16.mxu0 0
        %2589 = vmatmul.mubr.bf16.gmra.mrb[0].mxu0 %v1589
        %v2590 = vpop.f32.mrb[0].mxu0
        %v2591 = vadd.f32 %v2430, %v2590
        %v2592 = vpop.f32.mrb[0].mxu0
        %v2593 = vpop.f32.mrb[0].mxu0
        %v2594 = vadd.f32 %v2433, %v2593
        %v2595 = vpop.f32.mrb[0].mxu0
        %2596 = vmatprep.mubr.bf16.mxu0 0
        %2597 = vmatmul.mubr.bf16.gmra.mrb[0].mxu0 %v1592
        %v2598 = vpop.f32.mrb[0].mxu0
        %v2599 = vadd.f32 %v2438, %v2598
        %v2600 = vpop.f32.mrb[0].mxu0
        %v2601 = vpop.f32.mrb[0].mxu0
        %v2602 = vadd.f32 %v2441, %v2601
        %v2603 = vpop.f32.mrb[0].mxu0
        %2604 = vmatprep.mubr.bf16.mxu0 0
        %2605 = vmatmul.mubr.bf16.gmra.mrb[0].mxu0 %v1595
        %v2606 = vpop.f32.mrb[0].mxu0
        %v2607 = vadd.f32 %v2446, %v2606
        %v2608 = vpop.f32.mrb[0].mxu0
        %v2609 = vpop.f32.mrb[0].mxu0
        %v2610 = vadd.f32 %v2449, %v2609
        %v2611 = vpop.f32.mrb[0].mxu0
        %2612 = vmatprep.mubr.bf16.mxu0 0
        %2613 = vmatmul.mubr.bf16.gmra.mrb[0].mxu0 %v1598
        %v2614 = vpop.f32.mrb[0].mxu0
        %v2615 = vadd.f32 %v2454, %v2614
        %v2616 = vpop.f32.mrb[0].mxu0
        %v2617 = vpop.f32.mrb[0].mxu0
        %v2618 = vadd.f32 %v2457, %v2617
        %v2619 = vpop.f32.mrb[0].mxu0
        %2620 = vmatprep.mubr.bf16.mxu0 0
        %2621 = vmatmul.mubr.bf16.gmra.mrb[0].mxu0 %v1601
        %v2622 = vpop.f32.mrb[0].mxu0
        %v2623 = vadd.f32 %v2462, %v2622
        %v2624 = vpop.f32.mrb[0].mxu0
        %v2625 = vpop.f32.mrb[0].mxu0
        %v2626 = vadd.f32 %v2465, %v2625
        %v2627 = vpop.f32.mrb[0].mxu0
        %2628 = vmatprep.mubr.bf16.mxu0 0
        %2629 = vmatmul.mubr.bf16.gmra.mrb[0].mxu0 %v1604
        %v2630 = vpop.f32.mrb[0].mxu0
        %v2631 = vadd.f32 %v2470, %v2630
        %v2632 = vpop.f32.mrb[0].mxu0
        %v2633 = vpop.f32.mrb[0].mxu0
        %v2634 = vadd.f32 %v2473, %v2633
        %v2635 = vpop.f32.mrb[0].mxu0
        %2636 = vdwg.mxu0
        %v2637 = vld [vmem:[#allocation2 + $0x30] sm:$0xff]
        %v2638 = vld [vmem:[#allocation2 + $0x38] sm:$0xff]
        %v2639 = vld [vmem:[#allocation2 + $0x40] sm:$0xff]
        %v2640 = vld [vmem:[#allocation2 + $0x48] sm:$0xff]
        %v2641 = vld [vmem:[#allocation2 + $0x50] sm:$0xff]
        %v2642 = vld [vmem:[#allocation2 + $0x58] sm:$0xff]
        %v2643 = vld [vmem:[#allocation2 + $0x60] sm:$0xff]
        %v2644 = vld [vmem:[#allocation2 + $0x68] sm:$0xff]
        %v2645 = vld [vmem:[#allocation2 + $0x70] sm:$0xff]
        %v2646 = vld [vmem:[#allocation2 + $0x78] sm:$0xff]
        %v2647 = vld [vmem:[#allocation2 + $0x80] sm:$0xff]
        %v2648 = vld [vmem:[#allocation2 + $0x88] sm:$0xff]
        %v2649 = vld [vmem:[#allocation2 + $0x90] sm:$0xff]
        %v2650 = vld [vmem:[#allocation2 + $0x98] sm:$0xff]
        %v2651 = vld [vmem:[#allocation2 + $0xa0] sm:$0xff]
        %v2652 = vld [vmem:[#allocation2 + $0xa8] sm:$0xff]
        %v2653 = vld [vmem:[#allocation2 + $0xb0] sm:$0xff]
        %v2654 = vld [vmem:[#allocation2 + $0xb8] sm:$0xff]
        %v2655 = vld [vmem:[#allocation2 + $0xc0] sm:$0xff]
        %v2656 = vld [vmem:[#allocation2 + $0xc8] sm:$0xff]
        %v2657 = vld [vmem:[#allocation2 + $0xd0] sm:$0xff]
        %v2658 = vld [vmem:[#allocation2 + $0xd8] sm:$0xff]
        %v2659 = vld [vmem:[#allocation2 + $0xe0] sm:$0xff]
        %v2660 = vld [vmem:[#allocation2 + $0xe8] sm:$0xff]
        %v2661 = vld [vmem:[#allocation2 + $0xf0] sm:$0xff]
        %v2662 = vld [vmem:[#allocation2 + $0xf8] sm:$0xff]
        %v2663 = vld [vmem:[#allocation2 + $0x100] sm:$0xff]
        %v2664 = vld [vmem:[#allocation2 + $0x108] sm:$0xff]
        %v2665 = vld [vmem:[#allocation2 + $0x110] sm:$0xff]
        %v2666 = vld [vmem:[#allocation2 + $0x118] sm:$0xff]
        %v2667 = vld [vmem:[#allocation2 + $0x120] sm:$0xff]
        %v2668 = vld [vmem:[#allocation2 + $0x128] sm:$0xff]
        %v2669 = vld [vmem:[#allocation2 + $0x130] sm:$0xff]
        %v2670 = vld [vmem:[#allocation2 + $0x138] sm:$0xff]
        %v2671 = vld [vmem:[#allocation2 + $0x140] sm:$0xff]
        %v2672 = vld [vmem:[#allocation2 + $0x148] sm:$0xff]
        %v2673 = vld [vmem:[#allocation2 + $0x150] sm:$0xff]
        %v2674 = vld [vmem:[#allocation2 + $0x158] sm:$0xff]
        %v2675 = vld [vmem:[#allocation2 + $0x160] sm:$0xff]
        %v2676 = vld [vmem:[#allocation2 + $0x168] sm:$0xff]
        %v2677 = vld [vmem:[#allocation2 + $0x170] sm:$0xff]
        %v2678 = vld [vmem:[#allocation2 + $0x178] sm:$0xff]
        %v2679 = vld [vmem:[#allocation2 + $0x180] sm:$0xff]
        %v2680 = vld [vmem:[#allocation2 + $0x188] sm:$0xff]
        %v2681 = vld [vmem:[#allocation2 + $0x190] sm:$0xff]
        %v2682 = vld [vmem:[#allocation2 + $0x198] sm:$0xff]
        %v2683 = vld [vmem:[#allocation2 + $0x1a0] sm:$0xff]
        %v2684 = vld [vmem:[#allocation2 + $0x1a8] sm:$0xff]
        %s2685 = scalar_lea.vmem [#allocation6], 384
        %v2686 = vld [vmem:[%s2685] sm:$0xf]
        %v2687 = vld [vmem:[%s2685 + $0x4] sm:$0xf]
        %v2688 = vld [vmem:[%s2685 + $0x8] sm:$0xf]
        %v2689 = vld [vmem:[%s2685 + $0xc] sm:$0xf]
        %v2690 = vld [vmem:[%s2685 + $0x10] sm:$0xf]
        %v2691 = vld [vmem:[%s2685 + $0x14] sm:$0xf]
        %v2692 = vld [vmem:[%s2685 + $0x18] sm:$0xf]
        %v2693 = vld [vmem:[%s2685 + $0x1c] sm:$0xf]
        %v2694 = vld [vmem:[%s2685 + $0x20] sm:$0xf]
        %v2695 = vld [vmem:[%s2685 + $0x24] sm:$0xf]
        %v2696 = vld [vmem:[%s2685 + $0x28] sm:$0xf]
        %v2697 = vld [vmem:[%s2685 + $0x2c] sm:$0xf]
        %v2698 = vld [vmem:[%s2685 + $0x30] sm:$0xf]
        %v2699 = vld [vmem:[%s2685 + $0x34] sm:$0xf]
        %v2700 = vld [vmem:[%s2685 + $0x38] sm:$0xf]
        %v2701 = vld [vmem:[%s2685 + $0x3c] sm:$0xf]
        %v2702 = vld [vmem:[%s2685 + $0x40] sm:$0xf]
        %v2703 = vld [vmem:[%s2685 + $0x44] sm:$0xf]
        %v2704 = vld [vmem:[%s2685 + $0x48] sm:$0xf]
        %v2705 = vld [vmem:[%s2685 + $0x4c] sm:$0xf]
        %v2706 = vld [vmem:[%s2685 + $0x50] sm:$0xf]
        %v2707 = vld [vmem:[%s2685 + $0x54] sm:$0xf]
        %v2708 = vld [vmem:[%s2685 + $0x58] sm:$0xf]
        %v2709 = vld [vmem:[%s2685 + $0x5c] sm:$0xf]
        %v2710 = vld [vmem:[%s2685 + $0x60] sm:$0xf]
        %v2711 = vld [vmem:[%s2685 + $0x64] sm:$0xf]
        %v2712 = vld [vmem:[%s2685 + $0x68] sm:$0xf]
        %v2713 = vld [vmem:[%s2685 + $0x6c] sm:$0xf]
        %v2714 = vld [vmem:[%s2685 + $0x70] sm:$0xf]
        %v2715 = vld [vmem:[%s2685 + $0x74] sm:$0xf]
        %v2716 = vld [vmem:[%s2685 + $0x78] sm:$0xf]
        %v2717 = vld [vmem:[%s2685 + $0x7c] sm:$0xf]
        %v2718 = vld [vmem:[%s2685 + $0x80] sm:$0xf]
        %v2719 = vld [vmem:[%s2685 + $0x84] sm:$0xf]
        %v2720 = vld [vmem:[%s2685 + $0x88] sm:$0xf]
        %v2721 = vld [vmem:[%s2685 + $0x8c] sm:$0xf]
        %v2722 = vld [vmem:[%s2685 + $0x90] sm:$0xf]
        %v2723 = vld [vmem:[%s2685 + $0x94] sm:$0xf]
        %v2724 = vld [vmem:[%s2685 + $0x98] sm:$0xf]
        %v2725 = vld [vmem:[%s2685 + $0x9c] sm:$0xf]
        %v2726 = vld [vmem:[%s2685 + $0xa0] sm:$0xf]
        %v2727 = vld [vmem:[%s2685 + $0xa4] sm:$0xf]
        %v2728 = vld [vmem:[%s2685 + $0xa8] sm:$0xf]
        %v2729 = vld [vmem:[%s2685 + $0xac] sm:$0xf]
        %v2730 = vld [vmem:[%s2685 + $0xb0] sm:$0xf]
        %v2731 = vld [vmem:[%s2685 + $0xb4] sm:$0xf]
        %v2732 = vld [vmem:[%s2685 + $0xb8] sm:$0xf]
        %v2733 = vld [vmem:[%s2685 + $0xbc] sm:$0xf]
        %v2782 = vunpack.c.l.b16 %v2686
        %v2783 = vunpack.c.l.b16 %v2687
        %v2784 = vunpack.c.l.b16 %v2688
        %v2785 = vunpack.c.l.b16 %v2689
        %v2786 = vunpack.c.l.b16 %v2690
        %v2787 = vunpack.c.l.b16 %v2691
        %v2788 = vunpack.c.l.b16 %v2692
        %v2789 = vunpack.c.l.b16 %v2693
        %v2790 = vunpack.c.l.b16 %v2694
        %v2791 = vunpack.c.l.b16 %v2695
        %v2792 = vunpack.c.l.b16 %v2696
        %v2793 = vunpack.c.l.b16 %v2697
        %v2794 = vunpack.c.l.b16 %v2698
        %v2795 = vunpack.c.l.b16 %v2699
        %v2796 = vunpack.c.l.b16 %v2700
        %v2797 = vunpack.c.l.b16 %v2701
        %v2798 = vunpack.c.l.b16 %v2702
        %v2799 = vunpack.c.l.b16 %v2703
        %v2800 = vunpack.c.l.b16 %v2704
        %v2801 = vunpack.c.l.b16 %v2705
        %v2802 = vunpack.c.l.b16 %v2706
        %v2803 = vunpack.c.l.b16 %v2707
        %v2804 = vunpack.c.l.b16 %v2708
        %v2805 = vunpack.c.l.b16 %v2709
        %v2806 = vunpack.c.l.b16 %v2710
        %v2807 = vunpack.c.l.b16 %v2711
        %v2808 = vunpack.c.l.b16 %v2712
        %v2809 = vunpack.c.l.b16 %v2713
        %v2810 = vunpack.c.l.b16 %v2714
        %v2811 = vunpack.c.l.b16 %v2715
        %v2812 = vunpack.c.l.b16 %v2716
        %v2813 = vunpack.c.l.b16 %v2717
        %v2814 = vunpack.c.l.b16 %v2718
        %v2815 = vunpack.c.l.b16 %v2719
        %v2816 = vunpack.c.l.b16 %v2720
        %v2817 = vunpack.c.l.b16 %v2721
        %v2818 = vunpack.c.l.b16 %v2722
        %v2819 = vunpack.c.l.b16 %v2723
        %v2820 = vunpack.c.l.b16 %v2724
        %v2821 = vunpack.c.l.b16 %v2725
        %v2822 = vunpack.c.l.b16 %v2726
        %v2823 = vunpack.c.l.b16 %v2727
        %v2824 = vunpack.c.l.b16 %v2728
        %v2825 = vunpack.c.l.b16 %v2729
        %v2826 = vunpack.c.l.b16 %v2730
        %v2827 = vunpack.c.l.b16 %v2731
        %v2828 = vunpack.c.l.b16 %v2732
        %v2829 = vunpack.c.l.b16 %v2733
        %v2830 = vpack.c.b16 %v2783, %v2782
        %v2831 = vpack.c.b16 %v2785, %v2784
        %v2832 = vpack.c.b16 %v2787, %v2786
        %v2833 = vpack.c.b16 %v2789, %v2788
        %v2834 = vpack.c.b16 %v2791, %v2790
        %v2835 = vpack.c.b16 %v2793, %v2792
        %v2836 = vpack.c.b16 %v2795, %v2794
        %v2837 = vpack.c.b16 %v2797, %v2796
        %v2838 = vpack.c.b16 %v2799, %v2798
        %v2839 = vpack.c.b16 %v2801, %v2800
        %v2840 = vpack.c.b16 %v2803, %v2802
        %v2841 = vpack.c.b16 %v2805, %v2804
        %v2842 = vpack.c.b16 %v2807, %v2806
        %v2843 = vpack.c.b16 %v2809, %v2808
        %v2844 = vpack.c.b16 %v2811, %v2810
        %v2845 = vpack.c.b16 %v2813, %v2812
        %v2846 = vpack.c.b16 %v2815, %v2814
        %v2847 = vpack.c.b16 %v2817, %v2816
        %v2848 = vpack.c.b16 %v2819, %v2818
        %v2849 = vpack.c.b16 %v2821, %v2820
        %v2850 = vpack.c.b16 %v2823, %v2822
        %v2851 = vpack.c.b16 %v2825, %v2824
        %v2852 = vpack.c.b16 %v2827, %v2826
        %v2853 = vpack.c.b16 %v2829, %v2828
        %2878 = vmatprep.subr.bf16.mxu0 0
        %2879 = vmatpush1.bf16.msra.mxu0 %v2830
        %2880 = vmatprep.subr.bf16.mxu0 0
        %2881 = vmatpush1.bf16.msra.mxu0 %v2831
        %2882 = vmatprep.subr.bf16.mxu0 0
        %2883 = vmatpush1.bf16.msra.mxu0 %v2832
        %2884 = vmatprep.subr.bf16.mxu0 0
        %2885 = vmatpush1.bf16.msra.mxu0 %v2833
        %2886 = vmatprep.subr.bf16.mxu0 0
        %2887 = vmatpush1.bf16.msra.mxu0 %v2834
        %2888 = vmatprep.subr.bf16.mxu0 0
        %2889 = vmatpush1.bf16.msra.mxu0 %v2835
        %2890 = vmatprep.subr.bf16.mxu0 0
        %2891 = vmatpush1.bf16.msra.mxu0 %v2836
        %2892 = vmatprep.subr.bf16.mxu0 0
        %2893 = vmatpush1.bf16.msra.mxu0 %v2837
        %2894 = vmatprep.subr.bf16.mxu0 0
        %2895 = vmatpush1.bf16.msra.mxu0 %v2838
        %2896 = vmatprep.subr.bf16.mxu0 0
        %2897 = vmatpush1.bf16.msra.mxu0 %v2839
        %2898 = vmatprep.subr.bf16.mxu0 0
        %2899 = vmatpush1.bf16.msra.mxu0 %v2840
        %2900 = vmatprep.subr.bf16.mxu0 0
        %2901 = vmatpush1.bf16.msra.mxu0 %v2841
        %2902 = vmatprep.subr.bf16.mxu0 0
        %2903 = vmatpush1.bf16.msra.mxu0 %v2842
        %2904 = vmatprep.subr.bf16.mxu0 0
        %2905 = vmatpush1.bf16.msra.mxu0 %v2843
        %2906 = vmatprep.subr.bf16.mxu0 0
        %2907 = vmatpush1.bf16.msra.mxu0 %v2844
        %2908 = vmatprep.subr.bf16.mxu0 0
        %2909 = vmatpush1.bf16.msra.mxu0 %v2845
        %2910 = vmatprep.mubr.bf16.mxu0 %v2638
        %2911 = vmatmul.mubr.bf16.gmra.mrb[0].mxu0 %v2637
        %v2912 = vpop.f32.mrb[0].mxu0
        %v2913 = vadd.f32 0.0, %v2912
        %v2914 = vpop.f32.mrb[0].mxu0
        %v2915 = vpop.f32.mrb[0].mxu0
        %v2916 = vadd.f32 0.0, %v2915
        %v2917 = vpop.f32.mrb[0].mxu0
        %2918 = vmatprep.mubr.bf16.mxu0 %v2641
        %2919 = vmatmul.mubr.bf16.gmra.mrb[0].mxu0 %v2640
        %v2920 = vpop.f32.mrb[0].mxu0
        %v2921 = vadd.f32 0.0, %v2920
        %v2922 = vpop.f32.mrb[0].mxu0
        %v2923 = vpop.f32.mrb[0].mxu0
        %v2924 = vadd.f32 0.0, %v2923
        %v2925 = vpop.f32.mrb[0].mxu0
        %2926 = vmatprep.mubr.bf16.mxu0 %v2644
        %2927 = vmatmul.mubr.bf16.gmra.mrb[0].mxu0 %v2643
        %v2928 = vpop.f32.mrb[0].mxu0
        %v2929 = vadd.f32 0.0, %v2928
        %v2930 = vpop.f32.mrb[0].mxu0
        %v2931 = vpop.f32.mrb[0].mxu0
        %v2932 = vadd.f32 0.0, %v2931
        %v2933 = vpop.f32.mrb[0].mxu0
        %2934 = vmatprep.mubr.bf16.mxu0 %v2647
        %2935 = vmatmul.mubr.bf16.gmra.mrb[0].mxu0 %v2646
        %v2936 = vpop.f32.mrb[0].mxu0
        %v2937 = vadd.f32 0.0, %v2936
        %v2938 = vpop.f32.mrb[0].mxu0
        %v2939 = vpop.f32.mrb[0].mxu0
        %v2940 = vadd.f32 0.0, %v2939
        %v2941 = vpop.f32.mrb[0].mxu0
        %2942 = vmatprep.mubr.bf16.mxu0 %v2650
        %2943 = vmatmul.mubr.bf16.gmra.mrb[0].mxu0 %v2649
        %v2944 = vpop.f32.mrb[0].mxu0
        %v2945 = vadd.f32 0.0, %v2944
        %v2946 = vpop.f32.mrb[0].mxu0
        %v2947 = vpop.f32.mrb[0].mxu0
        %v2948 = vadd.f32 0.0, %v2947
        %v2949 = vpop.f32.mrb[0].mxu0
        %2950 = vmatprep.mubr.bf16.mxu0 %v2653
        %2951 = vmatmul.mubr.bf16.gmra.mrb[0].mxu0 %v2652
        %v2952 = vpop.f32.mrb[0].mxu0
        %v2953 = vadd.f32 0.0, %v2952
        %v2954 = vpop.f32.mrb[0].mxu0
        %v2955 = vpop.f32.mrb[0].mxu0
        %v2956 = vadd.f32 0.0, %v2955
        %v2957 = vpop.f32.mrb[0].mxu0
        %2958 = vmatprep.mubr.bf16.mxu0 %v2656
        %2959 = vmatmul.mubr.bf16.gmra.mrb[0].mxu0 %v2655
        %v2960 = vpop.f32.mrb[0].mxu0
        %v2961 = vadd.f32 0.0, %v2960
        %v2962 = vpop.f32.mrb[0].mxu0
        %v2963 = vpop.f32.mrb[0].mxu0
        %v2964 = vadd.f32 0.0, %v2963
        %v2965 = vpop.f32.mrb[0].mxu0
        %2966 = vmatprep.mubr.bf16.mxu0 %v2659
        %2967 = vmatmul.mubr.bf16.gmra.mrb[0].mxu0 %v2658
        %v2968 = vpop.f32.mrb[0].mxu0
        %v2969 = vadd.f32 0.0, %v2968
        %v2970 = vpop.f32.mrb[0].mxu0
        %v2971 = vpop.f32.mrb[0].mxu0
        %v2972 = vadd.f32 0.0, %v2971
        %v2973 = vpop.f32.mrb[0].mxu0
        %2974 = vmatprep.mubr.bf16.mxu0 %v2662
        %2975 = vmatmul.mubr.bf16.gmra.mrb[0].mxu0 %v2661
        %v2976 = vpop.f32.mrb[0].mxu0
        %v2977 = vadd.f32 0.0, %v2976
        %v2978 = vpop.f32.mrb[0].mxu0
        %v2979 = vpop.f32.mrb[0].mxu0
        %v2980 = vadd.f32 0.0, %v2979
        %v2981 = vpop.f32.mrb[0].mxu0
        %2982 = vmatprep.mubr.bf16.mxu0 %v2665
        %2983 = vmatmul.mubr.bf16.gmra.mrb[0].mxu0 %v2664
        %v2984 = vpop.f32.mrb[0].mxu0
        %v2985 = vadd.f32 0.0, %v2984
        %v2986 = vpop.f32.mrb[0].mxu0
        %v2987 = vpop.f32.mrb[0].mxu0
        %v2988 = vadd.f32 0.0, %v2987
        %v2989 = vpop.f32.mrb[0].mxu0
        %2990 = vmatprep.mubr.bf16.mxu0 %v2668
        %2991 = vmatmul.mubr.bf16.gmra.mrb[0].mxu0 %v2667
        %v2992 = vpop.f32.mrb[0].mxu0
        %v2993 = vadd.f32 0.0, %v2992
        %v2994 = vpop.f32.mrb[0].mxu0
        %v2995 = vpop.f32.mrb[0].mxu0
        %v2996 = vadd.f32 0.0, %v2995
        %v2997 = vpop.f32.mrb[0].mxu0
        %2998 = vmatprep.mubr.bf16.mxu0 %v2671
        %2999 = vmatmul.mubr.bf16.gmra.mrb[0].mxu0 %v2670
        %v3000 = vpop.f32.mrb[0].mxu0
        %v3001 = vadd.f32 0.0, %v3000
        %v3002 = vpop.f32.mrb[0].mxu0
        %v3003 = vpop.f32.mrb[0].mxu0
        %v3004 = vadd.f32 0.0, %v3003
        %v3005 = vpop.f32.mrb[0].mxu0
        %3006 = vmatprep.mubr.bf16.mxu0 %v2674
        %3007 = vmatmul.mubr.bf16.gmra.mrb[0].mxu0 %v2673
        %v3008 = vpop.f32.mrb[0].mxu0
        %v3009 = vadd.f32 0.0, %v3008
        %v3010 = vpop.f32.mrb[0].mxu0
        %v3011 = vpop.f32.mrb[0].mxu0
        %v3012 = vadd.f32 0.0, %v3011
        %v3013 = vpop.f32.mrb[0].mxu0
        %3014 = vmatprep.mubr.bf16.mxu0 %v2677
        %3015 = vmatmul.mubr.bf16.gmra.mrb[0].mxu0 %v2676
        %v3016 = vpop.f32.mrb[0].mxu0
        %v3017 = vadd.f32 0.0, %v3016
        %v3018 = vpop.f32.mrb[0].mxu0
        %v3019 = vpop.f32.mrb[0].mxu0
        %v3020 = vadd.f32 0.0, %v3019
        %v3021 = vpop.f32.mrb[0].mxu0
        %3022 = vmatprep.mubr.bf16.mxu0 %v2680
        %3023 = vmatmul.mubr.bf16.gmra.mrb[0].mxu0 %v2679
        %v3024 = vpop.f32.mrb[0].mxu0
        %v3025 = vadd.f32 0.0, %v3024
        %v3026 = vpop.f32.mrb[0].mxu0
        %v3027 = vpop.f32.mrb[0].mxu0
        %v3028 = vadd.f32 0.0, %v3027
        %v3029 = vpop.f32.mrb[0].mxu0
        %3030 = vmatprep.mubr.bf16.mxu0 %v2683
        %3031 = vmatmul.mubr.bf16.gmra.mrb[0].mxu0 %v2682
        %v3032 = vpop.f32.mrb[0].mxu0
        %v3033 = vadd.f32 0.0, %v3032
        %v3034 = vpop.f32.mrb[0].mxu0
        %v3035 = vpop.f32.mrb[0].mxu0
        %v3036 = vadd.f32 0.0, %v3035
        %v3037 = vpop.f32.mrb[0].mxu0
        %3038 = vdwg.mxu0
        %3039 = vmatprep.subr.bf16.mxu0 0
        %3040 = vmatpush1.bf16.msra.mxu0 %v2846
        %3041 = vmatprep.subr.bf16.mxu0 0
        %3042 = vmatpush1.bf16.msra.mxu0 %v2847
        %3043 = vmatprep.subr.bf16.mxu0 0
        %3044 = vmatpush1.bf16.msra.mxu0 %v2848
        %3045 = vmatprep.subr.bf16.mxu0 0
        %3046 = vmatpush1.bf16.msra.mxu0 %v2849
        %3047 = vmatprep.subr.bf16.mxu0 0
        %3048 = vmatpush1.bf16.msra.mxu0 %v2850
        %3049 = vmatprep.subr.bf16.mxu0 0
        %3050 = vmatpush1.bf16.msra.mxu0 %v2851
        %3051 = vmatprep.subr.bf16.mxu0 0
        %3052 = vmatpush1.bf16.msra.mxu0 %v2852
        %3053 = vmatprep.subr.bf16.mxu0 0
        %3054 = vmatpush1.bf16.msra.mxu0 %v2853
        %3055 = vmatprep.subr.bf16.mxu0 0
        %3056 = vmatpush1.bf16.msra.mxu0 0
        %3057 = vmatprep.subr.bf16.mxu0 0
        %3058 = vmatpush1.bf16.msra.mxu0 0
        %3059 = vmatprep.subr.bf16.mxu0 0
        %3060 = vmatpush1.bf16.msra.mxu0 0
        %3061 = vmatprep.subr.bf16.mxu0 0
        %3062 = vmatpush1.bf16.msra.mxu0 0
        %3063 = vmatprep.subr.bf16.mxu0 0
        %3064 = vmatpush1.bf16.msra.mxu0 0
        %3065 = vmatprep.subr.bf16.mxu0 0
        %3066 = vmatpush1.bf16.msra.mxu0 0
        %3067 = vmatprep.subr.bf16.mxu0 0
        %3068 = vmatpush1.bf16.msra.mxu0 0
        %3069 = vmatprep.subr.bf16.mxu0 0
        %3070 = vmatpush1.bf16.msra.mxu0 0
        %3071 = vmatprep.mubr.bf16.mxu0 0
        %3072 = vmatmul.mubr.bf16.gmra.mrb[0].mxu0 %v2639
        %v3073 = vpop.f32.mrb[0].mxu0
        %v3074 = vadd.f32 %v2913, %v3073
        %v3075 = vpop.f32.mrb[0].mxu0
        %v3076 = vpop.f32.mrb[0].mxu0
        %v3077 = vadd.f32 %v2916, %v3076
        %v3078 = vpop.f32.mrb[0].mxu0
        %3079 = vmatprep.mubr.bf16.mxu0 0
        %3080 = vmatmul.mubr.bf16.gmra.mrb[0].mxu0 %v2642
        %v3081 = vpop.f32.mrb[0].mxu0
        %v3082 = vadd.f32 %v2921, %v3081
        %v3083 = vpop.f32.mrb[0].mxu0
        %v3084 = vpop.f32.mrb[0].mxu0
        %v3085 = vadd.f32 %v2924, %v3084
        %v3086 = vpop.f32.mrb[0].mxu0
        %3087 = vmatprep.mubr.bf16.mxu0 0
        %3088 = vmatmul.mubr.bf16.gmra.mrb[0].mxu0 %v2645
        %v3089 = vpop.f32.mrb[0].mxu0
        %v3090 = vadd.f32 %v2929, %v3089
        %v3091 = vpop.f32.mrb[0].mxu0
        %v3092 = vpop.f32.mrb[0].mxu0
        %v3093 = vadd.f32 %v2932, %v3092
        %v3094 = vpop.f32.mrb[0].mxu0
        %3095 = vmatprep.mubr.bf16.mxu0 0
        %3096 = vmatmul.mubr.bf16.gmra.mrb[0].mxu0 %v2648
        %v3097 = vpop.f32.mrb[0].mxu0
        %v3098 = vadd.f32 %v2937, %v3097
        %v3099 = vpop.f32.mrb[0].mxu0
        %v3100 = vpop.f32.mrb[0].mxu0
        %v3101 = vadd.f32 %v2940, %v3100
        %v3102 = vpop.f32.mrb[0].mxu0
        %3103 = vmatprep.mubr.bf16.mxu0 0
        %3104 = vmatmul.mubr.bf16.gmra.mrb[0].mxu0 %v2651
        %v3105 = vpop.f32.mrb[0].mxu0
        %v3106 = vadd.f32 %v2945, %v3105
        %v3107 = vpop.f32.mrb[0].mxu0
        %v3108 = vpop.f32.mrb[0].mxu0
        %v3109 = vadd.f32 %v2948, %v3108
        %v3110 = vpop.f32.mrb[0].mxu0
        %3111 = vmatprep.mubr.bf16.mxu0 0
        %3112 = vmatmul.mubr.bf16.gmra.mrb[0].mxu0 %v2654
        %v3113 = vpop.f32.mrb[0].mxu0
        %v3114 = vadd.f32 %v2953, %v3113
        %v3115 = vpop.f32.mrb[0].mxu0
        %v3116 = vpop.f32.mrb[0].mxu0
        %v3117 = vadd.f32 %v2956, %v3116
        %v3118 = vpop.f32.mrb[0].mxu0
        %3119 = vmatprep.mubr.bf16.mxu0 0
        %3120 = vmatmul.mubr.bf16.gmra.mrb[0].mxu0 %v2657
        %v3121 = vpop.f32.mrb[0].mxu0
        %v3122 = vadd.f32 %v2961, %v3121
        %v3123 = vpop.f32.mrb[0].mxu0
        %v3124 = vpop.f32.mrb[0].mxu0
        %v3125 = vadd.f32 %v2964, %v3124
        %v3126 = vpop.f32.mrb[0].mxu0
        %3127 = vmatprep.mubr.bf16.mxu0 0
        %3128 = vmatmul.mubr.bf16.gmra.mrb[0].mxu0 %v2660
        %v3129 = vpop.f32.mrb[0].mxu0
        %v3130 = vadd.f32 %v2969, %v3129
        %v3131 = vpop.f32.mrb[0].mxu0
        %v3132 = vpop.f32.mrb[0].mxu0
        %v3133 = vadd.f32 %v2972, %v3132
        %v3134 = vpop.f32.mrb[0].mxu0
        %3135 = vmatprep.mubr.bf16.mxu0 0
        %3136 = vmatmul.mubr.bf16.gmra.mrb[0].mxu0 %v2663
        %v3137 = vpop.f32.mrb[0].mxu0
        %v3138 = vadd.f32 %v2977, %v3137
        %v3139 = vpop.f32.mrb[0].mxu0
        %v3140 = vpop.f32.mrb[0].mxu0
        %v3141 = vadd.f32 %v2980, %v3140
        %v3142 = vpop.f32.mrb[0].mxu0
        %3143 = vmatprep.mubr.bf16.mxu0 0
        %3144 = vmatmul.mubr.bf16.gmra.mrb[0].mxu0 %v2666
        %v3145 = vpop.f32.mrb[0].mxu0
        %v3146 = vadd.f32 %v2985, %v3145
        %v3147 = vpop.f32.mrb[0].mxu0
        %v3148 = vpop.f32.mrb[0].mxu0
        %v3149 = vadd.f32 %v2988, %v3148
        %v3150 = vpop.f32.mrb[0].mxu0
        %3151 = vmatprep.mubr.bf16.mxu0 0
        %3152 = vmatmul.mubr.bf16.gmra.mrb[0].mxu0 %v2669
        %v3153 = vpop.f32.mrb[0].mxu0
        %v3154 = vadd.f32 %v2993, %v3153
        %v3155 = vpop.f32.mrb[0].mxu0
        %v3156 = vpop.f32.mrb[0].mxu0
        %v3157 = vadd.f32 %v2996, %v3156
        %v3158 = vpop.f32.mrb[0].mxu0
        %3159 = vmatprep.mubr.bf16.mxu0 0
        %3160 = vmatmul.mubr.bf16.gmra.mrb[0].mxu0 %v2672
        %v3161 = vpop.f32.mrb[0].mxu0
        %v3162 = vadd.f32 %v3001, %v3161
        %v3163 = vpop.f32.mrb[0].mxu0
        %v3164 = vpop.f32.mrb[0].mxu0
        %v3165 = vadd.f32 %v3004, %v3164
        %v3166 = vpop.f32.mrb[0].mxu0
        %3167 = vmatprep.mubr.bf16.mxu0 0
        %3168 = vmatmul.mubr.bf16.gmra.mrb[0].mxu0 %v2675
        %v3169 = vpop.f32.mrb[0].mxu0
        %v3170 = vadd.f32 %v3009, %v3169
        %v3171 = vpop.f32.mrb[0].mxu0
        %v3172 = vpop.f32.mrb[0].mxu0
        %v3173 = vadd.f32 %v3012, %v3172
        %v3174 = vpop.f32.mrb[0].mxu0
        %3175 = vmatprep.mubr.bf16.mxu0 0
        %3176 = vmatmul.mubr.bf16.gmra.mrb[0].mxu0 %v2678
        %v3177 = vpop.f32.mrb[0].mxu0
        %v3178 = vadd.f32 %v3017, %v3177
        %v3179 = vpop.f32.mrb[0].mxu0
        %v3180 = vpop.f32.mrb[0].mxu0
        %v3181 = vadd.f32 %v3020, %v3180
        %v3182 = vpop.f32.mrb[0].mxu0
        %3183 = vmatprep.mubr.bf16.mxu0 0
        %3184 = vmatmul.mubr.bf16.gmra.mrb[0].mxu0 %v2681
        %v3185 = vpop.f32.mrb[0].mxu0
        %v3186 = vadd.f32 %v3025, %v3185
        %v3187 = vpop.f32.mrb[0].mxu0
        %v3188 = vpop.f32.mrb[0].mxu0
        %v3189 = vadd.f32 %v3028, %v3188
        %v3190 = vpop.f32.mrb[0].mxu0
        %3191 = vmatprep.mubr.bf16.mxu0 0
        %3192 = vmatmul.mubr.bf16.gmra.mrb[0].mxu0 %v2684
        %v3193 = vpop.f32.mrb[0].mxu0
        %v3194 = vadd.f32 %v3033, %v3193
        %v3195 = vpop.f32.mrb[0].mxu0
        %v3196 = vpop.f32.mrb[0].mxu0
        %v3197 = vadd.f32 %v3036, %v3196
        %v3198 = vpop.f32.mrb[0].mxu0
        %3199 = vdwg.mxu0
        %v3200 = vadd.f32 %v2511, %v3074
        %v3201 = vadd.f32 %v2514, %v3077
        %v3202 = vadd.f32 %v2519, %v3082
        %v3203 = vadd.f32 %v2522, %v3085
        %v3204 = vadd.f32 %v2527, %v3090
        %v3205 = vadd.f32 %v2530, %v3093
        %v3206 = vadd.f32 %v2535, %v3098
        %v3207 = vadd.f32 %v2538, %v3101
        %v3208 = vadd.f32 %v2543, %v3106
        %v3209 = vadd.f32 %v2546, %v3109
        %v3210 = vadd.f32 %v2551, %v3114
        %v3211 = vadd.f32 %v2554, %v3117
        %v3212 = vadd.f32 %v2559, %v3122
        %v3213 = vadd.f32 %v2562, %v3125
        %v3214 = vadd.f32 %v2567, %v3130
        %v3215 = vadd.f32 %v2570, %v3133
        %v3216 = vadd.f32 %v2575, %v3138
        %v3217 = vadd.f32 %v2578, %v3141
        %v3218 = vadd.f32 %v2583, %v3146
        %v3219 = vadd.f32 %v2586, %v3149
        %v3220 = vadd.f32 %v2591, %v3154
        %v3221 = vadd.f32 %v2594, %v3157
        %v3222 = vadd.f32 %v2599, %v3162
        %v3223 = vadd.f32 %v2602, %v3165
        %v3224 = vadd.f32 %v2607, %v3170
        %v3225 = vadd.f32 %v2610, %v3173
        %v3226 = vadd.f32 %v2615, %v3178
        %v3227 = vadd.f32 %v2618, %v3181
        %v3228 = vadd.f32 %v2623, %v3186
        %v3229 = vadd.f32 %v2626, %v3189
        %v3230 = vadd.f32 %v2631, %v3194
        %v3231 = vadd.f32 %v2634, %v3197
        %v3232 = vld [vmem:[%s2] sm:$0x1]
        %v3234 = vlaneseq
        %v3235 = vshrl.u32 %v3234, 7
        %v3236 = vsub.s32 0, %v3235
        %v3237 = vrot.slane %v3232, %v3236
        %v3239 = vmul.f32 %v3200, %v3237
        %v3240 = vmul.f32 %v3201, %v3237
        %v3241 = vmul.f32 %v3202, %v3237
        %v3242 = vmul.f32 %v3203, %v3237
        %v3243 = vmul.f32 %v3204, %v3237
        %v3244 = vmul.f32 %v3205, %v3237
        %v3245 = vmul.f32 %v3206, %v3237
        %v3246 = vmul.f32 %v3207, %v3237
        %v3247 = vmul.f32 %v3208, %v3237
        %v3248 = vmul.f32 %v3209, %v3237
        %v3249 = vmul.f32 %v3210, %v3237
        %v3250 = vmul.f32 %v3211, %v3237
        %v3251 = vmul.f32 %v3212, %v3237
        %v3252 = vmul.f32 %v3213, %v3237
        %v3253 = vmul.f32 %v3214, %v3237
        %v3254 = vmul.f32 %v3215, %v3237
        %v3255 = vmul.f32 %v3216, %v3237
        %v3256 = vmul.f32 %v3217, %v3237
        %v3257 = vmul.f32 %v3218, %v3237
        %v3258 = vmul.f32 %v3219, %v3237
        %v3259 = vmul.f32 %v3220, %v3237
        %v3260 = vmul.f32 %v3221, %v3237
        %v3261 = vmul.f32 %v3222, %v3237
        %v3262 = vmul.f32 %v3223, %v3237
        %v3263 = vmul.f32 %v3224, %v3237
        %v3264 = vmul.f32 %v3225, %v3237
        %v3265 = vmul.f32 %v3226, %v3237
        %v3266 = vmul.f32 %v3227, %v3237
        %v3267 = vmul.f32 %v3228, %v3237
        %v3268 = vmul.f32 %v3229, %v3237
        %v3269 = vmul.f32 %v3230, %v3237
        %v3270 = vmul.f32 %v3231, %v3237
        %v3271 = vld [vmem:[%s3] sm:$0x1]
        %v3273 = vlaneseq
        %v3274 = vshrl.u32 %v3273, 7
        %v3275 = vsub.s32 0, %v3274
        %v3276 = vrot.slane %v3271, %v3275
        %v3278 = vadd.f32 %v3239, %v3276
        %v3279 = vadd.f32 %v3240, %v3276
        %v3280 = vadd.f32 %v3241, %v3276
        %v3281 = vadd.f32 %v3242, %v3276
        %v3282 = vadd.f32 %v3243, %v3276
        %v3283 = vadd.f32 %v3244, %v3276
        %v3284 = vadd.f32 %v3245, %v3276
        %v3285 = vadd.f32 %v3246, %v3276
        %v3286 = vadd.f32 %v3247, %v3276
        %v3287 = vadd.f32 %v3248, %v3276
        %v3288 = vadd.f32 %v3249, %v3276
        %v3289 = vadd.f32 %v3250, %v3276
        %v3290 = vadd.f32 %v3251, %v3276
        %v3291 = vadd.f32 %v3252, %v3276
        %v3292 = vadd.f32 %v3253, %v3276
        %v3293 = vadd.f32 %v3254, %v3276
        %v3294 = vadd.f32 %v3255, %v3276
        %v3295 = vadd.f32 %v3256, %v3276
        %v3296 = vadd.f32 %v3257, %v3276
        %v3297 = vadd.f32 %v3258, %v3276
        %v3298 = vadd.f32 %v3259, %v3276
        %v3299 = vadd.f32 %v3260, %v3276
        %v3300 = vadd.f32 %v3261, %v3276
        %v3301 = vadd.f32 %v3262, %v3276
        %v3302 = vadd.f32 %v3263, %v3276
        %v3303 = vadd.f32 %v3264, %v3276
        %v3304 = vadd.f32 %v3265, %v3276
        %v3305 = vadd.f32 %v3266, %v3276
        %v3306 = vadd.f32 %v3267, %v3276
        %v3307 = vadd.f32 %v3268, %v3276
        %v3308 = vadd.f32 %v3269, %v3276
        %v3309 = vadd.f32 %v3270, %v3276
        %v3310 = vmax.f32 %v3278, 0.0
        %v3311 = vmax.f32 %v3279, 0.0
        %v3312 = vmax.f32 %v3280, 0.0
        %v3313 = vmax.f32 %v3281, 0.0
        %v3314 = vmax.f32 %v3282, 0.0
        %v3315 = vmax.f32 %v3283, 0.0
        %v3316 = vmax.f32 %v3284, 0.0
        %v3317 = vmax.f32 %v3285, 0.0
        %v3318 = vmax.f32 %v3286, 0.0
        %v3319 = vmax.f32 %v3287, 0.0
        %v3320 = vmax.f32 %v3288, 0.0
        %v3321 = vmax.f32 %v3289, 0.0
        %v3322 = vmax.f32 %v3290, 0.0
        %v3323 = vmax.f32 %v3291, 0.0
        %v3324 = vmax.f32 %v3292, 0.0
        %v3325 = vmax.f32 %v3293, 0.0
        %v3326 = vmax.f32 %v3294, 0.0
        %v3327 = vmax.f32 %v3295, 0.0
        %v3328 = vmax.f32 %v3296, 0.0
        %v3329 = vmax.f32 %v3297, 0.0
        %v3330 = vmax.f32 %v3298, 0.0
        %v3331 = vmax.f32 %v3299, 0.0
        %v3332 = vmax.f32 %v3300, 0.0
        %v3333 = vmax.f32 %v3301, 0.0
        %v3334 = vmax.f32 %v3302, 0.0
        %v3335 = vmax.f32 %v3303, 0.0
        %v3336 = vmax.f32 %v3304, 0.0
        %v3337 = vmax.f32 %v3305, 0.0
        %v3338 = vmax.f32 %v3306, 0.0
        %v3339 = vmax.f32 %v3307, 0.0
        %v3340 = vmax.f32 %v3308, 0.0
        %v3341 = vmax.f32 %v3309, 0.0
        %v3342 = vpack.c.bf16 %v3311, %v3310
        %v3343 = vpack.c.bf16 %v3313, %v3312
        %v3344 = vpack.c.bf16 %v3315, %v3314
        %v3345 = vpack.c.bf16 %v3317, %v3316
        %v3346 = vpack.c.bf16 %v3319, %v3318
        %v3347 = vpack.c.bf16 %v3321, %v3320
        %v3348 = vpack.c.bf16 %v3323, %v3322
        %v3349 = vpack.c.bf16 %v3325, %v3324
        %v3350 = vpack.c.bf16 %v3327, %v3326
        %v3351 = vpack.c.bf16 %v3329, %v3328
        %v3352 = vpack.c.bf16 %v3331, %v3330
        %v3353 = vpack.c.bf16 %v3333, %v3332
        %v3354 = vpack.c.bf16 %v3335, %v3334
        %v3355 = vpack.c.bf16 %v3337, %v3336
        %v3356 = vpack.c.bf16 %v3339, %v3338
        %v3357 = vpack.c.bf16 %v3341, %v3340
        %3358 = vst [vmem:[#allocation2 + $0x20] sm:$0xff] %v3342
        %3359 = vst [vmem:[#allocation2 + $0x38] sm:$0xff] %v3343
        %3360 = vst [vmem:[#allocation2 + $0x50] sm:$0xff] %v3344
        %3361 = vst [vmem:[#allocation2 + $0x68] sm:$0xff] %v3345
        %3362 = vst [vmem:[#allocation2 + $0x80] sm:$0xff] %v3346
        %3363 = vst [vmem:[#allocation2 + $0x98] sm:$0xff] %v3347
        %3364 = vst [vmem:[#allocation2 + $0xb0] sm:$0xff] %v3348
        %3365 = vst [vmem:[#allocation2 + $0xc8] sm:$0xff] %v3349
        %3366 = vst [vmem:[#allocation2 + $0xe0] sm:$0xff] %v3350
        %3367 = vst [vmem:[#allocation2 + $0xf8] sm:$0xff] %v3351
        %3368 = vst [vmem:[#allocation2 + $0x110] sm:$0xff] %v3352
        %3369 = vst [vmem:[#allocation2 + $0x128] sm:$0xff] %v3353
        %3370 = vst [vmem:[#allocation2 + $0x140] sm:$0xff] %v3354
        %3371 = vst [vmem:[#allocation2 + $0x158] sm:$0xff] %v3355
        %3372 = vst [vmem:[#allocation2 + $0x170] sm:$0xff] %v3356
        %3373 = vst [vmem:[#allocation2 + $0x188] sm:$0xff] %v3357
        %v3374 = vsel %vm1040, %v3342, 0
        %v3375 = vsel %vm1041, %v3343, 0
        %v3376 = vsel %vm1042, %v3344, 0
        %v3377 = vsel %vm1043, %v3345, 0
        %v3378 = vsel %vm1044, %v3346, 0
        %v3379 = vsel %vm1045, %v3347, 0
        %v3380 = vsel %vm1046, %v3348, 0
        %v3381 = vsel %vm1047, %v3349, 0
        %v3382 = vsel %vm1048, %v3350, 0
        %v3383 = vsel %vm1049, %v3351, 0
        %v3384 = vsel %vm1050, %v3352, 0
        %v3385 = vsel %vm1051, %v3353, 0
        %v3386 = vsel %vm1052, %v3354, 0
        %v3387 = vsel %vm1053, %v3355, 0
        %v3388 = vsel %vm1054, %v3356, 0
        %v3389 = vsel %vm1055, %v3357, 0
        %v3391 = vshrl.u32 %v3374, 16
        %v3393 = vrot.slane %v3391, 7
        %v3394 = vshll.u32 %v3374, 16
        %v3396 = vor.u32 %v3393, %v3394
        %v3398 = vshrl.u32 %v3375, 16
        %v3400 = vrot.slane %v3398, 7
        %v3401 = vshll.u32 %v3375, 16
        %v3403 = vor.u32 %v3400, %v3401
        %v3404 = vsel %vm1072, %v3393, %v3403
        %v3406 = vshrl.u32 %v3376, 16
        %v3408 = vrot.slane %v3406, 7
        %v3409 = vshll.u32 %v3376, 16
        %v3411 = vor.u32 %v3408, %v3409
        %v3412 = vsel %vm1072, %v3400, %v3411
        %v3414 = vshrl.u32 %v3377, 16
        %v3416 = vrot.slane %v3414, 7
        %v3417 = vshll.u32 %v3377, 16
        %v3419 = vor.u32 %v3416, %v3417
        %v3420 = vsel %vm1072, %v3408, %v3419
        %v3422 = vshrl.u32 %v3378, 16
        %v3424 = vrot.slane %v3422, 7
        %v3425 = vshll.u32 %v3378, 16
        %v3427 = vor.u32 %v3424, %v3425
        %v3428 = vsel %vm1072, %v3416, %v3427
        %v3430 = vshrl.u32 %v3379, 16
        %v3432 = vrot.slane %v3430, 7
        %v3433 = vshll.u32 %v3379, 16
        %v3435 = vor.u32 %v3432, %v3433
        %v3436 = vsel %vm1072, %v3424, %v3435
        %v3438 = vshrl.u32 %v3380, 16
        %v3440 = vrot.slane %v3438, 7
        %v3441 = vshll.u32 %v3380, 16
        %v3443 = vor.u32 %v3440, %v3441
        %v3444 = vsel %vm1072, %v3432, %v3443
        %v3446 = vshrl.u32 %v3381, 16
        %v3448 = vrot.slane %v3446, 7
        %v3449 = vshll.u32 %v3381, 16
        %v3451 = vor.u32 %v3448, %v3449
        %v3452 = vsel %vm1072, %v3440, %v3451
        %v3454 = vshrl.u32 %v3382, 16
        %v3456 = vrot.slane %v3454, 7
        %v3457 = vshll.u32 %v3382, 16
        %v3459 = vor.u32 %v3456, %v3457
        %v3460 = vsel %vm1072, %v3448, %v3459
        %v3462 = vshrl.u32 %v3383, 16
        %v3464 = vrot.slane %v3462, 7
        %v3465 = vshll.u32 %v3383, 16
        %v3467 = vor.u32 %v3464, %v3465
        %v3468 = vsel %vm1072, %v3456, %v3467
        %v3470 = vshrl.u32 %v3384, 16
        %v3472 = vrot.slane %v3470, 7
        %v3473 = vshll.u32 %v3384, 16
        %v3475 = vor.u32 %v3472, %v3473
        %v3476 = vsel %vm1072, %v3464, %v3475
        %v3478 = vshrl.u32 %v3385, 16
        %v3480 = vrot.slane %v3478, 7
        %v3481 = vshll.u32 %v3385, 16
        %v3483 = vor.u32 %v3480, %v3481
        %v3484 = vsel %vm1072, %v3472, %v3483
        %v3486 = vshrl.u32 %v3386, 16
        %v3488 = vrot.slane %v3486, 7
        %v3489 = vshll.u32 %v3386, 16
        %v3491 = vor.u32 %v3488, %v3489
        %v3492 = vsel %vm1072, %v3480, %v3491
        %v3494 = vshrl.u32 %v3387, 16
        %v3496 = vrot.slane %v3494, 7
        %v3497 = vshll.u32 %v3387, 16
        %v3499 = vor.u32 %v3496, %v3497
        %v3500 = vsel %vm1072, %v3488, %v3499
        %v3502 = vshrl.u32 %v3388, 16
        %v3504 = vrot.slane %v3502, 7
        %v3505 = vshll.u32 %v3388, 16
        %v3507 = vor.u32 %v3504, %v3505
        %v3508 = vsel %vm1072, %v3496, %v3507
        %v3510 = vshrl.u32 %v3389, 16
        %v3512 = vrot.slane %v3510, 7
        %v3513 = vshll.u32 %v3389, 16
        %v3515 = vor.u32 %v3512, %v3513
        %v3516 = vsel %vm1072, %v3504, %v3515
        %v3534 = vld [vmem:[#allocation2 + $0x18] sm:$0xff]
        %v3535 = vsel %vm1219, %v3396, %v3534
        %3536 = vst [vmem:[#allocation2 + $0x18] sm:$0xff] %v3535
        %3537 = vst [vmem:[#allocation2 + $0x30] sm:$0xff] %v3404
        %3538 = vst [vmem:[#allocation2 + $0x48] sm:$0xff] %v3412
        %3539 = vst [vmem:[#allocation2 + $0x60] sm:$0xff] %v3420
        %3540 = vst [vmem:[#allocation2 + $0x78] sm:$0xff] %v3428
        %3541 = vst [vmem:[#allocation2 + $0x90] sm:$0xff] %v3436
        %3542 = vst [vmem:[#allocation2 + $0xa8] sm:$0xff] %v3444
        %3543 = vst [vmem:[#allocation2 + $0xc0] sm:$0xff] %v3452
        %3544 = vst [vmem:[#allocation2 + $0xd8] sm:$0xff] %v3460
        %3545 = vst [vmem:[#allocation2 + $0xf0] sm:$0xff] %v3468
        %3546 = vst [vmem:[#allocation2 + $0x108] sm:$0xff] %v3476
        %3547 = vst [vmem:[#allocation2 + $0x120] sm:$0xff] %v3484
        %3548 = vst [vmem:[#allocation2 + $0x138] sm:$0xff] %v3492
        %3549 = vst [vmem:[#allocation2 + $0x150] sm:$0xff] %v3500
        %3550 = vst [vmem:[#allocation2 + $0x168] sm:$0xff] %v3508
        %3551 = vst [vmem:[#allocation2 + $0x180] sm:$0xff] %v3516
        %v3552 = vld [vmem:[#allocation2 + $0x198] sm:$0x1]
        %v3553 = vsel %vm1239, %v3512, %v3552
        %3554 = vst [vmem:[#allocation2 + $0x198] sm:$0x1] %v3553
        %v3555 = vsel %vm1355, %v3342, 0
        %v3556 = vsel %vm1356, %v3343, 0
        %v3557 = vsel %vm1357, %v3344, 0
        %v3558 = vsel %vm1358, %v3345, 0
        %v3559 = vsel %vm1359, %v3346, 0
        %v3560 = vsel %vm1360, %v3347, 0
        %v3561 = vsel %vm1361, %v3348, 0
        %v3562 = vsel %vm1362, %v3349, 0
        %v3563 = vsel %vm1363, %v3350, 0
        %v3564 = vsel %vm1364, %v3351, 0
        %v3565 = vsel %vm1365, %v3352, 0
        %v3566 = vsel %vm1366, %v3353, 0
        %v3567 = vsel %vm1367, %v3354, 0
        %v3568 = vsel %vm1368, %v3355, 0
        %v3569 = vsel %vm1369, %v3356, 0
        %v3570 = vsel %vm1370, %v3357, 0
        %v3572 = vshll.u32 %v3555, 16
        %v3574 = vrot.slane %v3572, 1
        %v3575 = vshrl.u32 %v3555, 16
        %v3577 = vor.u32 %v3575, %v3574
        %v3579 = vshll.u32 %v3556, 16
        %v3581 = vrot.slane %v3579, 1
        %v3582 = vsel %vm1387, %v3577, %v3581
        %v3583 = vshrl.u32 %v3556, 16
        %v3585 = vor.u32 %v3583, %v3581
        %v3587 = vshll.u32 %v3557, 16
        %v3589 = vrot.slane %v3587, 1
        %v3590 = vsel %vm1387, %v3585, %v3589
        %v3591 = vshrl.u32 %v3557, 16
        %v3593 = vor.u32 %v3591, %v3589
        %v3595 = vshll.u32 %v3558, 16
        %v3597 = vrot.slane %v3595, 1
        %v3598 = vsel %vm1387, %v3593, %v3597
        %v3599 = vshrl.u32 %v3558, 16
        %v3601 = vor.u32 %v3599, %v3597
        %v3603 = vshll.u32 %v3559, 16
        %v3605 = vrot.slane %v3603, 1
        %v3606 = vsel %vm1387, %v3601, %v3605
        %v3607 = vshrl.u32 %v3559, 16
        %v3609 = vor.u32 %v3607, %v3605
        %v3611 = vshll.u32 %v3560, 16
        %v3613 = vrot.slane %v3611, 1
        %v3614 = vsel %vm1387, %v3609, %v3613
        %v3615 = vshrl.u32 %v3560, 16
        %v3617 = vor.u32 %v3615, %v3613
        %v3619 = vshll.u32 %v3561, 16
        %v3621 = vrot.slane %v3619, 1
        %v3622 = vsel %vm1387, %v3617, %v3621
        %v3623 = vshrl.u32 %v3561, 16
        %v3625 = vor.u32 %v3623, %v3621
        %v3627 = vshll.u32 %v3562, 16
        %v3629 = vrot.slane %v3627, 1
        %v3630 = vsel %vm1387, %v3625, %v3629
        %v3631 = vshrl.u32 %v3562, 16
        %v3633 = vor.u32 %v3631, %v3629
        %v3635 = vshll.u32 %v3563, 16
        %v3637 = vrot.slane %v3635, 1
        %v3638 = vsel %vm1387, %v3633, %v3637
        %v3639 = vshrl.u32 %v3563, 16
        %v3641 = vor.u32 %v3639, %v3637
        %v3643 = vshll.u32 %v3564, 16
        %v3645 = vrot.slane %v3643, 1
        %v3646 = vsel %vm1387, %v3641, %v3645
        %v3647 = vshrl.u32 %v3564, 16
        %v3649 = vor.u32 %v3647, %v3645
        %v3651 = vshll.u32 %v3565, 16
        %v3653 = vrot.slane %v3651, 1
        %v3654 = vsel %vm1387, %v3649, %v3653
        %v3655 = vshrl.u32 %v3565, 16
        %v3657 = vor.u32 %v3655, %v3653
        %v3659 = vshll.u32 %v3566, 16
        %v3661 = vrot.slane %v3659, 1
        %v3662 = vsel %vm1387, %v3657, %v3661
        %v3663 = vshrl.u32 %v3566, 16
        %v3665 = vor.u32 %v3663, %v3661
        %v3667 = vshll.u32 %v3567, 16
        %v3669 = vrot.slane %v3667, 1
        %v3670 = vsel %vm1387, %v3665, %v3669
        %v3671 = vshrl.u32 %v3567, 16
        %v3673 = vor.u32 %v3671, %v3669
        %v3675 = vshll.u32 %v3568, 16
        %v3677 = vrot.slane %v3675, 1
        %v3678 = vsel %vm1387, %v3673, %v3677
        %v3679 = vshrl.u32 %v3568, 16
        %v3681 = vor.u32 %v3679, %v3677
        %v3683 = vshll.u32 %v3569, 16
        %v3685 = vrot.slane %v3683, 1
        %v3686 = vsel %vm1387, %v3681, %v3685
        %v3687 = vshrl.u32 %v3569, 16
        %v3689 = vor.u32 %v3687, %v3685
        %v3691 = vshll.u32 %v3570, 16
        %v3693 = vrot.slane %v3691, 1
        %v3694 = vsel %vm1387, %v3689, %v3693
        %v3695 = vshrl.u32 %v3570, 16
        %v3697 = vor.u32 %v3695, %v3693
        %v3715 = vld [vmem:[#allocation2 + $0x10] sm:$0x80]
        %v3716 = vsel %vm1534, %v3574, %v3715
        %3717 = vst [vmem:[#allocation2 + $0x10] sm:$0x80] %v3716
        %3718 = vst [vmem:[#allocation2 + $0x28] sm:$0xff] %v3582
        %3719 = vst [vmem:[#allocation2 + $0x40] sm:$0xff] %v3590
        %3720 = vst [vmem:[#allocation2 + $0x58] sm:$0xff] %v3598
        %3721 = vst [vmem:[#allocation2 + $0x70] sm:$0xff] %v3606
        %3722 = vst [vmem:[#allocation2 + $0x88] sm:$0xff] %v3614
        %3723 = vst [vmem:[#allocation2 + $0xa0] sm:$0xff] %v3622
        %3724 = vst [vmem:[#allocation2 + $0xb8] sm:$0xff] %v3630
        %3725 = vst [vmem:[#allocation2 + $0xd0] sm:$0xff] %v3638
        %3726 = vst [vmem:[#allocation2 + $0xe8] sm:$0xff] %v3646
        %3727 = vst [vmem:[#allocation2 + $0x100] sm:$0xff] %v3654
        %3728 = vst [vmem:[#allocation2 + $0x118] sm:$0xff] %v3662
        %3729 = vst [vmem:[#allocation2 + $0x130] sm:$0xff] %v3670
        %3730 = vst [vmem:[#allocation2 + $0x148] sm:$0xff] %v3678
        %3731 = vst [vmem:[#allocation2 + $0x160] sm:$0xff] %v3686
        %3732 = vst [vmem:[#allocation2 + $0x178] sm:$0xff] %v3694
        %v3733 = vld [vmem:[#allocation2 + $0x190] sm:$0xff]
        %v3734 = vsel %vm1553, %v3697, %v3733
        %3735 = vst [vmem:[#allocation2 + $0x190] sm:$0xff] %v3734
        %v3736 = vld [vmem:[#allocation2] sm:$0xff]
        %v3737 = vld [vmem:[#allocation2 + $0x8] sm:$0xff]
        %v3738 = vld [vmem:[#allocation2 + $0x10] sm:$0xff]
        %v3739 = vld [vmem:[#allocation2 + $0x18] sm:$0xff]
        %v3740 = vld [vmem:[#allocation2 + $0x20] sm:$0xff]
        %v3741 = vld [vmem:[#allocation2 + $0x28] sm:$0xff]
        %v3742 = vld [vmem:[#allocation2 + $0x30] sm:$0xff]
        %v3743 = vld [vmem:[#allocation2 + $0x38] sm:$0xff]
        %v3744 = vld [vmem:[#allocation2 + $0x40] sm:$0xff]
        %v3745 = vld [vmem:[#allocation2 + $0x48] sm:$0xff]
        %v3746 = vld [vmem:[#allocation2 + $0x50] sm:$0xff]
        %v3747 = vld [vmem:[#allocation2 + $0x58] sm:$0xff]
        %v3748 = vld [vmem:[#allocation2 + $0x60] sm:$0xff]
        %v3749 = vld [vmem:[#allocation2 + $0x68] sm:$0xff]
        %v3750 = vld [vmem:[#allocation2 + $0x70] sm:$0xff]
        %v3751 = vld [vmem:[#allocation2 + $0x78] sm:$0xff]
        %v3752 = vld [vmem:[#allocation2 + $0x80] sm:$0xff]
        %v3753 = vld [vmem:[#allocation2 + $0x88] sm:$0xff]
        %v3754 = vld [vmem:[#allocation2 + $0x90] sm:$0xff]
        %v3755 = vld [vmem:[#allocation2 + $0x98] sm:$0xff]
        %v3756 = vld [vmem:[#allocation2 + $0xa0] sm:$0xff]
        %v3757 = vld [vmem:[#allocation2 + $0xa8] sm:$0xff]
        %v3758 = vld [vmem:[#allocation2 + $0xb0] sm:$0xff]
        %v3759 = vld [vmem:[#allocation2 + $0xb8] sm:$0xff]
        %v3760 = vld [vmem:[#allocation2 + $0xc0] sm:$0xff]
        %v3761 = vld [vmem:[#allocation2 + $0xc8] sm:$0xff]
        %v3762 = vld [vmem:[#allocation2 + $0xd0] sm:$0xff]
        %v3763 = vld [vmem:[#allocation2 + $0xd8] sm:$0xff]
        %v3764 = vld [vmem:[#allocation2 + $0xe0] sm:$0xff]
        %v3765 = vld [vmem:[#allocation2 + $0xe8] sm:$0xff]
        %v3766 = vld [vmem:[#allocation2 + $0xf0] sm:$0xff]
        %v3767 = vld [vmem:[#allocation2 + $0xf8] sm:$0xff]
        %v3768 = vld [vmem:[#allocation2 + $0x100] sm:$0xff]
        %v3769 = vld [vmem:[#allocation2 + $0x108] sm:$0xff]
        %v3770 = vld [vmem:[#allocation2 + $0x110] sm:$0xff]
        %v3771 = vld [vmem:[#allocation2 + $0x118] sm:$0xff]
        %v3772 = vld [vmem:[#allocation2 + $0x120] sm:$0xff]
        %v3773 = vld [vmem:[#allocation2 + $0x128] sm:$0xff]
        %v3774 = vld [vmem:[#allocation2 + $0x130] sm:$0xff]
        %v3775 = vld [vmem:[#allocation2 + $0x138] sm:$0xff]
        %v3776 = vld [vmem:[#allocation2 + $0x140] sm:$0xff]
        %v3777 = vld [vmem:[#allocation2 + $0x148] sm:$0xff]
        %v3778 = vld [vmem:[#allocation2 + $0x150] sm:$0xff]
        %v3779 = vld [vmem:[#allocation2 + $0x158] sm:$0xff]
        %v3780 = vld [vmem:[#allocation2 + $0x160] sm:$0xff]
        %v3781 = vld [vmem:[#allocation2 + $0x168] sm:$0xff]
        %v3782 = vld [vmem:[#allocation2 + $0x170] sm:$0xff]
        %v3783 = vld [vmem:[#allocation2 + $0x178] sm:$0xff]
        %v3784 = vld [vmem:[#allocation8] sm:$0xf]
        %v3785 = vld [vmem:[#allocation8 + $0x4] sm:$0xf]
        %v3786 = vld [vmem:[#allocation8 + $0x8] sm:$0xf]
        %v3787 = vld [vmem:[#allocation8 + $0xc] sm:$0xf]
        %v3788 = vld [vmem:[#allocation8 + $0x10] sm:$0xf]
        %v3789 = vld [vmem:[#allocation8 + $0x14] sm:$0xf]
        %v3790 = vld [vmem:[#allocation8 + $0x18] sm:$0xf]
        %v3791 = vld [vmem:[#allocation8 + $0x1c] sm:$0xf]
        %v3792 = vld [vmem:[#allocation8 + $0x20] sm:$0xf]
        %v3793 = vld [vmem:[#allocation8 + $0x24] sm:$0xf]
        %v3794 = vld [vmem:[#allocation8 + $0x28] sm:$0xf]
        %v3795 = vld [vmem:[#allocation8 + $0x2c] sm:$0xf]
        %v3796 = vld [vmem:[#allocation8 + $0x30] sm:$0xf]
        %v3797 = vld [vmem:[#allocation8 + $0x34] sm:$0xf]
        %v3798 = vld [vmem:[#allocation8 + $0x38] sm:$0xf]
        %v3799 = vld [vmem:[#allocation8 + $0x3c] sm:$0xf]
        %v3800 = vld [vmem:[#allocation8 + $0x40] sm:$0xf]
        %v3801 = vld [vmem:[#allocation8 + $0x44] sm:$0xf]
        %v3802 = vld [vmem:[#allocation8 + $0x48] sm:$0xf]
        %v3803 = vld [vmem:[#allocation8 + $0x4c] sm:$0xf]
        %v3804 = vld [vmem:[#allocation8 + $0x50] sm:$0xf]
        %v3805 = vld [vmem:[#allocation8 + $0x54] sm:$0xf]
        %v3806 = vld [vmem:[#allocation8 + $0x58] sm:$0xf]
        %v3807 = vld [vmem:[#allocation8 + $0x5c] sm:$0xf]
        %v3808 = vld [vmem:[#allocation8 + $0x60] sm:$0xf]
        %v3809 = vld [vmem:[#allocation8 + $0x64] sm:$0xf]
        %v3810 = vld [vmem:[#allocation8 + $0x68] sm:$0xf]
        %v3811 = vld [vmem:[#allocation8 + $0x6c] sm:$0xf]
        %v3812 = vld [vmem:[#allocation8 + $0x70] sm:$0xf]
        %v3813 = vld [vmem:[#allocation8 + $0x74] sm:$0xf]
        %v3814 = vld [vmem:[#allocation8 + $0x78] sm:$0xf]
        %v3815 = vld [vmem:[#allocation8 + $0x7c] sm:$0xf]
        %v3816 = vld [vmem:[#allocation8 + $0x80] sm:$0xf]
        %v3817 = vld [vmem:[#allocation8 + $0x84] sm:$0xf]
        %v3818 = vld [vmem:[#allocation8 + $0x88] sm:$0xf]
        %v3819 = vld [vmem:[#allocation8 + $0x8c] sm:$0xf]
        %v3820 = vld [vmem:[#allocation8 + $0x90] sm:$0xf]
        %v3821 = vld [vmem:[#allocation8 + $0x94] sm:$0xf]
        %v3822 = vld [vmem:[#allocation8 + $0x98] sm:$0xf]
        %v3823 = vld [vmem:[#allocation8 + $0x9c] sm:$0xf]
        %v3824 = vld [vmem:[#allocation8 + $0xa0] sm:$0xf]
        %v3825 = vld [vmem:[#allocation8 + $0xa4] sm:$0xf]
        %v3826 = vld [vmem:[#allocation8 + $0xa8] sm:$0xf]
        %v3827 = vld [vmem:[#allocation8 + $0xac] sm:$0xf]
        %v3828 = vld [vmem:[#allocation8 + $0xb0] sm:$0xf]
        %v3829 = vld [vmem:[#allocation8 + $0xb4] sm:$0xf]
        %v3830 = vld [vmem:[#allocation8 + $0xb8] sm:$0xf]
        %v3831 = vld [vmem:[#allocation8 + $0xbc] sm:$0xf]
        %v3832 = vld [vmem:[#allocation2 + $0x180] sm:$0xff]
        %v3833 = vld [vmem:[#allocation2 + $0x188] sm:$0xff]
        %v3834 = vld [vmem:[#allocation2 + $0x190] sm:$0xff]
        %s3835 = scalar_lea.vmem [#allocation8], 192
        %v3836 = vld [vmem:[%s3835] sm:$0xf]
        %v3837 = vld [vmem:[%s3835 + $0x4] sm:$0xf]
        %v3838 = vld [vmem:[%s3835 + $0x8] sm:$0xf]
        %v3839 = vld [vmem:[%s3835 + $0xc] sm:$0xf]
        %v3840 = vld [vmem:[%s3835 + $0x10] sm:$0xf]
        %v3841 = vld [vmem:[%s3835 + $0x14] sm:$0xf]
        %v3842 = vld [vmem:[%s3835 + $0x18] sm:$0xf]
        %v3843 = vld [vmem:[%s3835 + $0x1c] sm:$0xf]
        %v3844 = vld [vmem:[%s3835 + $0x20] sm:$0xf]
        %v3845 = vld [vmem:[%s3835 + $0x24] sm:$0xf]
        %v3846 = vld [vmem:[%s3835 + $0x28] sm:$0xf]
        %v3847 = vld [vmem:[%s3835 + $0x2c] sm:$0xf]
        %v3848 = vld [vmem:[%s3835 + $0x30] sm:$0xf]
        %v3849 = vld [vmem:[%s3835 + $0x34] sm:$0xf]
        %v3850 = vld [vmem:[%s3835 + $0x38] sm:$0xf]
        %v3851 = vld [vmem:[%s3835 + $0x3c] sm:$0xf]
        %v3852 = vld [vmem:[%s3835 + $0x40] sm:$0xf]
        %v3853 = vld [vmem:[%s3835 + $0x44] sm:$0xf]
        %v3854 = vld [vmem:[%s3835 + $0x48] sm:$0xf]
        %v3855 = vld [vmem:[%s3835 + $0x4c] sm:$0xf]
        %v3856 = vld [vmem:[%s3835 + $0x50] sm:$0xf]
        %v3857 = vld [vmem:[%s3835 + $0x54] sm:$0xf]
        %v3858 = vld [vmem:[%s3835 + $0x58] sm:$0xf]
        %v3859 = vld [vmem:[%s3835 + $0x5c] sm:$0xf]
        %v3860 = vld [vmem:[%s3835 + $0x60] sm:$0xf]
        %v3861 = vld [vmem:[%s3835 + $0x64] sm:$0xf]
        %v3862 = vld [vmem:[%s3835 + $0x68] sm:$0xf]
        %v3863 = vld [vmem:[%s3835 + $0x6c] sm:$0xf]
        %v3864 = vld [vmem:[%s3835 + $0x70] sm:$0xf]
        %v3865 = vld [vmem:[%s3835 + $0x74] sm:$0xf]
        %v3866 = vld [vmem:[%s3835 + $0x78] sm:$0xf]
        %v3867 = vld [vmem:[%s3835 + $0x7c] sm:$0xf]
        %v3868 = vld [vmem:[%s3835 + $0x80] sm:$0xf]
        %v3869 = vld [vmem:[%s3835 + $0x84] sm:$0xf]
        %v3870 = vld [vmem:[%s3835 + $0x88] sm:$0xf]
        %v3871 = vld [vmem:[%s3835 + $0x8c] sm:$0xf]
        %v3872 = vld [vmem:[%s3835 + $0x90] sm:$0xf]
        %v3873 = vld [vmem:[%s3835 + $0x94] sm:$0xf]
        %v3874 = vld [vmem:[%s3835 + $0x98] sm:$0xf]
        %v3875 = vld [vmem:[%s3835 + $0x9c] sm:$0xf]
        %v3876 = vld [vmem:[%s3835 + $0xa0] sm:$0xf]
        %v3877 = vld [vmem:[%s3835 + $0xa4] sm:$0xf]
        %v3878 = vld [vmem:[%s3835 + $0xa8] sm:$0xf]
        %v3879 = vld [vmem:[%s3835 + $0xac] sm:$0xf]
        %v3880 = vld [vmem:[%s3835 + $0xb0] sm:$0xf]
        %v3881 = vld [vmem:[%s3835 + $0xb4] sm:$0xf]
        %v3882 = vld [vmem:[%s3835 + $0xb8] sm:$0xf]
        %v3883 = vld [vmem:[%s3835 + $0xbc] sm:$0xf]
        %v3932 = vunpack.c.l.b16 %v3836
        %v3933 = vunpack.c.l.b16 %v3837
        %v3934 = vunpack.c.l.b16 %v3838
        %v3935 = vunpack.c.l.b16 %v3839
        %v3936 = vunpack.c.l.b16 %v3840
        %v3937 = vunpack.c.l.b16 %v3841
        %v3938 = vunpack.c.l.b16 %v3842
        %v3939 = vunpack.c.l.b16 %v3843
        %v3940 = vunpack.c.l.b16 %v3844
        %v3941 = vunpack.c.l.b16 %v3845
        %v3942 = vunpack.c.l.b16 %v3846
        %v3943 = vunpack.c.l.b16 %v3847
        %v3944 = vunpack.c.l.b16 %v3848
        %v3945 = vunpack.c.l.b16 %v3849
        %v3946 = vunpack.c.l.b16 %v3850
        %v3947 = vunpack.c.l.b16 %v3851
        %v3948 = vunpack.c.l.b16 %v3852
        %v3949 = vunpack.c.l.b16 %v3853
        %v3950 = vunpack.c.l.b16 %v3854
        %v3951 = vunpack.c.l.b16 %v3855
        %v3952 = vunpack.c.l.b16 %v3856
        %v3953 = vunpack.c.l.b16 %v3857
        %v3954 = vunpack.c.l.b16 %v3858
        %v3955 = vunpack.c.l.b16 %v3859
        %v3956 = vunpack.c.l.b16 %v3860
        %v3957 = vunpack.c.l.b16 %v3861
        %v3958 = vunpack.c.l.b16 %v3862
        %v3959 = vunpack.c.l.b16 %v3863
        %v3960 = vunpack.c.l.b16 %v3864
        %v3961 = vunpack.c.l.b16 %v3865
        %v3962 = vunpack.c.l.b16 %v3866
        %v3963 = vunpack.c.l.b16 %v3867
        %v3964 = vunpack.c.l.b16 %v3868
        %v3965 = vunpack.c.l.b16 %v3869
        %v3966 = vunpack.c.l.b16 %v3870
        %v3967 = vunpack.c.l.b16 %v3871
        %v3968 = vunpack.c.l.b16 %v3872
        %v3969 = vunpack.c.l.b16 %v3873
        %v3970 = vunpack.c.l.b16 %v3874
        %v3971 = vunpack.c.l.b16 %v3875
        %v3972 = vunpack.c.l.b16 %v3876
        %v3973 = vunpack.c.l.b16 %v3877
        %v3974 = vunpack.c.l.b16 %v3878
        %v3975 = vunpack.c.l.b16 %v3879
        %v3976 = vunpack.c.l.b16 %v3880
        %v3977 = vunpack.c.l.b16 %v3881
        %v3978 = vunpack.c.l.b16 %v3882
        %v3979 = vunpack.c.l.b16 %v3883
        %v3980 = vpack.c.b16 %v3933, %v3932
        %v3981 = vpack.c.b16 %v3935, %v3934
        %v3982 = vpack.c.b16 %v3937, %v3936
        %v3983 = vpack.c.b16 %v3939, %v3938
        %v3984 = vpack.c.b16 %v3941, %v3940
        %v3985 = vpack.c.b16 %v3943, %v3942
        %v3986 = vpack.c.b16 %v3945, %v3944
        %v3987 = vpack.c.b16 %v3947, %v3946
        %v3988 = vpack.c.b16 %v3949, %v3948
        %v3989 = vpack.c.b16 %v3951, %v3950
        %v3990 = vpack.c.b16 %v3953, %v3952
        %v3991 = vpack.c.b16 %v3955, %v3954
        %v3992 = vpack.c.b16 %v3957, %v3956
        %v3993 = vpack.c.b16 %v3959, %v3958
        %v3994 = vpack.c.b16 %v3961, %v3960
        %v3995 = vpack.c.b16 %v3963, %v3962
        %v3996 = vpack.c.b16 %v3965, %v3964
        %v3997 = vpack.c.b16 %v3967, %v3966
        %v3998 = vpack.c.b16 %v3969, %v3968
        %v3999 = vpack.c.b16 %v3971, %v3970
        %v4000 = vpack.c.b16 %v3973, %v3972
        %v4001 = vpack.c.b16 %v3975, %v3974
        %v4002 = vpack.c.b16 %v3977, %v3976
        %v4003 = vpack.c.b16 %v3979, %v3978
        %4028 = vmatprep.subr.bf16.mxu0 0
        %4029 = vmatpush1.bf16.msra.mxu0 %v3980
        %4030 = vmatprep.subr.bf16.mxu0 0
        %4031 = vmatpush1.bf16.msra.mxu0 %v3981
        %4032 = vmatprep.subr.bf16.mxu0 0
        %4033 = vmatpush1.bf16.msra.mxu0 %v3982
        %4034 = vmatprep.subr.bf16.mxu0 0
        %4035 = vmatpush1.bf16.msra.mxu0 %v3983
        %4036 = vmatprep.subr.bf16.mxu0 0
        %4037 = vmatpush1.bf16.msra.mxu0 %v3984
        %4038 = vmatprep.subr.bf16.mxu0 0
        %4039 = vmatpush1.bf16.msra.mxu0 %v3985
        %4040 = vmatprep.subr.bf16.mxu0 0
        %4041 = vmatpush1.bf16.msra.mxu0 %v3986
        %4042 = vmatprep.subr.bf16.mxu0 0
        %4043 = vmatpush1.bf16.msra.mxu0 %v3987
        %4044 = vmatprep.subr.bf16.mxu0 0
        %4045 = vmatpush1.bf16.msra.mxu0 %v3988
        %4046 = vmatprep.subr.bf16.mxu0 0
        %4047 = vmatpush1.bf16.msra.mxu0 %v3989
        %4048 = vmatprep.subr.bf16.mxu0 0
        %4049 = vmatpush1.bf16.msra.mxu0 %v3990
        %4050 = vmatprep.subr.bf16.mxu0 0
        %4051 = vmatpush1.bf16.msra.mxu0 %v3991
        %4052 = vmatprep.subr.bf16.mxu0 0
        %4053 = vmatpush1.bf16.msra.mxu0 %v3992
        %4054 = vmatprep.subr.bf16.mxu0 0
        %4055 = vmatpush1.bf16.msra.mxu0 %v3993
        %4056 = vmatprep.subr.bf16.mxu0 0
        %4057 = vmatpush1.bf16.msra.mxu0 %v3994
        %4058 = vmatprep.subr.bf16.mxu0 0
        %4059 = vmatpush1.bf16.msra.mxu0 %v3995
        %4060 = vmatprep.mubr.bf16.mxu0 %v3740
        %4061 = vmatmul.mubr.bf16.gmra.mrb[0].mxu0 %v3739
        %v4062 = vpop.f32.mrb[0].mxu0
        %v4063 = vadd.f32 0.0, %v4062
        %v4064 = vpop.f32.mrb[0].mxu0
        %v4065 = vpop.f32.mrb[0].mxu0
        %v4066 = vadd.f32 0.0, %v4065
        %v4067 = vpop.f32.mrb[0].mxu0
        %4068 = vmatprep.mubr.bf16.mxu0 %v3743
        %4069 = vmatmul.mubr.bf16.gmra.mrb[0].mxu0 %v3742
        %v4070 = vpop.f32.mrb[0].mxu0
        %v4071 = vadd.f32 0.0, %v4070
        %v4072 = vpop.f32.mrb[0].mxu0
        %v4073 = vpop.f32.mrb[0].mxu0
        %v4074 = vadd.f32 0.0, %v4073
        %v4075 = vpop.f32.mrb[0].mxu0
        %4076 = vmatprep.mubr.bf16.mxu0 %v3746
        %4077 = vmatmul.mubr.bf16.gmra.mrb[0].mxu0 %v3745
        %v4078 = vpop.f32.mrb[0].mxu0
        %v4079 = vadd.f32 0.0, %v4078
        %v4080 = vpop.f32.mrb[0].mxu0
        %v4081 = vpop.f32.mrb[0].mxu0
        %v4082 = vadd.f32 0.0, %v4081
        %v4083 = vpop.f32.mrb[0].mxu0
        %4084 = vmatprep.mubr.bf16.mxu0 %v3749
        %4085 = vmatmul.mubr.bf16.gmra.mrb[0].mxu0 %v3748
        %v4086 = vpop.f32.mrb[0].mxu0
        %v4087 = vadd.f32 0.0, %v4086
        %v4088 = vpop.f32.mrb[0].mxu0
        %v4089 = vpop.f32.mrb[0].mxu0
        %v4090 = vadd.f32 0.0, %v4089
        %v4091 = vpop.f32.mrb[0].mxu0
        %4092 = vmatprep.mubr.bf16.mxu0 %v3752
        %4093 = vmatmul.mubr.bf16.gmra.mrb[0].mxu0 %v3751
        %v4094 = vpop.f32.mrb[0].mxu0
        %v4095 = vadd.f32 0.0, %v4094
        %v4096 = vpop.f32.mrb[0].mxu0
        %v4097 = vpop.f32.mrb[0].mxu0
        %v4098 = vadd.f32 0.0, %v4097
        %v4099 = vpop.f32.mrb[0].mxu0
        %4100 = vmatprep.mubr.bf16.mxu0 %v3755
        %4101 = vmatmul.mubr.bf16.gmra.mrb[0].mxu0 %v3754
        %v4102 = vpop.f32.mrb[0].mxu0
        %v4103 = vadd.f32 0.0, %v4102
        %v4104 = vpop.f32.mrb[0].mxu0
        %v4105 = vpop.f32.mrb[0].mxu0
        %v4106 = vadd.f32 0.0, %v4105
        %v4107 = vpop.f32.mrb[0].mxu0
        %4108 = vmatprep.mubr.bf16.mxu0 %v3758
        %4109 = vmatmul.mubr.bf16.gmra.mrb[0].mxu0 %v3757
        %v4110 = vpop.f32.mrb[0].mxu0
        %v4111 = vadd.f32 0.0, %v4110
        %v4112 = vpop.f32.mrb[0].mxu0
        %v4113 = vpop.f32.mrb[0].mxu0
        %v4114 = vadd.f32 0.0, %v4113
        %v4115 = vpop.f32.mrb[0].mxu0
        %4116 = vmatprep.mubr.bf16.mxu0 %v3761
        %4117 = vmatmul.mubr.bf16.gmra.mrb[0].mxu0 %v3760
        %v4118 = vpop.f32.mrb[0].mxu0
        %v4119 = vadd.f32 0.0, %v4118
        %v4120 = vpop.f32.mrb[0].mxu0
        %v4121 = vpop.f32.mrb[0].mxu0
        %v4122 = vadd.f32 0.0, %v4121
        %v4123 = vpop.f32.mrb[0].mxu0
        %4124 = vmatprep.mubr.bf16.mxu0 %v3764
        %4125 = vmatmul.mubr.bf16.gmra.mrb[0].mxu0 %v3763
        %v4126 = vpop.f32.mrb[0].mxu0
        %v4127 = vadd.f32 0.0, %v4126
        %v4128 = vpop.f32.mrb[0].mxu0
        %v4129 = vpop.f32.mrb[0].mxu0
        %v4130 = vadd.f32 0.0, %v4129
        %v4131 = vpop.f32.mrb[0].mxu0
        %4132 = vmatprep.mubr.bf16.mxu0 %v3767
        %4133 = vmatmul.mubr.bf16.gmra.mrb[0].mxu0 %v3766
        %v4134 = vpop.f32.mrb[0].mxu0
        %v4135 = vadd.f32 0.0, %v4134
        %v4136 = vpop.f32.mrb[0].mxu0
        %v4137 = vpop.f32.mrb[0].mxu0
        %v4138 = vadd.f32 0.0, %v4137
        %v4139 = vpop.f32.mrb[0].mxu0
        %4140 = vmatprep.mubr.bf16.mxu0 %v3770
        %4141 = vmatmul.mubr.bf16.gmra.mrb[0].mxu0 %v3769
        %v4142 = vpop.f32.mrb[0].mxu0
        %v4143 = vadd.f32 0.0, %v4142
        %v4144 = vpop.f32.mrb[0].mxu0
        %v4145 = vpop.f32.mrb[0].mxu0
        %v4146 = vadd.f32 0.0, %v4145
        %v4147 = vpop.f32.mrb[0].mxu0
        %4148 = vmatprep.mubr.bf16.mxu0 %v3773
        %4149 = vmatmul.mubr.bf16.gmra.mrb[0].mxu0 %v3772
        %v4150 = vpop.f32.mrb[0].mxu0
        %v4151 = vadd.f32 0.0, %v4150
        %v4152 = vpop.f32.mrb[0].mxu0
        %v4153 = vpop.f32.mrb[0].mxu0
        %v4154 = vadd.f32 0.0, %v4153
        %v4155 = vpop.f32.mrb[0].mxu0
        %4156 = vmatprep.mubr.bf16.mxu0 %v3776
        %4157 = vmatmul.mubr.bf16.gmra.mrb[0].mxu0 %v3775
        %v4158 = vpop.f32.mrb[0].mxu0
        %v4159 = vadd.f32 0.0, %v4158
        %v4160 = vpop.f32.mrb[0].mxu0
        %v4161 = vpop.f32.mrb[0].mxu0
        %v4162 = vadd.f32 0.0, %v4161
        %v4163 = vpop.f32.mrb[0].mxu0
        %4164 = vmatprep.mubr.bf16.mxu0 %v3779
        %4165 = vmatmul.mubr.bf16.gmra.mrb[0].mxu0 %v3778
        %v4166 = vpop.f32.mrb[0].mxu0
        %v4167 = vadd.f32 0.0, %v4166
        %v4168 = vpop.f32.mrb[0].mxu0
        %v4169 = vpop.f32.mrb[0].mxu0
        %v4170 = vadd.f32 0.0, %v4169
        %v4171 = vpop.f32.mrb[0].mxu0
        %4172 = vmatprep.mubr.bf16.mxu0 %v3782
        %4173 = vmatmul.mubr.bf16.gmra.mrb[0].mxu0 %v3781
        %v4174 = vpop.f32.mrb[0].mxu0
        %v4175 = vadd.f32 0.0, %v4174
        %v4176 = vpop.f32.mrb[0].mxu0
        %v4177 = vpop.f32.mrb[0].mxu0
        %v4178 = vadd.f32 0.0, %v4177
        %v4179 = vpop.f32.mrb[0].mxu0
        %4180 = vmatprep.mubr.bf16.mxu0 %v3833
        %4181 = vmatmul.mubr.bf16.gmra.mrb[0].mxu0 %v3832
        %v4182 = vpop.f32.mrb[0].mxu0
        %v4183 = vadd.f32 0.0, %v4182
        %v4184 = vpop.f32.mrb[0].mxu0
        %v4185 = vpop.f32.mrb[0].mxu0
        %v4186 = vadd.f32 0.0, %v4185
        %v4187 = vpop.f32.mrb[0].mxu0
        %4188 = vdwg.mxu0
        %4189 = vmatprep.subr.bf16.mxu0 0
        %4190 = vmatpush1.bf16.msra.mxu0 %v3996
        %4191 = vmatprep.subr.bf16.mxu0 0
        %4192 = vmatpush1.bf16.msra.mxu0 %v3997
        %4193 = vmatprep.subr.bf16.mxu0 0
        %4194 = vmatpush1.bf16.msra.mxu0 %v3998
        %4195 = vmatprep.subr.bf16.mxu0 0
        %4196 = vmatpush1.bf16.msra.mxu0 %v3999
        %4197 = vmatprep.subr.bf16.mxu0 0
        %4198 = vmatpush1.bf16.msra.mxu0 %v4000
        %4199 = vmatprep.subr.bf16.mxu0 0
        %4200 = vmatpush1.bf16.msra.mxu0 %v4001
        %4201 = vmatprep.subr.bf16.mxu0 0
        %4202 = vmatpush1.bf16.msra.mxu0 %v4002
        %4203 = vmatprep.subr.bf16.mxu0 0
        %4204 = vmatpush1.bf16.msra.mxu0 %v4003
        %4205 = vmatprep.subr.bf16.mxu0 0
        %4206 = vmatpush1.bf16.msra.mxu0 0
        %4207 = vmatprep.subr.bf16.mxu0 0
        %4208 = vmatpush1.bf16.msra.mxu0 0
        %4209 = vmatprep.subr.bf16.mxu0 0
        %4210 = vmatpush1.bf16.msra.mxu0 0
        %4211 = vmatprep.subr.bf16.mxu0 0
        %4212 = vmatpush1.bf16.msra.mxu0 0
        %4213 = vmatprep.subr.bf16.mxu0 0
        %4214 = vmatpush1.bf16.msra.mxu0 0
        %4215 = vmatprep.subr.bf16.mxu0 0
        %4216 = vmatpush1.bf16.msra.mxu0 0
        %4217 = vmatprep.subr.bf16.mxu0 0
        %4218 = vmatpush1.bf16.msra.mxu0 0
        %4219 = vmatprep.subr.bf16.mxu0 0
        %4220 = vmatpush1.bf16.msra.mxu0 0
        %4221 = vmatprep.mubr.bf16.mxu0 0
        %4222 = vmatmul.mubr.bf16.gmra.mrb[0].mxu0 %v3741
        %v4223 = vpop.f32.mrb[0].mxu0
        %v4224 = vadd.f32 %v4063, %v4223
        %v4225 = vpop.f32.mrb[0].mxu0
        %v4226 = vpop.f32.mrb[0].mxu0
        %v4227 = vadd.f32 %v4066, %v4226
        %v4228 = vpop.f32.mrb[0].mxu0
        %4229 = vmatprep.mubr.bf16.mxu0 0
        %4230 = vmatmul.mubr.bf16.gmra.mrb[0].mxu0 %v3744
        %v4231 = vpop.f32.mrb[0].mxu0
        %v4232 = vadd.f32 %v4071, %v4231
        %v4233 = vpop.f32.mrb[0].mxu0
        %v4234 = vpop.f32.mrb[0].mxu0
        %v4235 = vadd.f32 %v4074, %v4234
        %v4236 = vpop.f32.mrb[0].mxu0
        %4237 = vmatprep.mubr.bf16.mxu0 0
        %4238 = vmatmul.mubr.bf16.gmra.mrb[0].mxu0 %v3747
        %v4239 = vpop.f32.mrb[0].mxu0
        %v4240 = vadd.f32 %v4079, %v4239
        %v4241 = vpop.f32.mrb[0].mxu0
        %v4242 = vpop.f32.mrb[0].mxu0
        %v4243 = vadd.f32 %v4082, %v4242
        %v4244 = vpop.f32.mrb[0].mxu0
        %4245 = vmatprep.mubr.bf16.mxu0 0
        %4246 = vmatmul.mubr.bf16.gmra.mrb[0].mxu0 %v3750
        %v4247 = vpop.f32.mrb[0].mxu0
        %v4248 = vadd.f32 %v4087, %v4247
        %v4249 = vpop.f32.mrb[0].mxu0
        %v4250 = vpop.f32.mrb[0].mxu0
        %v4251 = vadd.f32 %v4090, %v4250
        %v4252 = vpop.f32.mrb[0].mxu0
        %4253 = vmatprep.mubr.bf16.mxu0 0
        %4254 = vmatmul.mubr.bf16.gmra.mrb[0].mxu0 %v3753
        %v4255 = vpop.f32.mrb[0].mxu0
        %v4256 = vadd.f32 %v4095, %v4255
        %v4257 = vpop.f32.mrb[0].mxu0
        %v4258 = vpop.f32.mrb[0].mxu0
        %v4259 = vadd.f32 %v4098, %v4258
        %v4260 = vpop.f32.mrb[0].mxu0
        %4261 = vmatprep.mubr.bf16.mxu0 0
        %4262 = vmatmul.mubr.bf16.gmra.mrb[0].mxu0 %v3756
        %v4263 = vpop.f32.mrb[0].mxu0
        %v4264 = vadd.f32 %v4103, %v4263
        %v4265 = vpop.f32.mrb[0].mxu0
        %v4266 = vpop.f32.mrb[0].mxu0
        %v4267 = vadd.f32 %v4106, %v4266
        %v4268 = vpop.f32.mrb[0].mxu0
        %4269 = vmatprep.mubr.bf16.mxu0 0
        %4270 = vmatmul.mubr.bf16.gmra.mrb[0].mxu0 %v3759
        %v4271 = vpop.f32.mrb[0].mxu0
        %v4272 = vadd.f32 %v4111, %v4271
        %v4273 = vpop.f32.mrb[0].mxu0
        %v4274 = vpop.f32.mrb[0].mxu0
        %v4275 = vadd.f32 %v4114, %v4274
        %v4276 = vpop.f32.mrb[0].mxu0
        %4277 = vmatprep.mubr.bf16.mxu0 0
        %4278 = vmatmul.mubr.bf16.gmra.mrb[0].mxu0 %v3762
        %v4279 = vpop.f32.mrb[0].mxu0
        %v4280 = vadd.f32 %v4119, %v4279
        %v4281 = vpop.f32.mrb[0].mxu0
        %v4282 = vpop.f32.mrb[0].mxu0
        %v4283 = vadd.f32 %v4122, %v4282
        %v4284 = vpop.f32.mrb[0].mxu0
        %4285 = vmatprep.mubr.bf16.mxu0 0
        %4286 = vmatmul.mubr.bf16.gmra.mrb[0].mxu0 %v3765
        %v4287 = vpop.f32.mrb[0].mxu0
        %v4288 = vadd.f32 %v4127, %v4287
        %v4289 = vpop.f32.mrb[0].mxu0
        %v4290 = vpop.f32.mrb[0].mxu0
        %v4291 = vadd.f32 %v4130, %v4290
        %v4292 = vpop.f32.mrb[0].mxu0
        %4293 = vmatprep.mubr.bf16.mxu0 0
        %4294 = vmatmul.mubr.bf16.gmra.mrb[0].mxu0 %v3768
        %v4295 = vpop.f32.mrb[0].mxu0
        %v4296 = vadd.f32 %v4135, %v4295
        %v4297 = vpop.f32.mrb[0].mxu0
        %v4298 = vpop.f32.mrb[0].mxu0
        %v4299 = vadd.f32 %v4138, %v4298
        %v4300 = vpop.f32.mrb[0].mxu0
        %4301 = vmatprep.mubr.bf16.mxu0 0
        %4302 = vmatmul.mubr.bf16.gmra.mrb[0].mxu0 %v3771
        %v4303 = vpop.f32.mrb[0].mxu0
        %v4304 = vadd.f32 %v4143, %v4303
        %v4305 = vpop.f32.mrb[0].mxu0
        %v4306 = vpop.f32.mrb[0].mxu0
        %v4307 = vadd.f32 %v4146, %v4306
        %v4308 = vpop.f32.mrb[0].mxu0
        %4309 = vmatprep.mubr.bf16.mxu0 0
        %4310 = vmatmul.mubr.bf16.gmra.mrb[0].mxu0 %v3774
        %v4311 = vpop.f32.mrb[0].mxu0
        %v4312 = vadd.f32 %v4151, %v4311
        %v4313 = vpop.f32.mrb[0].mxu0
        %v4314 = vpop.f32.mrb[0].mxu0
        %v4315 = vadd.f32 %v4154, %v4314
        %v4316 = vpop.f32.mrb[0].mxu0
        %4317 = vmatprep.mubr.bf16.mxu0 0
        %4318 = vmatmul.mubr.bf16.gmra.mrb[0].mxu0 %v3777
        %v4319 = vpop.f32.mrb[0].mxu0
        %v4320 = vadd.f32 %v4159, %v4319
        %v4321 = vpop.f32.mrb[0].mxu0
        %v4322 = vpop.f32.mrb[0].mxu0
        %v4323 = vadd.f32 %v4162, %v4322
        %v4324 = vpop.f32.mrb[0].mxu0
        %4325 = vmatprep.mubr.bf16.mxu0 0
        %4326 = vmatmul.mubr.bf16.gmra.mrb[0].mxu0 %v3780
        %v4327 = vpop.f32.mrb[0].mxu0
        %v4328 = vadd.f32 %v4167, %v4327
        %v4329 = vpop.f32.mrb[0].mxu0
        %v4330 = vpop.f32.mrb[0].mxu0
        %v4331 = vadd.f32 %v4170, %v4330
        %v4332 = vpop.f32.mrb[0].mxu0
        %4333 = vmatprep.mubr.bf16.mxu0 0
        %4334 = vmatmul.mubr.bf16.gmra.mrb[0].mxu0 %v3783
        %v4335 = vpop.f32.mrb[0].mxu0
        %v4336 = vadd.f32 %v4175, %v4335
        %v4337 = vpop.f32.mrb[0].mxu0
        %v4338 = vpop.f32.mrb[0].mxu0
        %v4339 = vadd.f32 %v4178, %v4338
        %v4340 = vpop.f32.mrb[0].mxu0
        %4341 = vmatprep.mubr.bf16.mxu0 0
        %4342 = vmatmul.mubr.bf16.gmra.mrb[0].mxu0 %v3834
        %v4343 = vpop.f32.mrb[0].mxu0
        %v4344 = vadd.f32 %v4183, %v4343
        %v4345 = vpop.f32.mrb[0].mxu0
        %v4346 = vpop.f32.mrb[0].mxu0
        %v4347 = vadd.f32 %v4186, %v4346
        %v4348 = vpop.f32.mrb[0].mxu0
        %4349 = vdwg.mxu0
        %v4398 = vunpack.c.l.b16 %v3784
        %v4399 = vunpack.c.l.b16 %v3785
        %v4400 = vunpack.c.l.b16 %v3786
        %v4401 = vunpack.c.l.b16 %v3787
        %v4402 = vunpack.c.l.b16 %v3788
        %v4403 = vunpack.c.l.b16 %v3789
        %v4404 = vunpack.c.l.b16 %v3790
        %v4405 = vunpack.c.l.b16 %v3791
        %v4406 = vunpack.c.l.b16 %v3792
        %v4407 = vunpack.c.l.b16 %v3793
        %v4408 = vunpack.c.l.b16 %v3794
        %v4409 = vunpack.c.l.b16 %v3795
        %v4410 = vunpack.c.l.b16 %v3796
        %v4411 = vunpack.c.l.b16 %v3797
        %v4412 = vunpack.c.l.b16 %v3798
        %v4413 = vunpack.c.l.b16 %v3799
        %v4414 = vunpack.c.l.b16 %v3800
        %v4415 = vunpack.c.l.b16 %v3801
        %v4416 = vunpack.c.l.b16 %v3802
        %v4417 = vunpack.c.l.b16 %v3803
        %v4418 = vunpack.c.l.b16 %v3804
        %v4419 = vunpack.c.l.b16 %v3805
        %v4420 = vunpack.c.l.b16 %v3806
        %v4421 = vunpack.c.l.b16 %v3807
        %v4422 = vunpack.c.l.b16 %v3808
        %v4423 = vunpack.c.l.b16 %v3809
        %v4424 = vunpack.c.l.b16 %v3810
        %v4425 = vunpack.c.l.b16 %v3811
        %v4426 = vunpack.c.l.b16 %v3812
        %v4427 = vunpack.c.l.b16 %v3813
        %v4428 = vunpack.c.l.b16 %v3814
        %v4429 = vunpack.c.l.b16 %v3815
        %v4430 = vunpack.c.l.b16 %v3816
        %v4431 = vunpack.c.l.b16 %v3817
        %v4432 = vunpack.c.l.b16 %v3818
        %v4433 = vunpack.c.l.b16 %v3819
        %v4434 = vunpack.c.l.b16 %v3820
        %v4435 = vunpack.c.l.b16 %v3821
        %v4436 = vunpack.c.l.b16 %v3822
        %v4437 = vunpack.c.l.b16 %v3823
        %v4438 = vunpack.c.l.b16 %v3824
        %v4439 = vunpack.c.l.b16 %v3825
        %v4440 = vunpack.c.l.b16 %v3826
        %v4441 = vunpack.c.l.b16 %v3827
        %v4442 = vunpack.c.l.b16 %v3828
        %v4443 = vunpack.c.l.b16 %v3829
        %v4444 = vunpack.c.l.b16 %v3830
        %v4445 = vunpack.c.l.b16 %v3831
        %v4446 = vpack.c.b16 %v4399, %v4398
        %v4447 = vpack.c.b16 %v4401, %v4400
        %v4448 = vpack.c.b16 %v4403, %v4402
        %v4449 = vpack.c.b16 %v4405, %v4404
        %v4450 = vpack.c.b16 %v4407, %v4406
        %v4451 = vpack.c.b16 %v4409, %v4408
        %v4452 = vpack.c.b16 %v4411, %v4410
        %v4453 = vpack.c.b16 %v4413, %v4412
        %v4454 = vpack.c.b16 %v4415, %v4414
        %v4455 = vpack.c.b16 %v4417, %v4416
        %v4456 = vpack.c.b16 %v4419, %v4418
        %v4457 = vpack.c.b16 %v4421, %v4420
        %v4458 = vpack.c.b16 %v4423, %v4422
        %v4459 = vpack.c.b16 %v4425, %v4424
        %v4460 = vpack.c.b16 %v4427, %v4426
        %v4461 = vpack.c.b16 %v4429, %v4428
        %v4462 = vpack.c.b16 %v4431, %v4430
        %v4463 = vpack.c.b16 %v4433, %v4432
        %v4464 = vpack.c.b16 %v4435, %v4434
        %v4465 = vpack.c.b16 %v4437, %v4436
        %v4466 = vpack.c.b16 %v4439, %v4438
        %v4467 = vpack.c.b16 %v4441, %v4440
        %v4468 = vpack.c.b16 %v4443, %v4442
        %v4469 = vpack.c.b16 %v4445, %v4444
        %4494 = vmatprep.subr.bf16.mxu0 0
        %4495 = vmatpush1.bf16.msra.mxu0 %v4446
        %4496 = vmatprep.subr.bf16.mxu0 0
        %4497 = vmatpush1.bf16.msra.mxu0 %v4447
        %4498 = vmatprep.subr.bf16.mxu0 0
        %4499 = vmatpush1.bf16.msra.mxu0 %v4448
        %4500 = vmatprep.subr.bf16.mxu0 0
        %4501 = vmatpush1.bf16.msra.mxu0 %v4449
        %4502 = vmatprep.subr.bf16.mxu0 0
        %4503 = vmatpush1.bf16.msra.mxu0 %v4450
        %4504 = vmatprep.subr.bf16.mxu0 0
        %4505 = vmatpush1.bf16.msra.mxu0 %v4451
        %4506 = vmatprep.subr.bf16.mxu0 0
        %4507 = vmatpush1.bf16.msra.mxu0 %v4452
        %4508 = vmatprep.subr.bf16.mxu0 0
        %4509 = vmatpush1.bf16.msra.mxu0 %v4453
        %4510 = vmatprep.subr.bf16.mxu0 0
        %4511 = vmatpush1.bf16.msra.mxu0 %v4454
        %4512 = vmatprep.subr.bf16.mxu0 0
        %4513 = vmatpush1.bf16.msra.mxu0 %v4455
        %4514 = vmatprep.subr.bf16.mxu0 0
        %4515 = vmatpush1.bf16.msra.mxu0 %v4456
        %4516 = vmatprep.subr.bf16.mxu0 0
        %4517 = vmatpush1.bf16.msra.mxu0 %v4457
        %4518 = vmatprep.subr.bf16.mxu0 0
        %4519 = vmatpush1.bf16.msra.mxu0 %v4458
        %4520 = vmatprep.subr.bf16.mxu0 0
        %4521 = vmatpush1.bf16.msra.mxu0 %v4459
        %4522 = vmatprep.subr.bf16.mxu0 0
        %4523 = vmatpush1.bf16.msra.mxu0 %v4460
        %4524 = vmatprep.subr.bf16.mxu0 0
        %4525 = vmatpush1.bf16.msra.mxu0 %v4461
        %4526 = vmatprep.mubr.bf16.mxu0 %v3737
        %4527 = vmatmul.mubr.bf16.gmra.mrb[0].mxu0 %v3736
        %v4528 = vpop.f32.mrb[0].mxu0
        %v4529 = vadd.f32 %v4224, %v4528
        %v4530 = vpop.f32.mrb[0].mxu0
        %v4531 = vpop.f32.mrb[0].mxu0
        %v4532 = vadd.f32 %v4227, %v4531
        %v4533 = vpop.f32.mrb[0].mxu0
        %4534 = vmatprep.mubr.bf16.mxu0 %v3740
        %4535 = vmatmul.mubr.bf16.gmra.mrb[0].mxu0 %v3739
        %v4536 = vpop.f32.mrb[0].mxu0
        %v4537 = vadd.f32 %v4232, %v4536
        %v4538 = vpop.f32.mrb[0].mxu0
        %v4539 = vpop.f32.mrb[0].mxu0
        %v4540 = vadd.f32 %v4235, %v4539
        %v4541 = vpop.f32.mrb[0].mxu0
        %4542 = vmatprep.mubr.bf16.mxu0 %v3743
        %4543 = vmatmul.mubr.bf16.gmra.mrb[0].mxu0 %v3742
        %v4544 = vpop.f32.mrb[0].mxu0
        %v4545 = vadd.f32 %v4240, %v4544
        %v4546 = vpop.f32.mrb[0].mxu0
        %v4547 = vpop.f32.mrb[0].mxu0
        %v4548 = vadd.f32 %v4243, %v4547
        %v4549 = vpop.f32.mrb[0].mxu0
        %4550 = vmatprep.mubr.bf16.mxu0 %v3746
        %4551 = vmatmul.mubr.bf16.gmra.mrb[0].mxu0 %v3745
        %v4552 = vpop.f32.mrb[0].mxu0
        %v4553 = vadd.f32 %v4248, %v4552
        %v4554 = vpop.f32.mrb[0].mxu0
        %v4555 = vpop.f32.mrb[0].mxu0
        %v4556 = vadd.f32 %v4251, %v4555
        %v4557 = vpop.f32.mrb[0].mxu0
        %4558 = vmatprep.mubr.bf16.mxu0 %v3749
        %4559 = vmatmul.mubr.bf16.gmra.mrb[0].mxu0 %v3748
        %v4560 = vpop.f32.mrb[0].mxu0
        %v4561 = vadd.f32 %v4256, %v4560
        %v4562 = vpop.f32.mrb[0].mxu0
        %v4563 = vpop.f32.mrb[0].mxu0
        %v4564 = vadd.f32 %v4259, %v4563
        %v4565 = vpop.f32.mrb[0].mxu0
        %4566 = vmatprep.mubr.bf16.mxu0 %v3752
        %4567 = vmatmul.mubr.bf16.gmra.mrb[0].mxu0 %v3751
        %v4568 = vpop.f32.mrb[0].mxu0
        %v4569 = vadd.f32 %v4264, %v4568
        %v4570 = vpop.f32.mrb[0].mxu0
        %v4571 = vpop.f32.mrb[0].mxu0
        %v4572 = vadd.f32 %v4267, %v4571
        %v4573 = vpop.f32.mrb[0].mxu0
        %4574 = vmatprep.mubr.bf16.mxu0 %v3755
        %4575 = vmatmul.mubr.bf16.gmra.mrb[0].mxu0 %v3754
        %v4576 = vpop.f32.mrb[0].mxu0
        %v4577 = vadd.f32 %v4272, %v4576
        %v4578 = vpop.f32.mrb[0].mxu0
        %v4579 = vpop.f32.mrb[0].mxu0
        %v4580 = vadd.f32 %v4275, %v4579
        %v4581 = vpop.f32.mrb[0].mxu0
        %4582 = vmatprep.mubr.bf16.mxu0 %v3758
        %4583 = vmatmul.mubr.bf16.gmra.mrb[0].mxu0 %v3757
        %v4584 = vpop.f32.mrb[0].mxu0
        %v4585 = vadd.f32 %v4280, %v4584
        %v4586 = vpop.f32.mrb[0].mxu0
        %v4587 = vpop.f32.mrb[0].mxu0
        %v4588 = vadd.f32 %v4283, %v4587
        %v4589 = vpop.f32.mrb[0].mxu0
        %4590 = vmatprep.mubr.bf16.mxu0 %v3761
        %4591 = vmatmul.mubr.bf16.gmra.mrb[0].mxu0 %v3760
        %v4592 = vpop.f32.mrb[0].mxu0
        %v4593 = vadd.f32 %v4288, %v4592
        %v4594 = vpop.f32.mrb[0].mxu0
        %v4595 = vpop.f32.mrb[0].mxu0
        %v4596 = vadd.f32 %v4291, %v4595
        %v4597 = vpop.f32.mrb[0].mxu0
        %4598 = vmatprep.mubr.bf16.mxu0 %v3764
        %4599 = vmatmul.mubr.bf16.gmra.mrb[0].mxu0 %v3763
        %v4600 = vpop.f32.mrb[0].mxu0
        %v4601 = vadd.f32 %v4296, %v4600
        %v4602 = vpop.f32.mrb[0].mxu0
        %v4603 = vpop.f32.mrb[0].mxu0
        %v4604 = vadd.f32 %v4299, %v4603
        %v4605 = vpop.f32.mrb[0].mxu0
        %4606 = vmatprep.mubr.bf16.mxu0 %v3767
        %4607 = vmatmul.mubr.bf16.gmra.mrb[0].mxu0 %v3766
        %v4608 = vpop.f32.mrb[0].mxu0
        %v4609 = vadd.f32 %v4304, %v4608
        %v4610 = vpop.f32.mrb[0].mxu0
        %v4611 = vpop.f32.mrb[0].mxu0
        %v4612 = vadd.f32 %v4307, %v4611
        %v4613 = vpop.f32.mrb[0].mxu0
        %4614 = vmatprep.mubr.bf16.mxu0 %v3770
        %4615 = vmatmul.mubr.bf16.gmra.mrb[0].mxu0 %v3769
        %v4616 = vpop.f32.mrb[0].mxu0
        %v4617 = vadd.f32 %v4312, %v4616
        %v4618 = vpop.f32.mrb[0].mxu0
        %v4619 = vpop.f32.mrb[0].mxu0
        %v4620 = vadd.f32 %v4315, %v4619
        %v4621 = vpop.f32.mrb[0].mxu0
        %4622 = vmatprep.mubr.bf16.mxu0 %v3773
        %4623 = vmatmul.mubr.bf16.gmra.mrb[0].mxu0 %v3772
        %v4624 = vpop.f32.mrb[0].mxu0
        %v4625 = vadd.f32 %v4320, %v4624
        %v4626 = vpop.f32.mrb[0].mxu0
        %v4627 = vpop.f32.mrb[0].mxu0
        %v4628 = vadd.f32 %v4323, %v4627
        %v4629 = vpop.f32.mrb[0].mxu0
        %4630 = vmatprep.mubr.bf16.mxu0 %v3776
        %4631 = vmatmul.mubr.bf16.gmra.mrb[0].mxu0 %v3775
        %v4632 = vpop.f32.mrb[0].mxu0
        %v4633 = vadd.f32 %v4328, %v4632
        %v4634 = vpop.f32.mrb[0].mxu0
        %v4635 = vpop.f32.mrb[0].mxu0
        %v4636 = vadd.f32 %v4331, %v4635
        %v4637 = vpop.f32.mrb[0].mxu0
        %4638 = vmatprep.mubr.bf16.mxu0 %v3779
        %4639 = vmatmul.mubr.bf16.gmra.mrb[0].mxu0 %v3778
        %v4640 = vpop.f32.mrb[0].mxu0
        %v4641 = vadd.f32 %v4336, %v4640
        %v4642 = vpop.f32.mrb[0].mxu0
        %v4643 = vpop.f32.mrb[0].mxu0
        %v4644 = vadd.f32 %v4339, %v4643
        %v4645 = vpop.f32.mrb[0].mxu0
        %4646 = vmatprep.mubr.bf16.mxu0 %v3782
        %4647 = vmatmul.mubr.bf16.gmra.mrb[0].mxu0 %v3781
        %v4648 = vpop.f32.mrb[0].mxu0
        %v4649 = vadd.f32 %v4344, %v4648
        %v4650 = vpop.f32.mrb[0].mxu0
        %v4651 = vpop.f32.mrb[0].mxu0
        %v4652 = vadd.f32 %v4347, %v4651
        %v4653 = vpop.f32.mrb[0].mxu0
        %4654 = vdwg.mxu0
        %4655 = vmatprep.subr.bf16.mxu0 0
        %4656 = vmatpush1.bf16.msra.mxu0 %v4462
        %4657 = vmatprep.subr.bf16.mxu0 0
        %4658 = vmatpush1.bf16.msra.mxu0 %v4463
        %4659 = vmatprep.subr.bf16.mxu0 0
        %4660 = vmatpush1.bf16.msra.mxu0 %v4464
        %4661 = vmatprep.subr.bf16.mxu0 0
        %4662 = vmatpush1.bf16.msra.mxu0 %v4465
        %4663 = vmatprep.subr.bf16.mxu0 0
        %4664 = vmatpush1.bf16.msra.mxu0 %v4466
        %4665 = vmatprep.subr.bf16.mxu0 0
        %4666 = vmatpush1.bf16.msra.mxu0 %v4467
        %4667 = vmatprep.subr.bf16.mxu0 0
        %4668 = vmatpush1.bf16.msra.mxu0 %v4468
        %4669 = vmatprep.subr.bf16.mxu0 0
        %4670 = vmatpush1.bf16.msra.mxu0 %v4469
        %4671 = vmatprep.subr.bf16.mxu0 0
        %4672 = vmatpush1.bf16.msra.mxu0 0
        %4673 = vmatprep.subr.bf16.mxu0 0
        %4674 = vmatpush1.bf16.msra.mxu0 0
        %4675 = vmatprep.subr.bf16.mxu0 0
        %4676 = vmatpush1.bf16.msra.mxu0 0
        %4677 = vmatprep.subr.bf16.mxu0 0
        %4678 = vmatpush1.bf16.msra.mxu0 0
        %4679 = vmatprep.subr.bf16.mxu0 0
        %4680 = vmatpush1.bf16.msra.mxu0 0
        %4681 = vmatprep.subr.bf16.mxu0 0
        %4682 = vmatpush1.bf16.msra.mxu0 0
        %4683 = vmatprep.subr.bf16.mxu0 0
        %4684 = vmatpush1.bf16.msra.mxu0 0
        %4685 = vmatprep.subr.bf16.mxu0 0
        %4686 = vmatpush1.bf16.msra.mxu0 0
        %4687 = vmatprep.mubr.bf16.mxu0 0
        %4688 = vmatmul.mubr.bf16.gmra.mrb[0].mxu0 %v3738
        %v4689 = vpop.f32.mrb[0].mxu0
        %v4690 = vadd.f32 %v4529, %v4689
        %v4691 = vpop.f32.mrb[0].mxu0
        %v4692 = vpop.f32.mrb[0].mxu0
        %v4693 = vadd.f32 %v4532, %v4692
        %v4694 = vpop.f32.mrb[0].mxu0
        %4695 = vmatprep.mubr.bf16.mxu0 0
        %4696 = vmatmul.mubr.bf16.gmra.mrb[0].mxu0 %v3741
        %v4697 = vpop.f32.mrb[0].mxu0
        %v4698 = vadd.f32 %v4537, %v4697
        %v4699 = vpop.f32.mrb[0].mxu0
        %v4700 = vpop.f32.mrb[0].mxu0
        %v4701 = vadd.f32 %v4540, %v4700
        %v4702 = vpop.f32.mrb[0].mxu0
        %4703 = vmatprep.mubr.bf16.mxu0 0
        %4704 = vmatmul.mubr.bf16.gmra.mrb[0].mxu0 %v3744
        %v4705 = vpop.f32.mrb[0].mxu0
        %v4706 = vadd.f32 %v4545, %v4705
        %v4707 = vpop.f32.mrb[0].mxu0
        %v4708 = vpop.f32.mrb[0].mxu0
        %v4709 = vadd.f32 %v4548, %v4708
        %v4710 = vpop.f32.mrb[0].mxu0
        %4711 = vmatprep.mubr.bf16.mxu0 0
        %4712 = vmatmul.mubr.bf16.gmra.mrb[0].mxu0 %v3747
        %v4713 = vpop.f32.mrb[0].mxu0
        %v4714 = vadd.f32 %v4553, %v4713
        %v4715 = vpop.f32.mrb[0].mxu0
        %v4716 = vpop.f32.mrb[0].mxu0
        %v4717 = vadd.f32 %v4556, %v4716
        %v4718 = vpop.f32.mrb[0].mxu0
        %4719 = vmatprep.mubr.bf16.mxu0 0
        %4720 = vmatmul.mubr.bf16.gmra.mrb[0].mxu0 %v3750
        %v4721 = vpop.f32.mrb[0].mxu0
        %v4722 = vadd.f32 %v4561, %v4721
        %v4723 = vpop.f32.mrb[0].mxu0
        %v4724 = vpop.f32.mrb[0].mxu0
        %v4725 = vadd.f32 %v4564, %v4724
        %v4726 = vpop.f32.mrb[0].mxu0
        %4727 = vmatprep.mubr.bf16.mxu0 0
        %4728 = vmatmul.mubr.bf16.gmra.mrb[0].mxu0 %v3753
        %v4729 = vpop.f32.mrb[0].mxu0
        %v4730 = vadd.f32 %v4569, %v4729
        %v4731 = vpop.f32.mrb[0].mxu0
        %v4732 = vpop.f32.mrb[0].mxu0
        %v4733 = vadd.f32 %v4572, %v4732
        %v4734 = vpop.f32.mrb[0].mxu0
        %4735 = vmatprep.mubr.bf16.mxu0 0
        %4736 = vmatmul.mubr.bf16.gmra.mrb[0].mxu0 %v3756
        %v4737 = vpop.f32.mrb[0].mxu0
        %v4738 = vadd.f32 %v4577, %v4737
        %v4739 = vpop.f32.mrb[0].mxu0
        %v4740 = vpop.f32.mrb[0].mxu0
        %v4741 = vadd.f32 %v4580, %v4740
        %v4742 = vpop.f32.mrb[0].mxu0
        %4743 = vmatprep.mubr.bf16.mxu0 0
        %4744 = vmatmul.mubr.bf16.gmra.mrb[0].mxu0 %v3759
        %v4745 = vpop.f32.mrb[0].mxu0
        %v4746 = vadd.f32 %v4585, %v4745
        %v4747 = vpop.f32.mrb[0].mxu0
        %v4748 = vpop.f32.mrb[0].mxu0
        %v4749 = vadd.f32 %v4588, %v4748
        %v4750 = vpop.f32.mrb[0].mxu0
        %4751 = vmatprep.mubr.bf16.mxu0 0
        %4752 = vmatmul.mubr.bf16.gmra.mrb[0].mxu0 %v3762
        %v4753 = vpop.f32.mrb[0].mxu0
        %v4754 = vadd.f32 %v4593, %v4753
        %v4755 = vpop.f32.mrb[0].mxu0
        %v4756 = vpop.f32.mrb[0].mxu0
        %v4757 = vadd.f32 %v4596, %v4756
        %v4758 = vpop.f32.mrb[0].mxu0
        %4759 = vmatprep.mubr.bf16.mxu0 0
        %4760 = vmatmul.mubr.bf16.gmra.mrb[0].mxu0 %v3765
        %v4761 = vpop.f32.mrb[0].mxu0
        %v4762 = vadd.f32 %v4601, %v4761
        %v4763 = vpop.f32.mrb[0].mxu0
        %v4764 = vpop.f32.mrb[0].mxu0
        %v4765 = vadd.f32 %v4604, %v4764
        %v4766 = vpop.f32.mrb[0].mxu0
        %4767 = vmatprep.mubr.bf16.mxu0 0
        %4768 = vmatmul.mubr.bf16.gmra.mrb[0].mxu0 %v3768
        %v4769 = vpop.f32.mrb[0].mxu0
        %v4770 = vadd.f32 %v4609, %v4769
        %v4771 = vpop.f32.mrb[0].mxu0
        %v4772 = vpop.f32.mrb[0].mxu0
        %v4773 = vadd.f32 %v4612, %v4772
        %v4774 = vpop.f32.mrb[0].mxu0
        %4775 = vmatprep.mubr.bf16.mxu0 0
        %4776 = vmatmul.mubr.bf16.gmra.mrb[0].mxu0 %v3771
        %v4777 = vpop.f32.mrb[0].mxu0
        %v4778 = vadd.f32 %v4617, %v4777
        %v4779 = vpop.f32.mrb[0].mxu0
        %v4780 = vpop.f32.mrb[0].mxu0
        %v4781 = vadd.f32 %v4620, %v4780
        %v4782 = vpop.f32.mrb[0].mxu0
        %4783 = vmatprep.mubr.bf16.mxu0 0
        %4784 = vmatmul.mubr.bf16.gmra.mrb[0].mxu0 %v3774
        %v4785 = vpop.f32.mrb[0].mxu0
        %v4786 = vadd.f32 %v4625, %v4785
        %v4787 = vpop.f32.mrb[0].mxu0
        %v4788 = vpop.f32.mrb[0].mxu0
        %v4789 = vadd.f32 %v4628, %v4788
        %v4790 = vpop.f32.mrb[0].mxu0
        %4791 = vmatprep.mubr.bf16.mxu0 0
        %4792 = vmatmul.mubr.bf16.gmra.mrb[0].mxu0 %v3777
        %v4793 = vpop.f32.mrb[0].mxu0
        %v4794 = vadd.f32 %v4633, %v4793
        %v4795 = vpop.f32.mrb[0].mxu0
        %v4796 = vpop.f32.mrb[0].mxu0
        %v4797 = vadd.f32 %v4636, %v4796
        %v4798 = vpop.f32.mrb[0].mxu0
        %4799 = vmatprep.mubr.bf16.mxu0 0
        %4800 = vmatmul.mubr.bf16.gmra.mrb[0].mxu0 %v3780
        %v4801 = vpop.f32.mrb[0].mxu0
        %v4802 = vadd.f32 %v4641, %v4801
        %v4803 = vpop.f32.mrb[0].mxu0
        %v4804 = vpop.f32.mrb[0].mxu0
        %v4805 = vadd.f32 %v4644, %v4804
        %v4806 = vpop.f32.mrb[0].mxu0
        %4807 = vmatprep.mubr.bf16.mxu0 0
        %4808 = vmatmul.mubr.bf16.gmra.mrb[0].mxu0 %v3783
        %v4809 = vpop.f32.mrb[0].mxu0
        %v4810 = vadd.f32 %v4649, %v4809
        %v4811 = vpop.f32.mrb[0].mxu0
        %v4812 = vpop.f32.mrb[0].mxu0
        %v4813 = vadd.f32 %v4652, %v4812
        %v4814 = vpop.f32.mrb[0].mxu0
        %4815 = vdwg.mxu0
        %v4816 = vld [vmem:[#allocation2 + $0x30] sm:$0xff]
        %v4817 = vld [vmem:[#allocation2 + $0x38] sm:$0xff]
        %v4818 = vld [vmem:[#allocation2 + $0x40] sm:$0xff]
        %v4819 = vld [vmem:[#allocation2 + $0x48] sm:$0xff]
        %v4820 = vld [vmem:[#allocation2 + $0x50] sm:$0xff]
        %v4821 = vld [vmem:[#allocation2 + $0x58] sm:$0xff]
        %v4822 = vld [vmem:[#allocation2 + $0x60] sm:$0xff]
        %v4823 = vld [vmem:[#allocation2 + $0x68] sm:$0xff]
        %v4824 = vld [vmem:[#allocation2 + $0x70] sm:$0xff]
        %v4825 = vld [vmem:[#allocation2 + $0x78] sm:$0xff]
        %v4826 = vld [vmem:[#allocation2 + $0x80] sm:$0xff]
        %v4827 = vld [vmem:[#allocation2 + $0x88] sm:$0xff]
        %v4828 = vld [vmem:[#allocation2 + $0x90] sm:$0xff]
        %v4829 = vld [vmem:[#allocation2 + $0x98] sm:$0xff]
        %v4830 = vld [vmem:[#allocation2 + $0xa0] sm:$0xff]
        %v4831 = vld [vmem:[#allocation2 + $0xa8] sm:$0xff]
        %v4832 = vld [vmem:[#allocation2 + $0xb0] sm:$0xff]
        %v4833 = vld [vmem:[#allocation2 + $0xb8] sm:$0xff]
        %v4834 = vld [vmem:[#allocation2 + $0xc0] sm:$0xff]
        %v4835 = vld [vmem:[#allocation2 + $0xc8] sm:$0xff]
        %v4836 = vld [vmem:[#allocation2 + $0xd0] sm:$0xff]
        %v4837 = vld [vmem:[#allocation2 + $0xd8] sm:$0xff]
        %v4838 = vld [vmem:[#allocation2 + $0xe0] sm:$0xff]
        %v4839 = vld [vmem:[#allocation2 + $0xe8] sm:$0xff]
        %v4840 = vld [vmem:[#allocation2 + $0xf0] sm:$0xff]
        %v4841 = vld [vmem:[#allocation2 + $0xf8] sm:$0xff]
        %v4842 = vld [vmem:[#allocation2 + $0x100] sm:$0xff]
        %v4843 = vld [vmem:[#allocation2 + $0x108] sm:$0xff]
        %v4844 = vld [vmem:[#allocation2 + $0x110] sm:$0xff]
        %v4845 = vld [vmem:[#allocation2 + $0x118] sm:$0xff]
        %v4846 = vld [vmem:[#allocation2 + $0x120] sm:$0xff]
        %v4847 = vld [vmem:[#allocation2 + $0x128] sm:$0xff]
        %v4848 = vld [vmem:[#allocation2 + $0x130] sm:$0xff]
        %v4849 = vld [vmem:[#allocation2 + $0x138] sm:$0xff]
        %v4850 = vld [vmem:[#allocation2 + $0x140] sm:$0xff]
        %v4851 = vld [vmem:[#allocation2 + $0x148] sm:$0xff]
        %v4852 = vld [vmem:[#allocation2 + $0x150] sm:$0xff]
        %v4853 = vld [vmem:[#allocation2 + $0x158] sm:$0xff]
        %v4854 = vld [vmem:[#allocation2 + $0x160] sm:$0xff]
        %v4855 = vld [vmem:[#allocation2 + $0x168] sm:$0xff]
        %v4856 = vld [vmem:[#allocation2 + $0x170] sm:$0xff]
        %v4857 = vld [vmem:[#allocation2 + $0x178] sm:$0xff]
        %v4858 = vld [vmem:[#allocation2 + $0x180] sm:$0xff]
        %v4859 = vld [vmem:[#allocation2 + $0x188] sm:$0xff]
        %v4860 = vld [vmem:[#allocation2 + $0x190] sm:$0xff]
        %v4861 = vld [vmem:[#allocation2 + $0x198] sm:$0xff]
        %v4862 = vld [vmem:[#allocation2 + $0x1a0] sm:$0xff]
        %v4863 = vld [vmem:[#allocation2 + $0x1a8] sm:$0xff]
        %s4864 = scalar_lea.vmem [#allocation8], 384
        %v4865 = vld [vmem:[%s4864] sm:$0xf]
        %v4866 = vld [vmem:[%s4864 + $0x4] sm:$0xf]
        %v4867 = vld [vmem:[%s4864 + $0x8] sm:$0xf]
        %v4868 = vld [vmem:[%s4864 + $0xc] sm:$0xf]
        %v4869 = vld [vmem:[%s4864 + $0x10] sm:$0xf]
        %v4870 = vld [vmem:[%s4864 + $0x14] sm:$0xf]
        %v4871 = vld [vmem:[%s4864 + $0x18] sm:$0xf]
        %v4872 = vld [vmem:[%s4864 + $0x1c] sm:$0xf]
        %v4873 = vld [vmem:[%s4864 + $0x20] sm:$0xf]
        %v4874 = vld [vmem:[%s4864 + $0x24] sm:$0xf]
        %v4875 = vld [vmem:[%s4864 + $0x28] sm:$0xf]
        %v4876 = vld [vmem:[%s4864 + $0x2c] sm:$0xf]
        %v4877 = vld [vmem:[%s4864 + $0x30] sm:$0xf]
        %v4878 = vld [vmem:[%s4864 + $0x34] sm:$0xf]
        %v4879 = vld [vmem:[%s4864 + $0x38] sm:$0xf]
        %v4880 = vld [vmem:[%s4864 + $0x3c] sm:$0xf]
        %v4881 = vld [vmem:[%s4864 + $0x40] sm:$0xf]
        %v4882 = vld [vmem:[%s4864 + $0x44] sm:$0xf]
        %v4883 = vld [vmem:[%s4864 + $0x48] sm:$0xf]
        %v4884 = vld [vmem:[%s4864 + $0x4c] sm:$0xf]
        %v4885 = vld [vmem:[%s4864 + $0x50] sm:$0xf]
        %v4886 = vld [vmem:[%s4864 + $0x54] sm:$0xf]
        %v4887 = vld [vmem:[%s4864 + $0x58] sm:$0xf]
        %v4888 = vld [vmem:[%s4864 + $0x5c] sm:$0xf]
        %v4889 = vld [vmem:[%s4864 + $0x60] sm:$0xf]
        %v4890 = vld [vmem:[%s4864 + $0x64] sm:$0xf]
        %v4891 = vld [vmem:[%s4864 + $0x68] sm:$0xf]
        %v4892 = vld [vmem:[%s4864 + $0x6c] sm:$0xf]
        %v4893 = vld [vmem:[%s4864 + $0x70] sm:$0xf]
        %v4894 = vld [vmem:[%s4864 + $0x74] sm:$0xf]
        %v4895 = vld [vmem:[%s4864 + $0x78] sm:$0xf]
        %v4896 = vld [vmem:[%s4864 + $0x7c] sm:$0xf]
        %v4897 = vld [vmem:[%s4864 + $0x80] sm:$0xf]
        %v4898 = vld [vmem:[%s4864 + $0x84] sm:$0xf]
        %v4899 = vld [vmem:[%s4864 + $0x88] sm:$0xf]
        %v4900 = vld [vmem:[%s4864 + $0x8c] sm:$0xf]
        %v4901 = vld [vmem:[%s4864 + $0x90] sm:$0xf]
        %v4902 = vld [vmem:[%s4864 + $0x94] sm:$0xf]
        %v4903 = vld [vmem:[%s4864 + $0x98] sm:$0xf]
        %v4904 = vld [vmem:[%s4864 + $0x9c] sm:$0xf]
        %v4905 = vld [vmem:[%s4864 + $0xa0] sm:$0xf]
        %v4906 = vld [vmem:[%s4864 + $0xa4] sm:$0xf]
        %v4907 = vld [vmem:[%s4864 + $0xa8] sm:$0xf]
        %v4908 = vld [vmem:[%s4864 + $0xac] sm:$0xf]
        %v4909 = vld [vmem:[%s4864 + $0xb0] sm:$0xf]
        %v4910 = vld [vmem:[%s4864 + $0xb4] sm:$0xf]
        %v4911 = vld [vmem:[%s4864 + $0xb8] sm:$0xf]
        %v4912 = vld [vmem:[%s4864 + $0xbc] sm:$0xf]
        %v4961 = vunpack.c.l.b16 %v4865
        %v4962 = vunpack.c.l.b16 %v4866
        %v4963 = vunpack.c.l.b16 %v4867
        %v4964 = vunpack.c.l.b16 %v4868
        %v4965 = vunpack.c.l.b16 %v4869
        %v4966 = vunpack.c.l.b16 %v4870
        %v4967 = vunpack.c.l.b16 %v4871
        %v4968 = vunpack.c.l.b16 %v4872
        %v4969 = vunpack.c.l.b16 %v4873
        %v4970 = vunpack.c.l.b16 %v4874
        %v4971 = vunpack.c.l.b16 %v4875
        %v4972 = vunpack.c.l.b16 %v4876
        %v4973 = vunpack.c.l.b16 %v4877
        %v4974 = vunpack.c.l.b16 %v4878
        %v4975 = vunpack.c.l.b16 %v4879
        %v4976 = vunpack.c.l.b16 %v4880
        %v4977 = vunpack.c.l.b16 %v4881
        %v4978 = vunpack.c.l.b16 %v4882
        %v4979 = vunpack.c.l.b16 %v4883
        %v4980 = vunpack.c.l.b16 %v4884
        %v4981 = vunpack.c.l.b16 %v4885
        %v4982 = vunpack.c.l.b16 %v4886
        %v4983 = vunpack.c.l.b16 %v4887
        %v4984 = vunpack.c.l.b16 %v4888
        %v4985 = vunpack.c.l.b16 %v4889
        %v4986 = vunpack.c.l.b16 %v4890
        %v4987 = vunpack.c.l.b16 %v4891
        %v4988 = vunpack.c.l.b16 %v4892
        %v4989 = vunpack.c.l.b16 %v4893
        %v4990 = vunpack.c.l.b16 %v4894
        %v4991 = vunpack.c.l.b16 %v4895
        %v4992 = vunpack.c.l.b16 %v4896
        %v4993 = vunpack.c.l.b16 %v4897
        %v4994 = vunpack.c.l.b16 %v4898
        %v4995 = vunpack.c.l.b16 %v4899
        %v4996 = vunpack.c.l.b16 %v4900
        %v4997 = vunpack.c.l.b16 %v4901
        %v4998 = vunpack.c.l.b16 %v4902
        %v4999 = vunpack.c.l.b16 %v4903
        %v5000 = vunpack.c.l.b16 %v4904
        %v5001 = vunpack.c.l.b16 %v4905
        %v5002 = vunpack.c.l.b16 %v4906
        %v5003 = vunpack.c.l.b16 %v4907
        %v5004 = vunpack.c.l.b16 %v4908
        %v5005 = vunpack.c.l.b16 %v4909
        %v5006 = vunpack.c.l.b16 %v4910
        %v5007 = vunpack.c.l.b16 %v4911
        %v5008 = vunpack.c.l.b16 %v4912
        %v5009 = vpack.c.b16 %v4962, %v4961
        %v5010 = vpack.c.b16 %v4964, %v4963
        %v5011 = vpack.c.b16 %v4966, %v4965
        %v5012 = vpack.c.b16 %v4968, %v4967
        %v5013 = vpack.c.b16 %v4970, %v4969
        %v5014 = vpack.c.b16 %v4972, %v4971
        %v5015 = vpack.c.b16 %v4974, %v4973
        %v5016 = vpack.c.b16 %v4976, %v4975
        %v5017 = vpack.c.b16 %v4978, %v4977
        %v5018 = vpack.c.b16 %v4980, %v4979
        %v5019 = vpack.c.b16 %v4982, %v4981
        %v5020 = vpack.c.b16 %v4984, %v4983
        %v5021 = vpack.c.b16 %v4986, %v4985
        %v5022 = vpack.c.b16 %v4988, %v4987
        %v5023 = vpack.c.b16 %v4990, %v4989
        %v5024 = vpack.c.b16 %v4992, %v4991
        %v5025 = vpack.c.b16 %v4994, %v4993
        %v5026 = vpack.c.b16 %v4996, %v4995
        %v5027 = vpack.c.b16 %v4998, %v4997
        %v5028 = vpack.c.b16 %v5000, %v4999
        %v5029 = vpack.c.b16 %v5002, %v5001
        %v5030 = vpack.c.b16 %v5004, %v5003
        %v5031 = vpack.c.b16 %v5006, %v5005
        %v5032 = vpack.c.b16 %v5008, %v5007
        %5057 = vmatprep.subr.bf16.mxu0 0
        %5058 = vmatpush1.bf16.msra.mxu0 %v5009
        %5059 = vmatprep.subr.bf16.mxu0 0
        %5060 = vmatpush1.bf16.msra.mxu0 %v5010
        %5061 = vmatprep.subr.bf16.mxu0 0
        %5062 = vmatpush1.bf16.msra.mxu0 %v5011
        %5063 = vmatprep.subr.bf16.mxu0 0
        %5064 = vmatpush1.bf16.msra.mxu0 %v5012
        %5065 = vmatprep.subr.bf16.mxu0 0
        %5066 = vmatpush1.bf16.msra.mxu0 %v5013
        %5067 = vmatprep.subr.bf16.mxu0 0
        %5068 = vmatpush1.bf16.msra.mxu0 %v5014
        %5069 = vmatprep.subr.bf16.mxu0 0
        %5070 = vmatpush1.bf16.msra.mxu0 %v5015
        %5071 = vmatprep.subr.bf16.mxu0 0
        %5072 = vmatpush1.bf16.msra.mxu0 %v5016
        %5073 = vmatprep.subr.bf16.mxu0 0
        %5074 = vmatpush1.bf16.msra.mxu0 %v5017
        %5075 = vmatprep.subr.bf16.mxu0 0
        %5076 = vmatpush1.bf16.msra.mxu0 %v5018
        %5077 = vmatprep.subr.bf16.mxu0 0
        %5078 = vmatpush1.bf16.msra.mxu0 %v5019
        %5079 = vmatprep.subr.bf16.mxu0 0
        %5080 = vmatpush1.bf16.msra.mxu0 %v5020
        %5081 = vmatprep.subr.bf16.mxu0 0
        %5082 = vmatpush1.bf16.msra.mxu0 %v5021
        %5083 = vmatprep.subr.bf16.mxu0 0
        %5084 = vmatpush1.bf16.msra.mxu0 %v5022
        %5085 = vmatprep.subr.bf16.mxu0 0
        %5086 = vmatpush1.bf16.msra.mxu0 %v5023
        %5087 = vmatprep.subr.bf16.mxu0 0
        %5088 = vmatpush1.bf16.msra.mxu0 %v5024
        %5089 = vmatprep.mubr.bf16.mxu0 %v4817
        %5090 = vmatmul.mubr.bf16.gmra.mrb[0].mxu0 %v4816
        %v5091 = vpop.f32.mrb[0].mxu0
        %v5092 = vadd.f32 0.0, %v5091
        %v5093 = vpop.f32.mrb[0].mxu0
        %v5094 = vpop.f32.mrb[0].mxu0
        %v5095 = vadd.f32 0.0, %v5094
        %v5096 = vpop.f32.mrb[0].mxu0
        %5097 = vmatprep.mubr.bf16.mxu0 %v4820
        %5098 = vmatmul.mubr.bf16.gmra.mrb[0].mxu0 %v4819
        %v5099 = vpop.f32.mrb[0].mxu0
        %v5100 = vadd.f32 0.0, %v5099
        %v5101 = vpop.f32.mrb[0].mxu0
        %v5102 = vpop.f32.mrb[0].mxu0
        %v5103 = vadd.f32 0.0, %v5102
        %v5104 = vpop.f32.mrb[0].mxu0
        %5105 = vmatprep.mubr.bf16.mxu0 %v4823
        %5106 = vmatmul.mubr.bf16.gmra.mrb[0].mxu0 %v4822
        %v5107 = vpop.f32.mrb[0].mxu0
        %v5108 = vadd.f32 0.0, %v5107
        %v5109 = vpop.f32.mrb[0].mxu0
        %v5110 = vpop.f32.mrb[0].mxu0
        %v5111 = vadd.f32 0.0, %v5110
        %v5112 = vpop.f32.mrb[0].mxu0
        %5113 = vmatprep.mubr.bf16.mxu0 %v4826
        %5114 = vmatmul.mubr.bf16.gmra.mrb[0].mxu0 %v4825
        %v5115 = vpop.f32.mrb[0].mxu0
        %v5116 = vadd.f32 0.0, %v5115
        %v5117 = vpop.f32.mrb[0].mxu0
        %v5118 = vpop.f32.mrb[0].mxu0
        %v5119 = vadd.f32 0.0, %v5118
        %v5120 = vpop.f32.mrb[0].mxu0
        %5121 = vmatprep.mubr.bf16.mxu0 %v4829
        %5122 = vmatmul.mubr.bf16.gmra.mrb[0].mxu0 %v4828
        %v5123 = vpop.f32.mrb[0].mxu0
        %v5124 = vadd.f32 0.0, %v5123
        %v5125 = vpop.f32.mrb[0].mxu0
        %v5126 = vpop.f32.mrb[0].mxu0
        %v5127 = vadd.f32 0.0, %v5126
        %v5128 = vpop.f32.mrb[0].mxu0
        %5129 = vmatprep.mubr.bf16.mxu0 %v4832
        %5130 = vmatmul.mubr.bf16.gmra.mrb[0].mxu0 %v4831
        %v5131 = vpop.f32.mrb[0].mxu0
        %v5132 = vadd.f32 0.0, %v5131
        %v5133 = vpop.f32.mrb[0].mxu0
        %v5134 = vpop.f32.mrb[0].mxu0
        %v5135 = vadd.f32 0.0, %v5134
        %v5136 = vpop.f32.mrb[0].mxu0
        %5137 = vmatprep.mubr.bf16.mxu0 %v4835
        %5138 = vmatmul.mubr.bf16.gmra.mrb[0].mxu0 %v4834
        %v5139 = vpop.f32.mrb[0].mxu0
        %v5140 = vadd.f32 0.0, %v5139
        %v5141 = vpop.f32.mrb[0].mxu0
        %v5142 = vpop.f32.mrb[0].mxu0
        %v5143 = vadd.f32 0.0, %v5142
        %v5144 = vpop.f32.mrb[0].mxu0
        %5145 = vmatprep.mubr.bf16.mxu0 %v4838
        %5146 = vmatmul.mubr.bf16.gmra.mrb[0].mxu0 %v4837
        %v5147 = vpop.f32.mrb[0].mxu0
        %v5148 = vadd.f32 0.0, %v5147
        %v5149 = vpop.f32.mrb[0].mxu0
        %v5150 = vpop.f32.mrb[0].mxu0
        %v5151 = vadd.f32 0.0, %v5150
        %v5152 = vpop.f32.mrb[0].mxu0
        %5153 = vmatprep.mubr.bf16.mxu0 %v4841
        %5154 = vmatmul.mubr.bf16.gmra.mrb[0].mxu0 %v4840
        %v5155 = vpop.f32.mrb[0].mxu0
        %v5156 = vadd.f32 0.0, %v5155
        %v5157 = vpop.f32.mrb[0].mxu0
        %v5158 = vpop.f32.mrb[0].mxu0
        %v5159 = vadd.f32 0.0, %v5158
        %v5160 = vpop.f32.mrb[0].mxu0
        %5161 = vmatprep.mubr.bf16.mxu0 %v4844
        %5162 = vmatmul.mubr.bf16.gmra.mrb[0].mxu0 %v4843
        %v5163 = vpop.f32.mrb[0].mxu0
        %v5164 = vadd.f32 0.0, %v5163
        %v5165 = vpop.f32.mrb[0].mxu0
        %v5166 = vpop.f32.mrb[0].mxu0
        %v5167 = vadd.f32 0.0, %v5166
        %v5168 = vpop.f32.mrb[0].mxu0
        %5169 = vmatprep.mubr.bf16.mxu0 %v4847
        %5170 = vmatmul.mubr.bf16.gmra.mrb[0].mxu0 %v4846
        %v5171 = vpop.f32.mrb[0].mxu0
        %v5172 = vadd.f32 0.0, %v5171
        %v5173 = vpop.f32.mrb[0].mxu0
        %v5174 = vpop.f32.mrb[0].mxu0
        %v5175 = vadd.f32 0.0, %v5174
        %v5176 = vpop.f32.mrb[0].mxu0
        %5177 = vmatprep.mubr.bf16.mxu0 %v4850
        %5178 = vmatmul.mubr.bf16.gmra.mrb[0].mxu0 %v4849
        %v5179 = vpop.f32.mrb[0].mxu0
        %v5180 = vadd.f32 0.0, %v5179
        %v5181 = vpop.f32.mrb[0].mxu0
        %v5182 = vpop.f32.mrb[0].mxu0
        %v5183 = vadd.f32 0.0, %v5182
        %v5184 = vpop.f32.mrb[0].mxu0
        %5185 = vmatprep.mubr.bf16.mxu0 %v4853
        %5186 = vmatmul.mubr.bf16.gmra.mrb[0].mxu0 %v4852
        %v5187 = vpop.f32.mrb[0].mxu0
        %v5188 = vadd.f32 0.0, %v5187
        %v5189 = vpop.f32.mrb[0].mxu0
        %v5190 = vpop.f32.mrb[0].mxu0
        %v5191 = vadd.f32 0.0, %v5190
        %v5192 = vpop.f32.mrb[0].mxu0
        %5193 = vmatprep.mubr.bf16.mxu0 %v4856
        %5194 = vmatmul.mubr.bf16.gmra.mrb[0].mxu0 %v4855
        %v5195 = vpop.f32.mrb[0].mxu0
        %v5196 = vadd.f32 0.0, %v5195
        %v5197 = vpop.f32.mrb[0].mxu0
        %v5198 = vpop.f32.mrb[0].mxu0
        %v5199 = vadd.f32 0.0, %v5198
        %v5200 = vpop.f32.mrb[0].mxu0
        %5201 = vmatprep.mubr.bf16.mxu0 %v4859
        %5202 = vmatmul.mubr.bf16.gmra.mrb[0].mxu0 %v4858
        %v5203 = vpop.f32.mrb[0].mxu0
        %v5204 = vadd.f32 0.0, %v5203
        %v5205 = vpop.f32.mrb[0].mxu0
        %v5206 = vpop.f32.mrb[0].mxu0
        %v5207 = vadd.f32 0.0, %v5206
        %v5208 = vpop.f32.mrb[0].mxu0
        %5209 = vmatprep.mubr.bf16.mxu0 %v4862
        %5210 = vmatmul.mubr.bf16.gmra.mrb[0].mxu0 %v4861
        %v5211 = vpop.f32.mrb[0].mxu0
        %v5212 = vadd.f32 0.0, %v5211
        %v5213 = vpop.f32.mrb[0].mxu0
        %v5214 = vpop.f32.mrb[0].mxu0
        %v5215 = vadd.f32 0.0, %v5214
        %v5216 = vpop.f32.mrb[0].mxu0
        %5217 = vdwg.mxu0
        %5218 = vmatprep.subr.bf16.mxu0 0
        %5219 = vmatpush1.bf16.msra.mxu0 %v5025
        %5220 = vmatprep.subr.bf16.mxu0 0
        %5221 = vmatpush1.bf16.msra.mxu0 %v5026
        %5222 = vmatprep.subr.bf16.mxu0 0
        %5223 = vmatpush1.bf16.msra.mxu0 %v5027
        %5224 = vmatprep.subr.bf16.mxu0 0
        %5225 = vmatpush1.bf16.msra.mxu0 %v5028
        %5226 = vmatprep.subr.bf16.mxu0 0
        %5227 = vmatpush1.bf16.msra.mxu0 %v5029
        %5228 = vmatprep.subr.bf16.mxu0 0
        %5229 = vmatpush1.bf16.msra.mxu0 %v5030
        %5230 = vmatprep.subr.bf16.mxu0 0
        %5231 = vmatpush1.bf16.msra.mxu0 %v5031
        %5232 = vmatprep.subr.bf16.mxu0 0
        %5233 = vmatpush1.bf16.msra.mxu0 %v5032
        %5234 = vmatprep.subr.bf16.mxu0 0
        %5235 = vmatpush1.bf16.msra.mxu0 0
        %5236 = vmatprep.subr.bf16.mxu0 0
        %5237 = vmatpush1.bf16.msra.mxu0 0
        %5238 = vmatprep.subr.bf16.mxu0 0
        %5239 = vmatpush1.bf16.msra.mxu0 0
        %5240 = vmatprep.subr.bf16.mxu0 0
        %5241 = vmatpush1.bf16.msra.mxu0 0
        %5242 = vmatprep.subr.bf16.mxu0 0
        %5243 = vmatpush1.bf16.msra.mxu0 0
        %5244 = vmatprep.subr.bf16.mxu0 0
        %5245 = vmatpush1.bf16.msra.mxu0 0
        %5246 = vmatprep.subr.bf16.mxu0 0
        %5247 = vmatpush1.bf16.msra.mxu0 0
        %5248 = vmatprep.subr.bf16.mxu0 0
        %5249 = vmatpush1.bf16.msra.mxu0 0
        %5250 = vmatprep.mubr.bf16.mxu0 0
        %5251 = vmatmul.mubr.bf16.gmra.mrb[0].mxu0 %v4818
        %v5252 = vpop.f32.mrb[0].mxu0
        %v5253 = vadd.f32 %v5092, %v5252
        %v5254 = vpop.f32.mrb[0].mxu0
        %v5255 = vpop.f32.mrb[0].mxu0
        %v5256 = vadd.f32 %v5095, %v5255
        %v5257 = vpop.f32.mrb[0].mxu0
        %5258 = vmatprep.mubr.bf16.mxu0 0
        %5259 = vmatmul.mubr.bf16.gmra.mrb[0].mxu0 %v4821
        %v5260 = vpop.f32.mrb[0].mxu0
        %v5261 = vadd.f32 %v5100, %v5260
        %v5262 = vpop.f32.mrb[0].mxu0
        %v5263 = vpop.f32.mrb[0].mxu0
        %v5264 = vadd.f32 %v5103, %v5263
        %v5265 = vpop.f32.mrb[0].mxu0
        %5266 = vmatprep.mubr.bf16.mxu0 0
        %5267 = vmatmul.mubr.bf16.gmra.mrb[0].mxu0 %v4824
        %v5268 = vpop.f32.mrb[0].mxu0
        %v5269 = vadd.f32 %v5108, %v5268
        %v5270 = vpop.f32.mrb[0].mxu0
        %v5271 = vpop.f32.mrb[0].mxu0
        %v5272 = vadd.f32 %v5111, %v5271
        %v5273 = vpop.f32.mrb[0].mxu0
        %5274 = vmatprep.mubr.bf16.mxu0 0
        %5275 = vmatmul.mubr.bf16.gmra.mrb[0].mxu0 %v4827
        %v5276 = vpop.f32.mrb[0].mxu0
        %v5277 = vadd.f32 %v5116, %v5276
        %v5278 = vpop.f32.mrb[0].mxu0
        %v5279 = vpop.f32.mrb[0].mxu0
        %v5280 = vadd.f32 %v5119, %v5279
        %v5281 = vpop.f32.mrb[0].mxu0
        %5282 = vmatprep.mubr.bf16.mxu0 0
        %5283 = vmatmul.mubr.bf16.gmra.mrb[0].mxu0 %v4830
        %v5284 = vpop.f32.mrb[0].mxu0
        %v5285 = vadd.f32 %v5124, %v5284
        %v5286 = vpop.f32.mrb[0].mxu0
        %v5287 = vpop.f32.mrb[0].mxu0
        %v5288 = vadd.f32 %v5127, %v5287
        %v5289 = vpop.f32.mrb[0].mxu0
        %5290 = vmatprep.mubr.bf16.mxu0 0
        %5291 = vmatmul.mubr.bf16.gmra.mrb[0].mxu0 %v4833
        %v5292 = vpop.f32.mrb[0].mxu0
        %v5293 = vadd.f32 %v5132, %v5292
        %v5294 = vpop.f32.mrb[0].mxu0
        %v5295 = vpop.f32.mrb[0].mxu0
        %v5296 = vadd.f32 %v5135, %v5295
        %v5297 = vpop.f32.mrb[0].mxu0
        %5298 = vmatprep.mubr.bf16.mxu0 0
        %5299 = vmatmul.mubr.bf16.gmra.mrb[0].mxu0 %v4836
        %v5300 = vpop.f32.mrb[0].mxu0
        %v5301 = vadd.f32 %v5140, %v5300
        %v5302 = vpop.f32.mrb[0].mxu0
        %v5303 = vpop.f32.mrb[0].mxu0
        %v5304 = vadd.f32 %v5143, %v5303
        %v5305 = vpop.f32.mrb[0].mxu0
        %5306 = vmatprep.mubr.bf16.mxu0 0
        %5307 = vmatmul.mubr.bf16.gmra.mrb[0].mxu0 %v4839
        %v5308 = vpop.f32.mrb[0].mxu0
        %v5309 = vadd.f32 %v5148, %v5308
        %v5310 = vpop.f32.mrb[0].mxu0
        %v5311 = vpop.f32.mrb[0].mxu0
        %v5312 = vadd.f32 %v5151, %v5311
        %v5313 = vpop.f32.mrb[0].mxu0
        %5314 = vmatprep.mubr.bf16.mxu0 0
        %5315 = vmatmul.mubr.bf16.gmra.mrb[0].mxu0 %v4842
        %v5316 = vpop.f32.mrb[0].mxu0
        %v5317 = vadd.f32 %v5156, %v5316
        %v5318 = vpop.f32.mrb[0].mxu0
        %v5319 = vpop.f32.mrb[0].mxu0
        %v5320 = vadd.f32 %v5159, %v5319
        %v5321 = vpop.f32.mrb[0].mxu0
        %5322 = vmatprep.mubr.bf16.mxu0 0
        %5323 = vmatmul.mubr.bf16.gmra.mrb[0].mxu0 %v4845
        %v5324 = vpop.f32.mrb[0].mxu0
        %v5325 = vadd.f32 %v5164, %v5324
        %v5326 = vpop.f32.mrb[0].mxu0
        %v5327 = vpop.f32.mrb[0].mxu0
        %v5328 = vadd.f32 %v5167, %v5327
        %v5329 = vpop.f32.mrb[0].mxu0
        %5330 = vmatprep.mubr.bf16.mxu0 0
        %5331 = vmatmul.mubr.bf16.gmra.mrb[0].mxu0 %v4848
        %v5332 = vpop.f32.mrb[0].mxu0
        %v5333 = vadd.f32 %v5172, %v5332
        %v5334 = vpop.f32.mrb[0].mxu0
        %v5335 = vpop.f32.mrb[0].mxu0
        %v5336 = vadd.f32 %v5175, %v5335
        %v5337 = vpop.f32.mrb[0].mxu0
        %5338 = vmatprep.mubr.bf16.mxu0 0
        %5339 = vmatmul.mubr.bf16.gmra.mrb[0].mxu0 %v4851
        %v5340 = vpop.f32.mrb[0].mxu0
        %v5341 = vadd.f32 %v5180, %v5340
        %v5342 = vpop.f32.mrb[0].mxu0
        %v5343 = vpop.f32.mrb[0].mxu0
        %v5344 = vadd.f32 %v5183, %v5343
        %v5345 = vpop.f32.mrb[0].mxu0
        %5346 = vmatprep.mubr.bf16.mxu0 0
        %5347 = vmatmul.mubr.bf16.gmra.mrb[0].mxu0 %v4854
        %v5348 = vpop.f32.mrb[0].mxu0
        %v5349 = vadd.f32 %v5188, %v5348
        %v5350 = vpop.f32.mrb[0].mxu0
        %v5351 = vpop.f32.mrb[0].mxu0
        %v5352 = vadd.f32 %v5191, %v5351
        %v5353 = vpop.f32.mrb[0].mxu0
        %5354 = vmatprep.mubr.bf16.mxu0 0
        %5355 = vmatmul.mubr.bf16.gmra.mrb[0].mxu0 %v4857
        %v5356 = vpop.f32.mrb[0].mxu0
        %v5357 = vadd.f32 %v5196, %v5356
        %v5358 = vpop.f32.mrb[0].mxu0
        %v5359 = vpop.f32.mrb[0].mxu0
        %v5360 = vadd.f32 %v5199, %v5359
        %v5361 = vpop.f32.mrb[0].mxu0
        %5362 = vmatprep.mubr.bf16.mxu0 0
        %5363 = vmatmul.mubr.bf16.gmra.mrb[0].mxu0 %v4860
        %v5364 = vpop.f32.mrb[0].mxu0
        %v5365 = vadd.f32 %v5204, %v5364
        %v5366 = vpop.f32.mrb[0].mxu0
        %v5367 = vpop.f32.mrb[0].mxu0
        %v5368 = vadd.f32 %v5207, %v5367
        %v5369 = vpop.f32.mrb[0].mxu0
        %5370 = vmatprep.mubr.bf16.mxu0 0
        %5371 = vmatmul.mubr.bf16.gmra.mrb[0].mxu0 %v4863
        %v5372 = vpop.f32.mrb[0].mxu0
        %v5373 = vadd.f32 %v5212, %v5372
        %v5374 = vpop.f32.mrb[0].mxu0
        %v5375 = vpop.f32.mrb[0].mxu0
        %v5376 = vadd.f32 %v5215, %v5375
        %v5377 = vpop.f32.mrb[0].mxu0
        %5378 = vdwg.mxu0
        %v5379 = vadd.f32 %v4690, %v5253
        %v5380 = vadd.f32 %v4693, %v5256
        %v5381 = vadd.f32 %v4698, %v5261
        %v5382 = vadd.f32 %v4701, %v5264
        %v5383 = vadd.f32 %v4706, %v5269
        %v5384 = vadd.f32 %v4709, %v5272
        %v5385 = vadd.f32 %v4714, %v5277
        %v5386 = vadd.f32 %v4717, %v5280
        %v5387 = vadd.f32 %v4722, %v5285
        %v5388 = vadd.f32 %v4725, %v5288
        %v5389 = vadd.f32 %v4730, %v5293
        %v5390 = vadd.f32 %v4733, %v5296
        %v5391 = vadd.f32 %v4738, %v5301
        %v5392 = vadd.f32 %v4741, %v5304
        %v5393 = vadd.f32 %v4746, %v5309
        %v5394 = vadd.f32 %v4749, %v5312
        %v5395 = vadd.f32 %v4754, %v5317
        %v5396 = vadd.f32 %v4757, %v5320
        %v5397 = vadd.f32 %v4762, %v5325
        %v5398 = vadd.f32 %v4765, %v5328
        %v5399 = vadd.f32 %v4770, %v5333
        %v5400 = vadd.f32 %v4773, %v5336
        %v5401 = vadd.f32 %v4778, %v5341
        %v5402 = vadd.f32 %v4781, %v5344
        %v5403 = vadd.f32 %v4786, %v5349
        %v5404 = vadd.f32 %v4789, %v5352
        %v5405 = vadd.f32 %v4794, %v5357
        %v5406 = vadd.f32 %v4797, %v5360
        %v5407 = vadd.f32 %v4802, %v5365
        %v5408 = vadd.f32 %v4805, %v5368
        %v5409 = vadd.f32 %v4810, %v5373
        %v5410 = vadd.f32 %v4813, %v5376
        %v5411 = vld [vmem:[%s5] sm:$0x1]
        %v5413 = vlaneseq
        %v5414 = vshrl.u32 %v5413, 7
        %v5415 = vsub.s32 0, %v5414
        %v5416 = vrot.slane %v5411, %v5415
        %v5418 = vmul.f32 %v5379, %v5416
        %v5419 = vmul.f32 %v5380, %v5416
        %v5420 = vmul.f32 %v5381, %v5416
        %v5421 = vmul.f32 %v5382, %v5416
        %v5422 = vmul.f32 %v5383, %v5416
        %v5423 = vmul.f32 %v5384, %v5416
        %v5424 = vmul.f32 %v5385, %v5416
        %v5425 = vmul.f32 %v5386, %v5416
        %v5426 = vmul.f32 %v5387, %v5416
        %v5427 = vmul.f32 %v5388, %v5416
        %v5428 = vmul.f32 %v5389, %v5416
        %v5429 = vmul.f32 %v5390, %v5416
        %v5430 = vmul.f32 %v5391, %v5416
        %v5431 = vmul.f32 %v5392, %v5416
        %v5432 = vmul.f32 %v5393, %v5416
        %v5433 = vmul.f32 %v5394, %v5416
        %v5434 = vmul.f32 %v5395, %v5416
        %v5435 = vmul.f32 %v5396, %v5416
        %v5436 = vmul.f32 %v5397, %v5416
        %v5437 = vmul.f32 %v5398, %v5416
        %v5438 = vmul.f32 %v5399, %v5416
        %v5439 = vmul.f32 %v5400, %v5416
        %v5440 = vmul.f32 %v5401, %v5416
        %v5441 = vmul.f32 %v5402, %v5416
        %v5442 = vmul.f32 %v5403, %v5416
        %v5443 = vmul.f32 %v5404, %v5416
        %v5444 = vmul.f32 %v5405, %v5416
        %v5445 = vmul.f32 %v5406, %v5416
        %v5446 = vmul.f32 %v5407, %v5416
        %v5447 = vmul.f32 %v5408, %v5416
        %v5448 = vmul.f32 %v5409, %v5416
        %v5449 = vmul.f32 %v5410, %v5416
        %v5450 = vld [vmem:[%s6] sm:$0x1]
        %v5452 = vlaneseq
        %v5453 = vshrl.u32 %v5452, 7
        %v5454 = vsub.s32 0, %v5453
        %v5455 = vrot.slane %v5450, %v5454
        %v5457 = vadd.f32 %v5418, %v5455
        %v5458 = vadd.f32 %v5419, %v5455
        %v5459 = vadd.f32 %v5420, %v5455
        %v5460 = vadd.f32 %v5421, %v5455
        %v5461 = vadd.f32 %v5422, %v5455
        %v5462 = vadd.f32 %v5423, %v5455
        %v5463 = vadd.f32 %v5424, %v5455
        %v5464 = vadd.f32 %v5425, %v5455
        %v5465 = vadd.f32 %v5426, %v5455
        %v5466 = vadd.f32 %v5427, %v5455
        %v5467 = vadd.f32 %v5428, %v5455
        %v5468 = vadd.f32 %v5429, %v5455
        %v5469 = vadd.f32 %v5430, %v5455
        %v5470 = vadd.f32 %v5431, %v5455
        %v5471 = vadd.f32 %v5432, %v5455
        %v5472 = vadd.f32 %v5433, %v5455
        %v5473 = vadd.f32 %v5434, %v5455
        %v5474 = vadd.f32 %v5435, %v5455
        %v5475 = vadd.f32 %v5436, %v5455
        %v5476 = vadd.f32 %v5437, %v5455
        %v5477 = vadd.f32 %v5438, %v5455
        %v5478 = vadd.f32 %v5439, %v5455
        %v5479 = vadd.f32 %v5440, %v5455
        %v5480 = vadd.f32 %v5441, %v5455
        %v5481 = vadd.f32 %v5442, %v5455
        %v5482 = vadd.f32 %v5443, %v5455
        %v5483 = vadd.f32 %v5444, %v5455
        %v5484 = vadd.f32 %v5445, %v5455
        %v5485 = vadd.f32 %v5446, %v5455
        %v5486 = vadd.f32 %v5447, %v5455
        %v5487 = vadd.f32 %v5448, %v5455
        %v5488 = vadd.f32 %v5449, %v5455
        %v5489 = vadd.f32 %v5457, %v864
        %v5490 = vadd.f32 %v5458, %v865
        %v5491 = vadd.f32 %v5459, %v866
        %v5492 = vadd.f32 %v5460, %v867
        %v5493 = vadd.f32 %v5461, %v868
        %v5494 = vadd.f32 %v5462, %v869
        %v5495 = vadd.f32 %v5463, %v870
        %v5496 = vadd.f32 %v5464, %v871
        %v5497 = vadd.f32 %v5465, %v872
        %v5498 = vadd.f32 %v5466, %v873
        %v5499 = vadd.f32 %v5467, %v874
        %v5500 = vadd.f32 %v5468, %v875
        %v5501 = vadd.f32 %v5469, %v876
        %v5502 = vadd.f32 %v5470, %v877
        %v5503 = vadd.f32 %v5471, %v878
        %v5504 = vadd.f32 %v5472, %v879
        %v5505 = vadd.f32 %v5473, %v880
        %v5506 = vadd.f32 %v5474, %v881
        %v5507 = vadd.f32 %v5475, %v882
        %v5508 = vadd.f32 %v5476, %v883
        %v5509 = vadd.f32 %v5477, %v884
        %v5510 = vadd.f32 %v5478, %v885
        %v5511 = vadd.f32 %v5479, %v886
        %v5512 = vadd.f32 %v5480, %v887
        %v5513 = vadd.f32 %v5481, %v888
        %v5514 = vadd.f32 %v5482, %v889
        %v5515 = vadd.f32 %v5483, %v890
        %v5516 = vadd.f32 %v5484, %v891
        %v5517 = vadd.f32 %v5485, %v892
        %v5518 = vadd.f32 %v5486, %v893
        %v5519 = vadd.f32 %v5487, %v894
        %v5520 = vadd.f32 %v5488, %v895
        %v5521 = vmax.f32 %v5489, 0.0
        %v5522 = vmax.f32 %v5490, 0.0
        %v5523 = vmax.f32 %v5491, 0.0
        %v5524 = vmax.f32 %v5492, 0.0
        %v5525 = vmax.f32 %v5493, 0.0
        %v5526 = vmax.f32 %v5494, 0.0
        %v5527 = vmax.f32 %v5495, 0.0
        %v5528 = vmax.f32 %v5496, 0.0
        %v5529 = vmax.f32 %v5497, 0.0
        %v5530 = vmax.f32 %v5498, 0.0
        %v5531 = vmax.f32 %v5499, 0.0
        %v5532 = vmax.f32 %v5500, 0.0
        %v5533 = vmax.f32 %v5501, 0.0
        %v5534 = vmax.f32 %v5502, 0.0
        %v5535 = vmax.f32 %v5503, 0.0
        %v5536 = vmax.f32 %v5504, 0.0
        %v5537 = vmax.f32 %v5505, 0.0
        %v5538 = vmax.f32 %v5506, 0.0
        %v5539 = vmax.f32 %v5507, 0.0
        %v5540 = vmax.f32 %v5508, 0.0
        %v5541 = vmax.f32 %v5509, 0.0
        %v5542 = vmax.f32 %v5510, 0.0
        %v5543 = vmax.f32 %v5511, 0.0
        %v5544 = vmax.f32 %v5512, 0.0
        %v5545 = vmax.f32 %v5513, 0.0
        %v5546 = vmax.f32 %v5514, 0.0
        %v5547 = vmax.f32 %v5515, 0.0
        %v5548 = vmax.f32 %v5516, 0.0
        %v5549 = vmax.f32 %v5517, 0.0
        %v5550 = vmax.f32 %v5518, 0.0
        %v5551 = vmax.f32 %v5519, 0.0
        %v5552 = vmax.f32 %v5520, 0.0
        %5553 = vst [vmem:[%s325] sm:$0xff] %v5521
        %5554 = vst [vmem:[%s325 + $0x8] sm:$0xff] %v5522
        %5555 = vst [vmem:[%s325 + $0x10] sm:$0xff] %v5523
        %5556 = vst [vmem:[%s325 + $0x18] sm:$0xff] %v5524
        %5557 = vst [vmem:[%s325 + $0x20] sm:$0xff] %v5525
        %5558 = vst [vmem:[%s325 + $0x28] sm:$0xff] %v5526
        %5559 = vst [vmem:[%s325 + $0x30] sm:$0xff] %v5527
        %5560 = vst [vmem:[%s325 + $0x38] sm:$0xff] %v5528
        %5561 = vst [vmem:[%s325 + $0x40] sm:$0xff] %v5529
        %5562 = vst [vmem:[%s325 + $0x48] sm:$0xff] %v5530
        %5563 = vst [vmem:[%s325 + $0x50] sm:$0xff] %v5531
        %5564 = vst [vmem:[%s325 + $0x58] sm:$0xff] %v5532
        %5565 = vst [vmem:[%s325 + $0x60] sm:$0xff] %v5533
        %5566 = vst [vmem:[%s325 + $0x68] sm:$0xff] %v5534
        %5567 = vst [vmem:[%s325 + $0x70] sm:$0xff] %v5535
        %5568 = vst [vmem:[%s325 + $0x78] sm:$0xff] %v5536
        %5569 = vst [vmem:[%s325 + $0x80] sm:$0xff] %v5537
        %5570 = vst [vmem:[%s325 + $0x88] sm:$0xff] %v5538
        %5571 = vst [vmem:[%s325 + $0x90] sm:$0xff] %v5539
        %5572 = vst [vmem:[%s325 + $0x98] sm:$0xff] %v5540
        %5573 = vst [vmem:[%s325 + $0xa0] sm:$0xff] %v5541
        %5574 = vst [vmem:[%s325 + $0xa8] sm:$0xff] %v5542
        %5575 = vst [vmem:[%s325 + $0xb0] sm:$0xff] %v5543
        %5576 = vst [vmem:[%s325 + $0xb8] sm:$0xff] %v5544
        %5577 = vst [vmem:[%s325 + $0xc0] sm:$0xff] %v5545
        %5578 = vst [vmem:[%s325 + $0xc8] sm:$0xff] %v5546
        %5579 = vst [vmem:[%s325 + $0xd0] sm:$0xff] %v5547
        %5580 = vst [vmem:[%s325 + $0xd8] sm:$0xff] %v5548
        %5581 = vst [vmem:[%s325 + $0xe0] sm:$0xff] %v5549
        %5582 = vst [vmem:[%s325 + $0xe8] sm:$0xff] %v5550
        %5583 = vst [vmem:[%s325 + $0xf0] sm:$0xff] %v5551
        %5584 = vst [vmem:[%s325 + $0xf8] sm:$0xff] %v5552
        %s5585 = sand.u32 %s185, 1
        %s5586 = scalar_lea.sflag [#allocation5], %s5585
        %s5587 = sand.u32 %s185, 1
        %s5588 = smul.addr %s5587, 256
        %s5589 = scalar_lea.vmem [#allocation9], %s5588
        // Predicated region
        $region61: #{tpu_custom_call.1} parent=47 // pred_check
          %p5590 = pneg %p195
        $region62: #{tpu_custom_call.1} parent=47 // pred_check_branch
          %5592 = sbr.rel (%p5590) target = $region64
        $region63: #{tpu_custom_call.1} parent=47 // pred_region
          %s5594 = ssub.s32 4096, 4096
          %5595 = vsyncadd %s5586, %s5594
          %s5596 = smul.addr %s25, 32
          %s5597 = smul.addr %s5596, 128
          %s5598 = scalar_lea.hbm %s7, %s5597
          %s5599 = sshll.u32 %s5589, 4
          %s5600 = int_to_ptr.vmem [resolvable:$true] %s5599
          %5605 = dma.vmem_to_hbm [thread:$0]  %s5600, 4096, %s5598, %s5586, 128, 128, 8
        $region64: #{tpu_custom_call.1} parent=47 // pred_fallthru
          _
      $region48: #{tpu_custom_call.1} parent=5 // pred_fallthru
        _
      %p5606 = scmp.le.s32.totalorder 2, %s20
      // Predicated region
      $region65: #{tpu_custom_call.1} parent=5 // pred_check
        %p5607 = pneg %p5606
      $region66: #{tpu_custom_call.1} parent=5 // pred_check_branch
        %5609 = sbr.rel (%p5607) target = $region68
      $region67: #{tpu_custom_call.1} parent=5 // pred_region
        %s5610 = ssub.s32 %s20, 2
        // Predicated region
        $region69: #{tpu_custom_call.1} parent=67 // pred_check
          %p5611 = pneg %p201
        $region70: #{tpu_custom_call.1} parent=67 // pred_check_branch
          %5613 = sbr.rel (%p5611) target = $region72
        $region71: #{tpu_custom_call.1} parent=67 // pred_region
          %s5614 = sand.u32 %s186, 1
          %s5615 = scalar_lea.sflag [#allocation5], %s5614
          %s5616 = sand.u32 %s186, 1
          %s5617 = smul.addr %s5616, 256
          %s5618 = scalar_lea.vmem [#allocation9], %s5617
          %5619 = dma.done %s5615, 4096
        $region72: #{tpu_custom_call.1} parent=67 // pred_fallthru
          _
      $region68: #{tpu_custom_call.1} parent=5 // pred_fallthru
        _
    $region6: #{tpu_custom_call.1} parent=1 // loop_footer
      %s24 = sadd.s32 1, %s20
    $region7: #{tpu_custom_call.1} parent=1 // loop_footer_branch
      %19 = sbr.rel target = $region3
    $region8: #{tpu_custom_call.1} parent=1 // loop_exit
      _
    %5620 = vsyncpa [#allocation4], 1
    %s5621 = scalar_lea.sflag [#allocation4], 1
    %5622 = vsyncpa %s5621, 1
    %5623 = vsyncpa [#allocation7], 1
    %5624 = vsyncpa [#allocation5], 1
    %s5625 = scalar_lea.sflag [#allocation5], 1
    %5626 = vsyncpa %s5625, 1

</llo_original>
